<compile_context>
chip_gen: v7x
topology: tpu7x:2x2x1
jax: 0.10.0
libtpu: 0.0.40
codegen_flags: <defaults>
</compile_context>

<pallas_src>
import functools
import math

import jax
import jax.numpy as jnp
from jax.experimental import pallas as pl
from jax.experimental.pallas import tpu as pltpu


# ---------------------------------------------------------------------------
# In-kernel helpers
# ---------------------------------------------------------------------------
def _sigmoid(v):
    # Full-width stable sigmoid.  Clamp so exp(-v) cannot overflow to +inf;
    # the approximate reciprocal runs on the EUP slot (frees the VPU).
    return pl.reciprocal(1.0 + jnp.exp(-jnp.maximum(v, -30.0)), approx=True)


def _softplus(v):
    # numerically stable softplus: log(1 + exp(v))
    return jnp.maximum(v, 0.0) + jnp.log(1.0 + jnp.exp(-jnp.abs(v)))


# ---------------------------------------------------------------------------
# Fused VAE kernel: encoder stack -> latent heads -> reparam -> decoder stack
# -> output heads.  One grid step = one chunk of t_chunk timesteps.
# ---------------------------------------------------------------------------
def _make_vae_kernel(num_layers, H, L, F, B, t_chunk):
    n_l = 3 * num_layers  # (w_ih, w_hh, b) per layer

    def run_stack(cur, layer_refs, h_st, c_st, hbuf):
        """Layer-major stacked LSTM over one chunk.

        cur: (CB, in) f32 chunk input.  Returns (CB, H) top-layer hidden.
        One batched input-side matmul per layer per chunk; only the
        h @ W_hh dot + gate math remain on the serial dependency chain.
        """
        for l in range(num_layers):
            w_ih = layer_refs[3 * l + 0][...]          # (in, 4H) bf16
            w_hh = layer_refs[3 * l + 1][...]          # (H, 4H)  bf16
            bias = layer_refs[3 * l + 2][...]          # (1, 4H)  f32
            # Whole-chunk input-side matmul (M = t_chunk*B).
            pre = jnp.dot(cur.astype(jnp.bfloat16), w_ih,
                          preferred_element_type=jnp.float32) + bias  # (CB,4H)
            h = h_st[l]                                # (B, H) f32
            c = c_st[l]
            for t in range(t_chunk):                   # serial recurrence (unrolled)
                gates = pre[t * B:(t + 1) * B, :] + jnp.dot(
                    h.astype(jnp.bfloat16), w_hh,
                    preferred_element_type=jnp.float32)               # (B, 4H)
                s = _sigmoid(gates)                    # one full-width sigmoid
                i_g = s[:, 0 * H:1 * H]
                f_g = s[:, 1 * H:2 * H]
                o_g = s[:, 3 * H:4 * H]
                g_g = jnp.tanh(gates[:, 2 * H:3 * H])
                c = f_g * c + i_g * g_g
                h = o_g * jnp.tanh(c)
                hbuf[pl.ds(t * B, B), :] = h           # off the critical chain
            h_st[l] = h
            c_st[l] = c
            cur = hbuf[...]                            # (CB, H) chunk hidden
        return cur

    def kernel(*refs):
        pos = 0
        x_ref = refs[pos]; pos += 1                    # (CB, F)
        eps_ref = refs[pos]; pos += 1                  # (CB, L)
        enc_refs = refs[pos:pos + n_l]; pos += n_l
        dec_refs = refs[pos:pos + n_l]; pos += n_l
        wlat_ref, blat_ref = refs[pos], refs[pos + 1]; pos += 2
        wout_ref, bout_ref = refs[pos], refs[pos + 1]; pos += 2
        zmu_ref, zsig_ref, zout_ref, xmu_ref, xsig_ref = refs[pos:pos + 5]
        pos += 5
        h_enc, c_enc, h_dec, c_dec, hbuf = refs[pos:pos + 5]

        @pl.when(pl.program_id(0) == 0)
        def _init():
            h_enc[...] = jnp.zeros_like(h_enc)
            c_enc[...] = jnp.zeros_like(c_enc)
            h_dec[...] = jnp.zeros_like(h_dec)
            c_dec[...] = jnp.zeros_like(c_dec)

        # ---- encoder stack + fused latent heads + reparameterization ----
        h_top = run_stack(x_ref[...], enc_refs, h_enc, c_enc, hbuf)   # (CB, H)
        lat = jnp.dot(h_top.astype(jnp.bfloat16), wlat_ref[...],
                      preferred_element_type=jnp.float32) + blat_ref[...]
        z_mu = lat[:, 0:L]
        z_sigma = jnp.exp(0.5 * lat[:, L:2 * L])
        z = eps_ref[...] * z_sigma + z_mu
        zmu_ref[...] = z_mu                            # one dense store / chunk
        zsig_ref[...] = z_sigma
        zout_ref[...] = z

        # ---------------- decoder stack + output heads --------------------
        d_top = run_stack(z, dec_refs, h_dec, c_dec, hbuf)            # (CB, H)
        head = jnp.dot(d_top.astype(jnp.bfloat16), wout_ref[...],
                       preferred_element_type=jnp.float32) + bout_ref[...]
        xmu_ref[...] = head[:, 0:F]
        xsig_ref[...] = _softplus(head[:, F:2 * F])

    return kernel


# ---------------------------------------------------------------------------
# pallas_call wrapper: full forward pass (mirrors _LSTMVAE.forward)
# ---------------------------------------------------------------------------
_VMEM_LIMIT = 32 * 1024 * 1024   # explicit; actual usage here is only KBs


def lstmvae_forward(x_ncl, params, eps, *, t_chunk=8):
    """x_ncl: (batch, n_features, seq_len).  eps: (seq_len, batch, latent)."""
    B, F, T = x_ncl.shape
    enc_layers = params["encoder"]
    dec_layers = params["decoder"]
    num_layers = len(enc_layers)
    H = enc_layers[0][1].shape[0]                  # w_hh: (H, 4H)
    L = params["w_lat"].shape[1] // 2

    # t_chunk * B must be a multiple of 8 (sublane tiling of the 2-D blocks).
    step = 8 // math.gcd(B, 8)
    t_chunk = max(1, min(t_chunk, T))
    t_chunk = ((t_chunk + step - 1) // step) * step
    n_chunks = -(-T // t_chunk)
    T_pad = n_chunks * t_chunk
    CB = t_chunk * B

    x = jnp.transpose(x_ncl, (2, 0, 1)).astype(jnp.float32)       # (T, B, F)
    eps = eps.astype(jnp.float32)
    if T_pad != T:
        # LSTM is causal; trailing zero-padding cannot affect valid outputs.
        x = jnp.pad(x, ((0, T_pad - T), (0, 0), (0, 0)))
        eps = jnp.pad(eps, ((0, T_pad - T), (0, 0), (0, 0)))
    x2 = x.reshape(T_pad * B, F)                                   # free reshape
    eps2 = eps.reshape(T_pad * B, L)

    def seq_spec(feat):
        return pl.BlockSpec((CB, feat), lambda c: (c, 0))

    def const_spec(arr):
        return pl.BlockSpec(arr.shape, lambda c: (0,) * arr.ndim)

    in_specs = [seq_spec(F), seq_spec(L)]
    inputs = [x2, eps2]
    for (w_ih, w_hh, b) in list(enc_layers) + list(dec_layers):
        in_specs += [const_spec(w_ih), const_spec(w_hh), const_spec(b)]
        inputs += [w_ih, w_hh, b]
    in_specs += [const_spec(params["w_lat"]), const_spec(params["b_lat"]),
                 const_spec(params["w_out"]), const_spec(params["b_out"])]
    inputs += [params["w_lat"], params["b_lat"],
               params["w_out"], params["b_out"]]

    kernel = _make_vae_kernel(num_layers, H, L, F, B, t_chunk)
    out_shapes = (
        jax.ShapeDtypeStruct((T_pad * B, L), jnp.float32),   # z_mu
        jax.ShapeDtypeStruct((T_pad * B, L), jnp.float32),   # z_sigma
        jax.ShapeDtypeStruct((T_pad * B, L), jnp.float32),   # z
        jax.ShapeDtypeStruct((T_pad * B, F), jnp.float32),   # x_mu
        jax.ShapeDtypeStruct((T_pad * B, F), jnp.float32),   # x_sigma
    )
    out_specs = [seq_spec(L), seq_spec(L), seq_spec(L), seq_spec(F), seq_spec(F)]

    z_mu2, z_sig2, z2, x_mu2, x_sig2 = pl.pallas_call(
        kernel,
        out_shape=out_shapes,
        grid_spec=pltpu.PrefetchScalarGridSpec(
            num_scalar_prefetch=0,
            grid=(n_chunks,),
            in_specs=in_specs,
            out_specs=out_specs,
            scratch_shapes=[
                pltpu.VMEM((num_layers, B, H), jnp.float32),   # encoder h
                pltpu.VMEM((num_layers, B, H), jnp.float32),   # encoder c
                pltpu.VMEM((num_layers, B, H), jnp.float32),   # decoder h
                pltpu.VMEM((num_layers, B, H), jnp.float32),   # decoder c
                pltpu.VMEM((CB, H), jnp.float32),              # chunk hidden buf
            ],
        ),
        compiler_params=pltpu.CompilerParams(
            dimension_semantics=("arbitrary",),    # sequential recurrence
            vmem_limit_bytes=_VMEM_LIMIT,
        ),
    )(*inputs)

    def unflat(a2, feat):
        return a2.reshape(T_pad, B, feat)[:T]

    z_mu = unflat(z_mu2, L)                        # (T, B, L)
    z_sigma = unflat(z_sig2, L)
    z = unflat(z2, L)
    x_mu = jnp.transpose(unflat(x_mu2, F), (1, 2, 0))       # (B, F, T)
    x_sigma = jnp.transpose(unflat(x_sig2, F), (1, 2, 0))   # (B, F, T)
    return x_mu, x_sigma, z_mu, z_sigma, z


# ---------------------------------------------------------------------------
# Parameter init (deterministic, PyTorch-style uniform(-1/sqrt(H), 1/sqrt(H)))
# Weights bf16 (MXU operands), biases f32.
# ---------------------------------------------------------------------------
def init_params(key, n_features, hidden_size, latent_size, num_layers):
    bound = 1.0 / float(hidden_size) ** 0.5
    keys = iter(jax.random.split(key, 8 * num_layers + 16))

    def unif(shape):
        return jax.random.uniform(next(keys), shape, jnp.float32, -bound, bound)

    def lstm_stack(input_size):
        layers = []
        in_sz = input_size
        for _ in range(num_layers):
            w_ih = unif((in_sz, 4 * hidden_size)).astype(jnp.bfloat16)
            w_hh = unif((hidden_size, 4 * hidden_size)).astype(jnp.bfloat16)
            b = (unif((4 * hidden_size,)) + unif((4 * hidden_size,))).reshape(1, -1)
            layers.append((w_ih, w_hh, b))
            in_sz = hidden_size
        return layers

    w_hmu = unif((hidden_size, latent_size))
    b_hmu = unif((latent_size,))
    w_hlv = unif((hidden_size, latent_size))
    b_hlv = unif((latent_size,))
    w_xmu = unif((hidden_size, n_features))
    b_xmu = unif((n_features,))
    w_xs = unif((hidden_size, n_features))
    b_xs = unif((n_features,))

    return {
        "encoder": lstm_stack(n_features),
        "decoder": lstm_stack(latent_size),
        # concatenated head weights -> one MXU dot per head per chunk
        "w_lat": jnp.concatenate([w_hmu, w_hlv], axis=1).astype(jnp.bfloat16),
        "b_lat": jnp.concatenate([b_hmu, b_hlv]).reshape(1, -1),
        "w_out": jnp.concatenate([w_xmu, w_xs], axis=1).astype(jnp.bfloat16),
        "b_out": jnp.concatenate([b_xmu, b_xs]).reshape(1, -1),
    }


if __name__ == "__main__":
    # small shapes consistent with the module
    batch, n_features, seq_len = 2, 4, 8
    hidden_size, latent_size, num_layers = 32, 16, 2

    root = jax.random.PRNGKey(0)
    k_param, k_x, k_eps = jax.random.split(root, 3)

    params = init_params(k_param, n_features, hidden_size, latent_size, num_layers)
    x = jax.random.normal(k_x, (batch, n_features, seq_len), jnp.float32)
    # TODO(synk): torch.randn noise is sampled host-side with jax.random and
    # passed in (bit-exact torch RNG reproduction is not attempted).
    eps = jax.random.normal(k_eps, (seq_len, batch, latent_size), jnp.float32)

    fwd = jax.jit(functools.partial(lstmvae_forward, params=params, eps=eps))
    x_mu, x_sigma, z_mu, z_sigma, z = fwd(x)
    jax.block_until_ready((x_mu, x_sigma, z_mu, z_sigma, z))

    assert x_mu.shape == (batch, n_features, seq_len)
    assert x_sigma.shape == (batch, n_features, seq_len)
    assert z_mu.shape == (seq_len, batch, latent_size)
    assert z_sigma.shape == (seq_len, batch, latent_size)
    assert z.shape == (seq_len, batch, latent_size)
    assert bool(jnp.all(x_sigma > 0))              # softplus output is positive
    assert bool(jnp.all(z_sigma > 0))              # exp(0.5 logvar) is positive
    assert bool(jnp.all(jnp.isfinite(x_mu)))
    assert bool(jnp.all(jnp.isfinite(z)))

    print("KERNEL_OK")
</pallas_src>

<mosaic_0001>
module attributes {stable_mosaic.version = 11 : i64} {
  func.func @kernel(%arg0: i32, %arg1: memref<16x4xf32, #tpu.memory_space<vmem>>, %arg2: memref<16x16xf32, #tpu.memory_space<vmem>>, %arg3: memref<4x128xbf16, #tpu.memory_space<vmem>>, %arg4: memref<32x128xbf16, #tpu.memory_space<vmem>>, %arg5: memref<1x128xf32, #tpu.memory_space<vmem>>, %arg6: memref<32x128xbf16, #tpu.memory_space<vmem>>, %arg7: memref<32x128xbf16, #tpu.memory_space<vmem>>, %arg8: memref<1x128xf32, #tpu.memory_space<vmem>>, %arg9: memref<16x128xbf16, #tpu.memory_space<vmem>>, %arg10: memref<32x128xbf16, #tpu.memory_space<vmem>>, %arg11: memref<1x128xf32, #tpu.memory_space<vmem>>, %arg12: memref<32x128xbf16, #tpu.memory_space<vmem>>, %arg13: memref<32x128xbf16, #tpu.memory_space<vmem>>, %arg14: memref<1x128xf32, #tpu.memory_space<vmem>>, %arg15: memref<32x32xbf16, #tpu.memory_space<vmem>>, %arg16: memref<1x32xf32, #tpu.memory_space<vmem>>, %arg17: memref<32x8xbf16, #tpu.memory_space<vmem>>, %arg18: memref<1x8xf32, #tpu.memory_space<vmem>>, %arg19: memref<16x16xf32, #tpu.memory_space<vmem>>, %arg20: memref<16x16xf32, #tpu.memory_space<vmem>>, %arg21: memref<16x16xf32, #tpu.memory_space<vmem>>, %arg22: memref<16x4xf32, #tpu.memory_space<vmem>>, %arg23: memref<16x4xf32, #tpu.memory_space<vmem>>, %arg24: memref<2x2x32xf32, #tpu.memory_space<vmem>>, %arg25: memref<2x2x32xf32, #tpu.memory_space<vmem>>, %arg26: memref<2x2x32xf32, #tpu.memory_space<vmem>>, %arg27: memref<2x2x32xf32, #tpu.memory_space<vmem>>, %arg28: memref<16x32xf32, #tpu.memory_space<vmem>>) attributes {dimension_semantics = [#tpu.dimension_semantics<arbitrary>], iteration_bounds = array<i64: 1>, scalar_prefetch = 0 : i64, scratch_operands = 5 : i64, tpu.core_type = #tpu.core_type<tc>, window_params = [{transform_indices = @transform_0, window_bounds = array<i64: 16, 4>}, {transform_indices = @transform_1, window_bounds = array<i64: 16, 16>}, {pipeline_mode = #tpu.pipeline_mode<synchronous>, transform_indices = @transform_2, window_bounds = array<i64: 4, 128>}, {pipeline_mode = #tpu.pipeline_mode<synchronous>, transform_indices = @transform_3, window_bounds = array<i64: 32, 128>}, {pipeline_mode = #tpu.pipeline_mode<synchronous>, transform_indices = @transform_4, window_bounds = array<i64: 1, 128>}, {pipeline_mode = #tpu.pipeline_mode<synchronous>, transform_indices = @transform_5, window_bounds = array<i64: 32, 128>}, {pipeline_mode = #tpu.pipeline_mode<synchronous>, transform_indices = @transform_6, window_bounds = array<i64: 32, 128>}, {pipeline_mode = #tpu.pipeline_mode<synchronous>, transform_indices = @transform_7, window_bounds = array<i64: 1, 128>}, {pipeline_mode = #tpu.pipeline_mode<synchronous>, transform_indices = @transform_8, window_bounds = array<i64: 16, 128>}, {pipeline_mode = #tpu.pipeline_mode<synchronous>, transform_indices = @transform_9, window_bounds = array<i64: 32, 128>}, {pipeline_mode = #tpu.pipeline_mode<synchronous>, transform_indices = @transform_10, window_bounds = array<i64: 1, 128>}, {pipeline_mode = #tpu.pipeline_mode<synchronous>, transform_indices = @transform_11, window_bounds = array<i64: 32, 128>}, {pipeline_mode = #tpu.pipeline_mode<synchronous>, transform_indices = @transform_12, window_bounds = array<i64: 32, 128>}, {pipeline_mode = #tpu.pipeline_mode<synchronous>, transform_indices = @transform_13, window_bounds = array<i64: 1, 128>}, {pipeline_mode = #tpu.pipeline_mode<synchronous>, transform_indices = @transform_14, window_bounds = array<i64: 32, 32>}, {pipeline_mode = #tpu.pipeline_mode<synchronous>, transform_indices = @transform_15, window_bounds = array<i64: 1, 32>}, {pipeline_mode = #tpu.pipeline_mode<synchronous>, transform_indices = @transform_16, window_bounds = array<i64: 32, 8>}, {pipeline_mode = #tpu.pipeline_mode<synchronous>, transform_indices = @transform_17, window_bounds = array<i64: 1, 8>}, {transform_indices = @transform_18, window_bounds = array<i64: 16, 16>}, {transform_indices = @transform_19, window_bounds = array<i64: 16, 16>}, {transform_indices = @transform_20, window_bounds = array<i64: 16, 16>}, {transform_indices = @transform_21, window_bounds = array<i64: 16, 4>}, {transform_indices = @transform_22, window_bounds = array<i64: 16, 4>}]} {
    %c0_i32 = arith.constant 0 : i32
    %0 = arith.cmpi eq, %arg0, %c0_i32 : i32
    %1 = arith.extui %0 : i1 to i32
    %c0_i32_0 = arith.constant 0 : i32
    %2 = arith.cmpi ne, %1, %c0_i32_0 : i32
    scf.if %2 {
      %cst_295 = arith.constant 0.000000e+00 : f32
      %849 = vector.broadcast %cst_295 : f32 to vector<2x2x32xf32>
      %c0_296 = arith.constant 0 : index
      %c0_297 = arith.constant 0 : index
      %c0_298 = arith.constant 0 : index
      %850 = vector.load %arg24[%c0_296, %c0_297, %c0_298] : memref<2x2x32xf32, #tpu.memory_space<vmem>>, vector<2x2x32xf32>
      tpu.vector_store %arg24[%c0_296, %c0_297, %c0_298], %849 {strides = array<i32>} : memref<2x2x32xf32, #tpu.memory_space<vmem>>, vector<2x2x32xf32>,
      %cst_299 = arith.constant 0.000000e+00 : f32
      %851 = vector.broadcast %cst_299 : f32 to vector<2x2x32xf32>
      %c0_300 = arith.constant 0 : index
      %c0_301 = arith.constant 0 : index
      %c0_302 = arith.constant 0 : index
      %852 = vector.load %arg25[%c0_300, %c0_301, %c0_302] : memref<2x2x32xf32, #tpu.memory_space<vmem>>, vector<2x2x32xf32>
      tpu.vector_store %arg25[%c0_300, %c0_301, %c0_302], %851 {strides = array<i32>} : memref<2x2x32xf32, #tpu.memory_space<vmem>>, vector<2x2x32xf32>,
      %cst_303 = arith.constant 0.000000e+00 : f32
      %853 = vector.broadcast %cst_303 : f32 to vector<2x2x32xf32>
      %c0_304 = arith.constant 0 : index
      %c0_305 = arith.constant 0 : index
      %c0_306 = arith.constant 0 : index
      %854 = vector.load %arg26[%c0_304, %c0_305, %c0_306] : memref<2x2x32xf32, #tpu.memory_space<vmem>>, vector<2x2x32xf32>
      tpu.vector_store %arg26[%c0_304, %c0_305, %c0_306], %853 {strides = array<i32>} : memref<2x2x32xf32, #tpu.memory_space<vmem>>, vector<2x2x32xf32>,
      %cst_307 = arith.constant 0.000000e+00 : f32
      %855 = vector.broadcast %cst_307 : f32 to vector<2x2x32xf32>
      %c0_308 = arith.constant 0 : index
      %c0_309 = arith.constant 0 : index
      %c0_310 = arith.constant 0 : index
      %856 = vector.load %arg27[%c0_308, %c0_309, %c0_310] : memref<2x2x32xf32, #tpu.memory_space<vmem>>, vector<2x2x32xf32>
      tpu.vector_store %arg27[%c0_308, %c0_309, %c0_310], %855 {strides = array<i32>} : memref<2x2x32xf32, #tpu.memory_space<vmem>>, vector<2x2x32xf32>,
    } else {
    }
    %c0 = arith.constant 0 : index
    %c0_1 = arith.constant 0 : index
    %3 = vector.load %arg1[%c0, %c0_1] : memref<16x4xf32, #tpu.memory_space<vmem>>, vector<16x4xf32>
    %c0_2 = arith.constant 0 : index
    %c0_3 = arith.constant 0 : index
    %4 = vector.load %arg3[%c0_2, %c0_3] : memref<4x128xbf16, #tpu.memory_space<vmem>>, vector<4x128xbf16>
    %c0_4 = arith.constant 0 : index
    %c0_5 = arith.constant 0 : index
    %5 = vector.load %arg4[%c0_4, %c0_5] : memref<32x128xbf16, #tpu.memory_space<vmem>>, vector<32x128xbf16>
    %c0_6 = arith.constant 0 : index
    %c0_7 = arith.constant 0 : index
    %6 = vector.load %arg5[%c0_6, %c0_7] : memref<1x128xf32, #tpu.memory_space<vmem>>, vector<1x128xf32>
    %7 = arith.truncf %3 : vector<16x4xf32> to vector<16x4xbf16>
    %cst = arith.constant dense<0.000000e+00> : vector<16x128xf32>
    %8 = tpu.matmul %7, %4, %cst {dimension_numbers = #tpu.dot_dimension_numbers<[1], [0], [0], [1], [0, 0, 1, 1], [], []>} : vector<16x4xbf16>, vector<4x128xbf16>, vector<16x128xf32> -> vector<16x128xf32>
    %9 = vector.broadcast %6 : vector<1x128xf32> to vector<16x128xf32>
    %10 = arith.addf %8, %9 : vector<16x128xf32>
    %c0_8 = arith.constant 0 : index
    %c0_9 = arith.constant 0 : index
    %c0_10 = arith.constant 0 : index
    %11 = vector.load %arg24[%c0_8, %c0_9, %c0_10] : memref<2x2x32xf32, #tpu.memory_space<vmem>>, vector<1x2x32xf32>
    %12 = vector.shape_cast %11 : vector<1x2x32xf32> to vector<2x32xf32>
    %c0_11 = arith.constant 0 : index
    %c0_12 = arith.constant 0 : index
    %c0_13 = arith.constant 0 : index
    %13 = vector.load %arg25[%c0_11, %c0_12, %c0_13] : memref<2x2x32xf32, #tpu.memory_space<vmem>>, vector<1x2x32xf32>
    %14 = vector.shape_cast %13 : vector<1x2x32xf32> to vector<2x32xf32>
    %15 = vector.extract_strided_slice %10 {offsets = [0, 0], sizes = [2, 128], strides = [1, 1]} : vector<16x128xf32> to vector<2x128xf32>
    %16 = arith.truncf %12 : vector<2x32xf32> to vector<2x32xbf16>
    %cst_14 = arith.constant dense<0.000000e+00> : vector<2x128xf32>
    %17 = tpu.matmul %16, %5, %cst_14 {dimension_numbers = #tpu.dot_dimension_numbers<[1], [0], [0], [1], [0, 0, 1, 1], [], []>} : vector<2x32xbf16>, vector<32x128xbf16>, vector<2x128xf32> -> vector<2x128xf32>
    %18 = arith.addf %15, %17 : vector<2x128xf32>
    %cst_15 = arith.constant -3.000000e+01 : f32
    %19 = vector.broadcast %cst_15 : f32 to vector<2x128xf32>
    %20 = arith.maximumf %18, %19 : vector<2x128xf32>
    %cst_16 = arith.constant 0.000000e+00 : f32
    %21 = vector.broadcast %cst_16 : f32 to vector<2x128xf32>
    %22 = arith.subf %21, %20 : vector<2x128xf32>
    %23 = math.exp %22 : vector<2x128xf32>
    %cst_17 = arith.constant 1.000000e+00 : f32
    %24 = vector.broadcast %cst_17 : f32 to vector<2x128xf32>
    %25 = arith.addf %24, %23 : vector<2x128xf32>
    %26 = tpu.reciprocal %25 {approx = true} : vector<2x128xf32> -> vector<2x128xf32>
    %27 = vector.extract_strided_slice %26 {offsets = [0, 0], sizes = [2, 32], strides = [1, 1]} : vector<2x128xf32> to vector<2x32xf32>
    %28 = vector.extract_strided_slice %26 {offsets = [0, 32], sizes = [2, 32], strides = [1, 1]} : vector<2x128xf32> to vector<2x32xf32>
    %29 = vector.extract_strided_slice %26 {offsets = [0, 96], sizes = [2, 32], strides = [1, 1]} : vector<2x128xf32> to vector<2x32xf32>
    %30 = vector.extract_strided_slice %18 {offsets = [0, 64], sizes = [2, 32], strides = [1, 1]} : vector<2x128xf32> to vector<2x32xf32>
    %31 = math.tanh %30 : vector<2x32xf32>
    %32 = arith.mulf %28, %14 : vector<2x32xf32>
    %33 = arith.mulf %27, %31 : vector<2x32xf32>
    %34 = arith.addf %32, %33 : vector<2x32xf32>
    %35 = math.tanh %34 : vector<2x32xf32>
    %36 = arith.mulf %29, %35 : vector<2x32xf32>
    %c0_18 = arith.constant 0 : index
    %c0_19 = arith.constant 0 : index
    %37 = vector.load %arg28[%c0_18, %c0_19] : memref<16x32xf32, #tpu.memory_space<vmem>>, vector<2x32xf32>
    tpu.vector_store %arg28[%c0_18, %c0_19], %36 {strides = array<i32>} : memref<16x32xf32, #tpu.memory_space<vmem>>, vector<2x32xf32>,
    %38 = vector.extract_strided_slice %10 {offsets = [2, 0], sizes = [2, 128], strides = [1, 1]} : vector<16x128xf32> to vector<2x128xf32>
    %39 = arith.truncf %36 : vector<2x32xf32> to vector<2x32xbf16>
    %cst_20 = arith.constant dense<0.000000e+00> : vector<2x128xf32>
    %40 = tpu.matmul %39, %5, %cst_20 {dimension_numbers = #tpu.dot_dimension_numbers<[1], [0], [0], [1], [0, 0, 1, 1], [], []>} : vector<2x32xbf16>, vector<32x128xbf16>, vector<2x128xf32> -> vector<2x128xf32>
    %41 = arith.addf %38, %40 : vector<2x128xf32>
    %cst_21 = arith.constant -3.000000e+01 : f32
    %42 = vector.broadcast %cst_21 : f32 to vector<2x128xf32>
    %43 = arith.maximumf %41, %42 : vector<2x128xf32>
    %cst_22 = arith.constant 0.000000e+00 : f32
    %44 = vector.broadcast %cst_22 : f32 to vector<2x128xf32>
    %45 = arith.subf %44, %43 : vector<2x128xf32>
    %46 = math.exp %45 : vector<2x128xf32>
    %cst_23 = arith.constant 1.000000e+00 : f32
    %47 = vector.broadcast %cst_23 : f32 to vector<2x128xf32>
    %48 = arith.addf %47, %46 : vector<2x128xf32>
    %49 = tpu.reciprocal %48 {approx = true} : vector<2x128xf32> -> vector<2x128xf32>
    %50 = vector.extract_strided_slice %49 {offsets = [0, 0], sizes = [2, 32], strides = [1, 1]} : vector<2x128xf32> to vector<2x32xf32>
    %51 = vector.extract_strided_slice %49 {offsets = [0, 32], sizes = [2, 32], strides = [1, 1]} : vector<2x128xf32> to vector<2x32xf32>
    %52 = vector.extract_strided_slice %49 {offsets = [0, 96], sizes = [2, 32], strides = [1, 1]} : vector<2x128xf32> to vector<2x32xf32>
    %53 = vector.extract_strided_slice %41 {offsets = [0, 64], sizes = [2, 32], strides = [1, 1]} : vector<2x128xf32> to vector<2x32xf32>
    %54 = math.tanh %53 : vector<2x32xf32>
    %55 = arith.mulf %51, %34 : vector<2x32xf32>
    %56 = arith.mulf %50, %54 : vector<2x32xf32>
    %57 = arith.addf %55, %56 : vector<2x32xf32>
    %58 = math.tanh %57 : vector<2x32xf32>
    %59 = arith.mulf %52, %58 : vector<2x32xf32>
    %c2 = arith.constant 2 : index
    %c0_24 = arith.constant 0 : index
    %60 = vector.load %arg28[%c2, %c0_24] : memref<16x32xf32, #tpu.memory_space<vmem>>, vector<2x32xf32>
    tpu.vector_store %arg28[%c2, %c0_24], %59 {strides = array<i32>} : memref<16x32xf32, #tpu.memory_space<vmem>>, vector<2x32xf32>,
    %61 = vector.extract_strided_slice %10 {offsets = [4, 0], sizes = [2, 128], strides = [1, 1]} : vector<16x128xf32> to vector<2x128xf32>
    %62 = arith.truncf %59 : vector<2x32xf32> to vector<2x32xbf16>
    %cst_25 = arith.constant dense<0.000000e+00> : vector<2x128xf32>
    %63 = tpu.matmul %62, %5, %cst_25 {dimension_numbers = #tpu.dot_dimension_numbers<[1], [0], [0], [1], [0, 0, 1, 1], [], []>} : vector<2x32xbf16>, vector<32x128xbf16>, vector<2x128xf32> -> vector<2x128xf32>
    %64 = arith.addf %61, %63 : vector<2x128xf32>
    %cst_26 = arith.constant -3.000000e+01 : f32
    %65 = vector.broadcast %cst_26 : f32 to vector<2x128xf32>
    %66 = arith.maximumf %64, %65 : vector<2x128xf32>
    %cst_27 = arith.constant 0.000000e+00 : f32
    %67 = vector.broadcast %cst_27 : f32 to vector<2x128xf32>
    %68 = arith.subf %67, %66 : vector<2x128xf32>
    %69 = math.exp %68 : vector<2x128xf32>
    %cst_28 = arith.constant 1.000000e+00 : f32
    %70 = vector.broadcast %cst_28 : f32 to vector<2x128xf32>
    %71 = arith.addf %70, %69 : vector<2x128xf32>
    %72 = tpu.reciprocal %71 {approx = true} : vector<2x128xf32> -> vector<2x128xf32>
    %73 = vector.extract_strided_slice %72 {offsets = [0, 0], sizes = [2, 32], strides = [1, 1]} : vector<2x128xf32> to vector<2x32xf32>
    %74 = vector.extract_strided_slice %72 {offsets = [0, 32], sizes = [2, 32], strides = [1, 1]} : vector<2x128xf32> to vector<2x32xf32>
    %75 = vector.extract_strided_slice %72 {offsets = [0, 96], sizes = [2, 32], strides = [1, 1]} : vector<2x128xf32> to vector<2x32xf32>
    %76 = vector.extract_strided_slice %64 {offsets = [0, 64], sizes = [2, 32], strides = [1, 1]} : vector<2x128xf32> to vector<2x32xf32>
    %77 = math.tanh %76 : vector<2x32xf32>
    %78 = arith.mulf %74, %57 : vector<2x32xf32>
    %79 = arith.mulf %73, %77 : vector<2x32xf32>
    %80 = arith.addf %78, %79 : vector<2x32xf32>
    %81 = math.tanh %80 : vector<2x32xf32>
    %82 = arith.mulf %75, %81 : vector<2x32xf32>
    %c4 = arith.constant 4 : index
    %c0_29 = arith.constant 0 : index
    %83 = vector.load %arg28[%c4, %c0_29] : memref<16x32xf32, #tpu.memory_space<vmem>>, vector<2x32xf32>
    tpu.vector_store %arg28[%c4, %c0_29], %82 {strides = array<i32>} : memref<16x32xf32, #tpu.memory_space<vmem>>, vector<2x32xf32>,
    %84 = vector.extract_strided_slice %10 {offsets = [6, 0], sizes = [2, 128], strides = [1, 1]} : vector<16x128xf32> to vector<2x128xf32>
    %85 = arith.truncf %82 : vector<2x32xf32> to vector<2x32xbf16>
    %cst_30 = arith.constant dense<0.000000e+00> : vector<2x128xf32>
    %86 = tpu.matmul %85, %5, %cst_30 {dimension_numbers = #tpu.dot_dimension_numbers<[1], [0], [0], [1], [0, 0, 1, 1], [], []>} : vector<2x32xbf16>, vector<32x128xbf16>, vector<2x128xf32> -> vector<2x128xf32>
    %87 = arith.addf %84, %86 : vector<2x128xf32>
    %cst_31 = arith.constant -3.000000e+01 : f32
    %88 = vector.broadcast %cst_31 : f32 to vector<2x128xf32>
    %89 = arith.maximumf %87, %88 : vector<2x128xf32>
    %cst_32 = arith.constant 0.000000e+00 : f32
    %90 = vector.broadcast %cst_32 : f32 to vector<2x128xf32>
    %91 = arith.subf %90, %89 : vector<2x128xf32>
    %92 = math.exp %91 : vector<2x128xf32>
    %cst_33 = arith.constant 1.000000e+00 : f32
    %93 = vector.broadcast %cst_33 : f32 to vector<2x128xf32>
    %94 = arith.addf %93, %92 : vector<2x128xf32>
    %95 = tpu.reciprocal %94 {approx = true} : vector<2x128xf32> -> vector<2x128xf32>
    %96 = vector.extract_strided_slice %95 {offsets = [0, 0], sizes = [2, 32], strides = [1, 1]} : vector<2x128xf32> to vector<2x32xf32>
    %97 = vector.extract_strided_slice %95 {offsets = [0, 32], sizes = [2, 32], strides = [1, 1]} : vector<2x128xf32> to vector<2x32xf32>
    %98 = vector.extract_strided_slice %95 {offsets = [0, 96], sizes = [2, 32], strides = [1, 1]} : vector<2x128xf32> to vector<2x32xf32>
    %99 = vector.extract_strided_slice %87 {offsets = [0, 64], sizes = [2, 32], strides = [1, 1]} : vector<2x128xf32> to vector<2x32xf32>
    %100 = math.tanh %99 : vector<2x32xf32>
    %101 = arith.mulf %97, %80 : vector<2x32xf32>
    %102 = arith.mulf %96, %100 : vector<2x32xf32>
    %103 = arith.addf %101, %102 : vector<2x32xf32>
    %104 = math.tanh %103 : vector<2x32xf32>
    %105 = arith.mulf %98, %104 : vector<2x32xf32>
    %c6 = arith.constant 6 : index
    %c0_34 = arith.constant 0 : index
    %106 = vector.load %arg28[%c6, %c0_34] : memref<16x32xf32, #tpu.memory_space<vmem>>, vector<2x32xf32>
    tpu.vector_store %arg28[%c6, %c0_34], %105 {strides = array<i32>} : memref<16x32xf32, #tpu.memory_space<vmem>>, vector<2x32xf32>,
    %107 = vector.extract_strided_slice %10 {offsets = [8, 0], sizes = [2, 128], strides = [1, 1]} : vector<16x128xf32> to vector<2x128xf32>
    %108 = arith.truncf %105 : vector<2x32xf32> to vector<2x32xbf16>
    %cst_35 = arith.constant dense<0.000000e+00> : vector<2x128xf32>
    %109 = tpu.matmul %108, %5, %cst_35 {dimension_numbers = #tpu.dot_dimension_numbers<[1], [0], [0], [1], [0, 0, 1, 1], [], []>} : vector<2x32xbf16>, vector<32x128xbf16>, vector<2x128xf32> -> vector<2x128xf32>
    %110 = arith.addf %107, %109 : vector<2x128xf32>
    %cst_36 = arith.constant -3.000000e+01 : f32
    %111 = vector.broadcast %cst_36 : f32 to vector<2x128xf32>
    %112 = arith.maximumf %110, %111 : vector<2x128xf32>
    %cst_37 = arith.constant 0.000000e+00 : f32
    %113 = vector.broadcast %cst_37 : f32 to vector<2x128xf32>
    %114 = arith.subf %113, %112 : vector<2x128xf32>
    %115 = math.exp %114 : vector<2x128xf32>
    %cst_38 = arith.constant 1.000000e+00 : f32
    %116 = vector.broadcast %cst_38 : f32 to vector<2x128xf32>
    %117 = arith.addf %116, %115 : vector<2x128xf32>
    %118 = tpu.reciprocal %117 {approx = true} : vector<2x128xf32> -> vector<2x128xf32>
    %119 = vector.extract_strided_slice %118 {offsets = [0, 0], sizes = [2, 32], strides = [1, 1]} : vector<2x128xf32> to vector<2x32xf32>
    %120 = vector.extract_strided_slice %118 {offsets = [0, 32], sizes = [2, 32], strides = [1, 1]} : vector<2x128xf32> to vector<2x32xf32>
    %121 = vector.extract_strided_slice %118 {offsets = [0, 96], sizes = [2, 32], strides = [1, 1]} : vector<2x128xf32> to vector<2x32xf32>
    %122 = vector.extract_strided_slice %110 {offsets = [0, 64], sizes = [2, 32], strides = [1, 1]} : vector<2x128xf32> to vector<2x32xf32>
    %123 = math.tanh %122 : vector<2x32xf32>
    %124 = arith.mulf %120, %103 : vector<2x32xf32>
    %125 = arith.mulf %119, %123 : vector<2x32xf32>
    %126 = arith.addf %124, %125 : vector<2x32xf32>
    %127 = math.tanh %126 : vector<2x32xf32>
    %128 = arith.mulf %121, %127 : vector<2x32xf32>
    %c8 = arith.constant 8 : index
    %c0_39 = arith.constant 0 : index
    %129 = vector.load %arg28[%c8, %c0_39] : memref<16x32xf32, #tpu.memory_space<vmem>>, vector<2x32xf32>
    tpu.vector_store %arg28[%c8, %c0_39], %128 {strides = array<i32>} : memref<16x32xf32, #tpu.memory_space<vmem>>, vector<2x32xf32>,
    %130 = vector.extract_strided_slice %10 {offsets = [10, 0], sizes = [2, 128], strides = [1, 1]} : vector<16x128xf32> to vector<2x128xf32>
    %131 = arith.truncf %128 : vector<2x32xf32> to vector<2x32xbf16>
    %cst_40 = arith.constant dense<0.000000e+00> : vector<2x128xf32>
    %132 = tpu.matmul %131, %5, %cst_40 {dimension_numbers = #tpu.dot_dimension_numbers<[1], [0], [0], [1], [0, 0, 1, 1], [], []>} : vector<2x32xbf16>, vector<32x128xbf16>, vector<2x128xf32> -> vector<2x128xf32>
    %133 = arith.addf %130, %132 : vector<2x128xf32>
    %cst_41 = arith.constant -3.000000e+01 : f32
    %134 = vector.broadcast %cst_41 : f32 to vector<2x128xf32>
    %135 = arith.maximumf %133, %134 : vector<2x128xf32>
    %cst_42 = arith.constant 0.000000e+00 : f32
    %136 = vector.broadcast %cst_42 : f32 to vector<2x128xf32>
    %137 = arith.subf %136, %135 : vector<2x128xf32>
    %138 = math.exp %137 : vector<2x128xf32>
    %cst_43 = arith.constant 1.000000e+00 : f32
    %139 = vector.broadcast %cst_43 : f32 to vector<2x128xf32>
    %140 = arith.addf %139, %138 : vector<2x128xf32>
    %141 = tpu.reciprocal %140 {approx = true} : vector<2x128xf32> -> vector<2x128xf32>
    %142 = vector.extract_strided_slice %141 {offsets = [0, 0], sizes = [2, 32], strides = [1, 1]} : vector<2x128xf32> to vector<2x32xf32>
    %143 = vector.extract_strided_slice %141 {offsets = [0, 32], sizes = [2, 32], strides = [1, 1]} : vector<2x128xf32> to vector<2x32xf32>
    %144 = vector.extract_strided_slice %141 {offsets = [0, 96], sizes = [2, 32], strides = [1, 1]} : vector<2x128xf32> to vector<2x32xf32>
    %145 = vector.extract_strided_slice %133 {offsets = [0, 64], sizes = [2, 32], strides = [1, 1]} : vector<2x128xf32> to vector<2x32xf32>
    %146 = math.tanh %145 : vector<2x32xf32>
    %147 = arith.mulf %143, %126 : vector<2x32xf32>
    %148 = arith.mulf %142, %146 : vector<2x32xf32>
    %149 = arith.addf %147, %148 : vector<2x32xf32>
    %150 = math.tanh %149 : vector<2x32xf32>
    %151 = arith.mulf %144, %150 : vector<2x32xf32>
    %c10 = arith.constant 10 : index
    %c0_44 = arith.constant 0 : index
    %152 = vector.load %arg28[%c10, %c0_44] : memref<16x32xf32, #tpu.memory_space<vmem>>, vector<2x32xf32>
    tpu.vector_store %arg28[%c10, %c0_44], %151 {strides = array<i32>} : memref<16x32xf32, #tpu.memory_space<vmem>>, vector<2x32xf32>,
    %153 = vector.extract_strided_slice %10 {offsets = [12, 0], sizes = [2, 128], strides = [1, 1]} : vector<16x128xf32> to vector<2x128xf32>
    %154 = arith.truncf %151 : vector<2x32xf32> to vector<2x32xbf16>
    %cst_45 = arith.constant dense<0.000000e+00> : vector<2x128xf32>
    %155 = tpu.matmul %154, %5, %cst_45 {dimension_numbers = #tpu.dot_dimension_numbers<[1], [0], [0], [1], [0, 0, 1, 1], [], []>} : vector<2x32xbf16>, vector<32x128xbf16>, vector<2x128xf32> -> vector<2x128xf32>
    %156 = arith.addf %153, %155 : vector<2x128xf32>
    %cst_46 = arith.constant -3.000000e+01 : f32
    %157 = vector.broadcast %cst_46 : f32 to vector<2x128xf32>
    %158 = arith.maximumf %156, %157 : vector<2x128xf32>
    %cst_47 = arith.constant 0.000000e+00 : f32
    %159 = vector.broadcast %cst_47 : f32 to vector<2x128xf32>
    %160 = arith.subf %159, %158 : vector<2x128xf32>
    %161 = math.exp %160 : vector<2x128xf32>
    %cst_48 = arith.constant 1.000000e+00 : f32
    %162 = vector.broadcast %cst_48 : f32 to vector<2x128xf32>
    %163 = arith.addf %162, %161 : vector<2x128xf32>
    %164 = tpu.reciprocal %163 {approx = true} : vector<2x128xf32> -> vector<2x128xf32>
    %165 = vector.extract_strided_slice %164 {offsets = [0, 0], sizes = [2, 32], strides = [1, 1]} : vector<2x128xf32> to vector<2x32xf32>
    %166 = vector.extract_strided_slice %164 {offsets = [0, 32], sizes = [2, 32], strides = [1, 1]} : vector<2x128xf32> to vector<2x32xf32>
    %167 = vector.extract_strided_slice %164 {offsets = [0, 96], sizes = [2, 32], strides = [1, 1]} : vector<2x128xf32> to vector<2x32xf32>
    %168 = vector.extract_strided_slice %156 {offsets = [0, 64], sizes = [2, 32], strides = [1, 1]} : vector<2x128xf32> to vector<2x32xf32>
    %169 = math.tanh %168 : vector<2x32xf32>
    %170 = arith.mulf %166, %149 : vector<2x32xf32>
    %171 = arith.mulf %165, %169 : vector<2x32xf32>
    %172 = arith.addf %170, %171 : vector<2x32xf32>
    %173 = math.tanh %172 : vector<2x32xf32>
    %174 = arith.mulf %167, %173 : vector<2x32xf32>
    %c12 = arith.constant 12 : index
    %c0_49 = arith.constant 0 : index
    %175 = vector.load %arg28[%c12, %c0_49] : memref<16x32xf32, #tpu.memory_space<vmem>>, vector<2x32xf32>
    tpu.vector_store %arg28[%c12, %c0_49], %174 {strides = array<i32>} : memref<16x32xf32, #tpu.memory_space<vmem>>, vector<2x32xf32>,
    %176 = vector.extract_strided_slice %10 {offsets = [14, 0], sizes = [2, 128], strides = [1, 1]} : vector<16x128xf32> to vector<2x128xf32>
    %177 = arith.truncf %174 : vector<2x32xf32> to vector<2x32xbf16>
    %cst_50 = arith.constant dense<0.000000e+00> : vector<2x128xf32>
    %178 = tpu.matmul %177, %5, %cst_50 {dimension_numbers = #tpu.dot_dimension_numbers<[1], [0], [0], [1], [0, 0, 1, 1], [], []>} : vector<2x32xbf16>, vector<32x128xbf16>, vector<2x128xf32> -> vector<2x128xf32>
    %179 = arith.addf %176, %178 : vector<2x128xf32>
    %cst_51 = arith.constant -3.000000e+01 : f32
    %180 = vector.broadcast %cst_51 : f32 to vector<2x128xf32>
    %181 = arith.maximumf %179, %180 : vector<2x128xf32>
    %cst_52 = arith.constant 0.000000e+00 : f32
    %182 = vector.broadcast %cst_52 : f32 to vector<2x128xf32>
    %183 = arith.subf %182, %181 : vector<2x128xf32>
    %184 = math.exp %183 : vector<2x128xf32>
    %cst_53 = arith.constant 1.000000e+00 : f32
    %185 = vector.broadcast %cst_53 : f32 to vector<2x128xf32>
    %186 = arith.addf %185, %184 : vector<2x128xf32>
    %187 = tpu.reciprocal %186 {approx = true} : vector<2x128xf32> -> vector<2x128xf32>
    %188 = vector.extract_strided_slice %187 {offsets = [0, 0], sizes = [2, 32], strides = [1, 1]} : vector<2x128xf32> to vector<2x32xf32>
    %189 = vector.extract_strided_slice %187 {offsets = [0, 32], sizes = [2, 32], strides = [1, 1]} : vector<2x128xf32> to vector<2x32xf32>
    %190 = vector.extract_strided_slice %187 {offsets = [0, 96], sizes = [2, 32], strides = [1, 1]} : vector<2x128xf32> to vector<2x32xf32>
    %191 = vector.extract_strided_slice %179 {offsets = [0, 64], sizes = [2, 32], strides = [1, 1]} : vector<2x128xf32> to vector<2x32xf32>
    %192 = math.tanh %191 : vector<2x32xf32>
    %193 = arith.mulf %189, %172 : vector<2x32xf32>
    %194 = arith.mulf %188, %192 : vector<2x32xf32>
    %195 = arith.addf %193, %194 : vector<2x32xf32>
    %196 = math.tanh %195 : vector<2x32xf32>
    %197 = arith.mulf %190, %196 : vector<2x32xf32>
    %c14 = arith.constant 14 : index
    %c0_54 = arith.constant 0 : index
    %198 = vector.load %arg28[%c14, %c0_54] : memref<16x32xf32, #tpu.memory_space<vmem>>, vector<2x32xf32>
    tpu.vector_store %arg28[%c14, %c0_54], %197 {strides = array<i32>} : memref<16x32xf32, #tpu.memory_space<vmem>>, vector<2x32xf32>,
    %c0_55 = arith.constant 0 : index
    %c0_56 = arith.constant 0 : index
    %c0_57 = arith.constant 0 : index
    %199 = vector.load %arg24[%c0_55, %c0_56, %c0_57] : memref<2x2x32xf32, #tpu.memory_space<vmem>>, vector<1x2x32xf32>
    %200 = vector.shape_cast %199 : vector<1x2x32xf32> to vector<2x32xf32>
    %201 = vector.shape_cast %197 : vector<2x32xf32> to vector<1x2x32xf32>
    tpu.vector_store %arg24[%c0_55, %c0_56, %c0_57], %201 {strides = array<i32>} : memref<2x2x32xf32, #tpu.memory_space<vmem>>, vector<1x2x32xf32>,
    %c0_58 = arith.constant 0 : index
    %c0_59 = arith.constant 0 : index
    %c0_60 = arith.constant 0 : index
    %202 = vector.load %arg25[%c0_58, %c0_59, %c0_60] : memref<2x2x32xf32, #tpu.memory_space<vmem>>, vector<1x2x32xf32>
    %203 = vector.shape_cast %202 : vector<1x2x32xf32> to vector<2x32xf32>
    %204 = vector.shape_cast %195 : vector<2x32xf32> to vector<1x2x32xf32>
    tpu.vector_store %arg25[%c0_58, %c0_59, %c0_60], %204 {strides = array<i32>} : memref<2x2x32xf32, #tpu.memory_space<vmem>>, vector<1x2x32xf32>,
    %c0_61 = arith.constant 0 : index
    %c0_62 = arith.constant 0 : index
    %205 = vector.load %arg28[%c0_61, %c0_62] : memref<16x32xf32, #tpu.memory_space<vmem>>, vector<16x32xf32>
    %c0_63 = arith.constant 0 : index
    %c0_64 = arith.constant 0 : index
    %206 = vector.load %arg6[%c0_63, %c0_64] : memref<32x128xbf16, #tpu.memory_space<vmem>>, vector<32x128xbf16>
    %c0_65 = arith.constant 0 : index
    %c0_66 = arith.constant 0 : index
    %207 = vector.load %arg7[%c0_65, %c0_66] : memref<32x128xbf16, #tpu.memory_space<vmem>>, vector<32x128xbf16>
    %c0_67 = arith.constant 0 : index
    %c0_68 = arith.constant 0 : index
    %208 = vector.load %arg8[%c0_67, %c0_68] : memref<1x128xf32, #tpu.memory_space<vmem>>, vector<1x128xf32>
    %209 = arith.truncf %205 : vector<16x32xf32> to vector<16x32xbf16>
    %cst_69 = arith.constant dense<0.000000e+00> : vector<16x128xf32>
    %210 = tpu.matmul %209, %206, %cst_69 {dimension_numbers = #tpu.dot_dimension_numbers<[1], [0], [0], [1], [0, 0, 1, 1], [], []>} : vector<16x32xbf16>, vector<32x128xbf16>, vector<16x128xf32> -> vector<16x128xf32>
    %211 = vector.broadcast %208 : vector<1x128xf32> to vector<16x128xf32>
    %212 = arith.addf %210, %211 : vector<16x128xf32>
    %c1 = arith.constant 1 : index
    %c0_70 = arith.constant 0 : index
    %c0_71 = arith.constant 0 : index
    %213 = vector.load %arg24[%c1, %c0_70, %c0_71] : memref<2x2x32xf32, #tpu.memory_space<vmem>>, vector<1x2x32xf32>
    %214 = vector.shape_cast %213 : vector<1x2x32xf32> to vector<2x32xf32>
    %c1_72 = arith.constant 1 : index
    %c0_73 = arith.constant 0 : index
    %c0_74 = arith.constant 0 : index
    %215 = vector.load %arg25[%c1_72, %c0_73, %c0_74] : memref<2x2x32xf32, #tpu.memory_space<vmem>>, vector<1x2x32xf32>
    %216 = vector.shape_cast %215 : vector<1x2x32xf32> to vector<2x32xf32>
    %217 = vector.extract_strided_slice %212 {offsets = [0, 0], sizes = [2, 128], strides = [1, 1]} : vector<16x128xf32> to vector<2x128xf32>
    %218 = arith.truncf %214 : vector<2x32xf32> to vector<2x32xbf16>
    %cst_75 = arith.constant dense<0.000000e+00> : vector<2x128xf32>
    %219 = tpu.matmul %218, %207, %cst_75 {dimension_numbers = #tpu.dot_dimension_numbers<[1], [0], [0], [1], [0, 0, 1, 1], [], []>} : vector<2x32xbf16>, vector<32x128xbf16>, vector<2x128xf32> -> vector<2x128xf32>
    %220 = arith.addf %217, %219 : vector<2x128xf32>
    %cst_76 = arith.constant -3.000000e+01 : f32
    %221 = vector.broadcast %cst_76 : f32 to vector<2x128xf32>
    %222 = arith.maximumf %220, %221 : vector<2x128xf32>
    %cst_77 = arith.constant 0.000000e+00 : f32
    %223 = vector.broadcast %cst_77 : f32 to vector<2x128xf32>
    %224 = arith.subf %223, %222 : vector<2x128xf32>
    %225 = math.exp %224 : vector<2x128xf32>
    %cst_78 = arith.constant 1.000000e+00 : f32
    %226 = vector.broadcast %cst_78 : f32 to vector<2x128xf32>
    %227 = arith.addf %226, %225 : vector<2x128xf32>
    %228 = tpu.reciprocal %227 {approx = true} : vector<2x128xf32> -> vector<2x128xf32>
    %229 = vector.extract_strided_slice %228 {offsets = [0, 0], sizes = [2, 32], strides = [1, 1]} : vector<2x128xf32> to vector<2x32xf32>
    %230 = vector.extract_strided_slice %228 {offsets = [0, 32], sizes = [2, 32], strides = [1, 1]} : vector<2x128xf32> to vector<2x32xf32>
    %231 = vector.extract_strided_slice %228 {offsets = [0, 96], sizes = [2, 32], strides = [1, 1]} : vector<2x128xf32> to vector<2x32xf32>
    %232 = vector.extract_strided_slice %220 {offsets = [0, 64], sizes = [2, 32], strides = [1, 1]} : vector<2x128xf32> to vector<2x32xf32>
    %233 = math.tanh %232 : vector<2x32xf32>
    %234 = arith.mulf %230, %216 : vector<2x32xf32>
    %235 = arith.mulf %229, %233 : vector<2x32xf32>
    %236 = arith.addf %234, %235 : vector<2x32xf32>
    %237 = math.tanh %236 : vector<2x32xf32>
    %238 = arith.mulf %231, %237 : vector<2x32xf32>
    %c0_79 = arith.constant 0 : index
    %c0_80 = arith.constant 0 : index
    %239 = vector.load %arg28[%c0_79, %c0_80] : memref<16x32xf32, #tpu.memory_space<vmem>>, vector<2x32xf32>
    tpu.vector_store %arg28[%c0_79, %c0_80], %238 {strides = array<i32>} : memref<16x32xf32, #tpu.memory_space<vmem>>, vector<2x32xf32>,
    %240 = vector.extract_strided_slice %212 {offsets = [2, 0], sizes = [2, 128], strides = [1, 1]} : vector<16x128xf32> to vector<2x128xf32>
    %241 = arith.truncf %238 : vector<2x32xf32> to vector<2x32xbf16>
    %cst_81 = arith.constant dense<0.000000e+00> : vector<2x128xf32>
    %242 = tpu.matmul %241, %207, %cst_81 {dimension_numbers = #tpu.dot_dimension_numbers<[1], [0], [0], [1], [0, 0, 1, 1], [], []>} : vector<2x32xbf16>, vector<32x128xbf16>, vector<2x128xf32> -> vector<2x128xf32>
    %243 = arith.addf %240, %242 : vector<2x128xf32>
    %cst_82 = arith.constant -3.000000e+01 : f32
    %244 = vector.broadcast %cst_82 : f32 to vector<2x128xf32>
    %245 = arith.maximumf %243, %244 : vector<2x128xf32>
    %cst_83 = arith.constant 0.000000e+00 : f32
    %246 = vector.broadcast %cst_83 : f32 to vector<2x128xf32>
    %247 = arith.subf %246, %245 : vector<2x128xf32>
    %248 = math.exp %247 : vector<2x128xf32>
    %cst_84 = arith.constant 1.000000e+00 : f32
    %249 = vector.broadcast %cst_84 : f32 to vector<2x128xf32>
    %250 = arith.addf %249, %248 : vector<2x128xf32>
    %251 = tpu.reciprocal %250 {approx = true} : vector<2x128xf32> -> vector<2x128xf32>
    %252 = vector.extract_strided_slice %251 {offsets = [0, 0], sizes = [2, 32], strides = [1, 1]} : vector<2x128xf32> to vector<2x32xf32>
    %253 = vector.extract_strided_slice %251 {offsets = [0, 32], sizes = [2, 32], strides = [1, 1]} : vector<2x128xf32> to vector<2x32xf32>
    %254 = vector.extract_strided_slice %251 {offsets = [0, 96], sizes = [2, 32], strides = [1, 1]} : vector<2x128xf32> to vector<2x32xf32>
    %255 = vector.extract_strided_slice %243 {offsets = [0, 64], sizes = [2, 32], strides = [1, 1]} : vector<2x128xf32> to vector<2x32xf32>
    %256 = math.tanh %255 : vector<2x32xf32>
    %257 = arith.mulf %253, %236 : vector<2x32xf32>
    %258 = arith.mulf %252, %256 : vector<2x32xf32>
    %259 = arith.addf %257, %258 : vector<2x32xf32>
    %260 = math.tanh %259 : vector<2x32xf32>
    %261 = arith.mulf %254, %260 : vector<2x32xf32>
    %c2_85 = arith.constant 2 : index
    %c0_86 = arith.constant 0 : index
    %262 = vector.load %arg28[%c2_85, %c0_86] : memref<16x32xf32, #tpu.memory_space<vmem>>, vector<2x32xf32>
    tpu.vector_store %arg28[%c2_85, %c0_86], %261 {strides = array<i32>} : memref<16x32xf32, #tpu.memory_space<vmem>>, vector<2x32xf32>,
    %263 = vector.extract_strided_slice %212 {offsets = [4, 0], sizes = [2, 128], strides = [1, 1]} : vector<16x128xf32> to vector<2x128xf32>
    %264 = arith.truncf %261 : vector<2x32xf32> to vector<2x32xbf16>
    %cst_87 = arith.constant dense<0.000000e+00> : vector<2x128xf32>
    %265 = tpu.matmul %264, %207, %cst_87 {dimension_numbers = #tpu.dot_dimension_numbers<[1], [0], [0], [1], [0, 0, 1, 1], [], []>} : vector<2x32xbf16>, vector<32x128xbf16>, vector<2x128xf32> -> vector<2x128xf32>
    %266 = arith.addf %263, %265 : vector<2x128xf32>
    %cst_88 = arith.constant -3.000000e+01 : f32
    %267 = vector.broadcast %cst_88 : f32 to vector<2x128xf32>
    %268 = arith.maximumf %266, %267 : vector<2x128xf32>
    %cst_89 = arith.constant 0.000000e+00 : f32
    %269 = vector.broadcast %cst_89 : f32 to vector<2x128xf32>
    %270 = arith.subf %269, %268 : vector<2x128xf32>
    %271 = math.exp %270 : vector<2x128xf32>
    %cst_90 = arith.constant 1.000000e+00 : f32
    %272 = vector.broadcast %cst_90 : f32 to vector<2x128xf32>
    %273 = arith.addf %272, %271 : vector<2x128xf32>
    %274 = tpu.reciprocal %273 {approx = true} : vector<2x128xf32> -> vector<2x128xf32>
    %275 = vector.extract_strided_slice %274 {offsets = [0, 0], sizes = [2, 32], strides = [1, 1]} : vector<2x128xf32> to vector<2x32xf32>
    %276 = vector.extract_strided_slice %274 {offsets = [0, 32], sizes = [2, 32], strides = [1, 1]} : vector<2x128xf32> to vector<2x32xf32>
    %277 = vector.extract_strided_slice %274 {offsets = [0, 96], sizes = [2, 32], strides = [1, 1]} : vector<2x128xf32> to vector<2x32xf32>
    %278 = vector.extract_strided_slice %266 {offsets = [0, 64], sizes = [2, 32], strides = [1, 1]} : vector<2x128xf32> to vector<2x32xf32>
    %279 = math.tanh %278 : vector<2x32xf32>
    %280 = arith.mulf %276, %259 : vector<2x32xf32>
    %281 = arith.mulf %275, %279 : vector<2x32xf32>
    %282 = arith.addf %280, %281 : vector<2x32xf32>
    %283 = math.tanh %282 : vector<2x32xf32>
    %284 = arith.mulf %277, %283 : vector<2x32xf32>
    %c4_91 = arith.constant 4 : index
    %c0_92 = arith.constant 0 : index
    %285 = vector.load %arg28[%c4_91, %c0_92] : memref<16x32xf32, #tpu.memory_space<vmem>>, vector<2x32xf32>
    tpu.vector_store %arg28[%c4_91, %c0_92], %284 {strides = array<i32>} : memref<16x32xf32, #tpu.memory_space<vmem>>, vector<2x32xf32>,
    %286 = vector.extract_strided_slice %212 {offsets = [6, 0], sizes = [2, 128], strides = [1, 1]} : vector<16x128xf32> to vector<2x128xf32>
    %287 = arith.truncf %284 : vector<2x32xf32> to vector<2x32xbf16>
    %cst_93 = arith.constant dense<0.000000e+00> : vector<2x128xf32>
    %288 = tpu.matmul %287, %207, %cst_93 {dimension_numbers = #tpu.dot_dimension_numbers<[1], [0], [0], [1], [0, 0, 1, 1], [], []>} : vector<2x32xbf16>, vector<32x128xbf16>, vector<2x128xf32> -> vector<2x128xf32>
    %289 = arith.addf %286, %288 : vector<2x128xf32>
    %cst_94 = arith.constant -3.000000e+01 : f32
    %290 = vector.broadcast %cst_94 : f32 to vector<2x128xf32>
    %291 = arith.maximumf %289, %290 : vector<2x128xf32>
    %cst_95 = arith.constant 0.000000e+00 : f32
    %292 = vector.broadcast %cst_95 : f32 to vector<2x128xf32>
    %293 = arith.subf %292, %291 : vector<2x128xf32>
    %294 = math.exp %293 : vector<2x128xf32>
    %cst_96 = arith.constant 1.000000e+00 : f32
    %295 = vector.broadcast %cst_96 : f32 to vector<2x128xf32>
    %296 = arith.addf %295, %294 : vector<2x128xf32>
    %297 = tpu.reciprocal %296 {approx = true} : vector<2x128xf32> -> vector<2x128xf32>
    %298 = vector.extract_strided_slice %297 {offsets = [0, 0], sizes = [2, 32], strides = [1, 1]} : vector<2x128xf32> to vector<2x32xf32>
    %299 = vector.extract_strided_slice %297 {offsets = [0, 32], sizes = [2, 32], strides = [1, 1]} : vector<2x128xf32> to vector<2x32xf32>
    %300 = vector.extract_strided_slice %297 {offsets = [0, 96], sizes = [2, 32], strides = [1, 1]} : vector<2x128xf32> to vector<2x32xf32>
    %301 = vector.extract_strided_slice %289 {offsets = [0, 64], sizes = [2, 32], strides = [1, 1]} : vector<2x128xf32> to vector<2x32xf32>
    %302 = math.tanh %301 : vector<2x32xf32>
    %303 = arith.mulf %299, %282 : vector<2x32xf32>
    %304 = arith.mulf %298, %302 : vector<2x32xf32>
    %305 = arith.addf %303, %304 : vector<2x32xf32>
    %306 = math.tanh %305 : vector<2x32xf32>
    %307 = arith.mulf %300, %306 : vector<2x32xf32>
    %c6_97 = arith.constant 6 : index
    %c0_98 = arith.constant 0 : index
    %308 = vector.load %arg28[%c6_97, %c0_98] : memref<16x32xf32, #tpu.memory_space<vmem>>, vector<2x32xf32>
    tpu.vector_store %arg28[%c6_97, %c0_98], %307 {strides = array<i32>} : memref<16x32xf32, #tpu.memory_space<vmem>>, vector<2x32xf32>,
    %309 = vector.extract_strided_slice %212 {offsets = [8, 0], sizes = [2, 128], strides = [1, 1]} : vector<16x128xf32> to vector<2x128xf32>
    %310 = arith.truncf %307 : vector<2x32xf32> to vector<2x32xbf16>
    %cst_99 = arith.constant dense<0.000000e+00> : vector<2x128xf32>
    %311 = tpu.matmul %310, %207, %cst_99 {dimension_numbers = #tpu.dot_dimension_numbers<[1], [0], [0], [1], [0, 0, 1, 1], [], []>} : vector<2x32xbf16>, vector<32x128xbf16>, vector<2x128xf32> -> vector<2x128xf32>
    %312 = arith.addf %309, %311 : vector<2x128xf32>
    %cst_100 = arith.constant -3.000000e+01 : f32
    %313 = vector.broadcast %cst_100 : f32 to vector<2x128xf32>
    %314 = arith.maximumf %312, %313 : vector<2x128xf32>
    %cst_101 = arith.constant 0.000000e+00 : f32
    %315 = vector.broadcast %cst_101 : f32 to vector<2x128xf32>
    %316 = arith.subf %315, %314 : vector<2x128xf32>
    %317 = math.exp %316 : vector<2x128xf32>
    %cst_102 = arith.constant 1.000000e+00 : f32
    %318 = vector.broadcast %cst_102 : f32 to vector<2x128xf32>
    %319 = arith.addf %318, %317 : vector<2x128xf32>
    %320 = tpu.reciprocal %319 {approx = true} : vector<2x128xf32> -> vector<2x128xf32>
    %321 = vector.extract_strided_slice %320 {offsets = [0, 0], sizes = [2, 32], strides = [1, 1]} : vector<2x128xf32> to vector<2x32xf32>
    %322 = vector.extract_strided_slice %320 {offsets = [0, 32], sizes = [2, 32], strides = [1, 1]} : vector<2x128xf32> to vector<2x32xf32>
    %323 = vector.extract_strided_slice %320 {offsets = [0, 96], sizes = [2, 32], strides = [1, 1]} : vector<2x128xf32> to vector<2x32xf32>
    %324 = vector.extract_strided_slice %312 {offsets = [0, 64], sizes = [2, 32], strides = [1, 1]} : vector<2x128xf32> to vector<2x32xf32>
    %325 = math.tanh %324 : vector<2x32xf32>
    %326 = arith.mulf %322, %305 : vector<2x32xf32>
    %327 = arith.mulf %321, %325 : vector<2x32xf32>
    %328 = arith.addf %326, %327 : vector<2x32xf32>
    %329 = math.tanh %328 : vector<2x32xf32>
    %330 = arith.mulf %323, %329 : vector<2x32xf32>
    %c8_103 = arith.constant 8 : index
    %c0_104 = arith.constant 0 : index
    %331 = vector.load %arg28[%c8_103, %c0_104] : memref<16x32xf32, #tpu.memory_space<vmem>>, vector<2x32xf32>
    tpu.vector_store %arg28[%c8_103, %c0_104], %330 {strides = array<i32>} : memref<16x32xf32, #tpu.memory_space<vmem>>, vector<2x32xf32>,
    %332 = vector.extract_strided_slice %212 {offsets = [10, 0], sizes = [2, 128], strides = [1, 1]} : vector<16x128xf32> to vector<2x128xf32>
    %333 = arith.truncf %330 : vector<2x32xf32> to vector<2x32xbf16>
    %cst_105 = arith.constant dense<0.000000e+00> : vector<2x128xf32>
    %334 = tpu.matmul %333, %207, %cst_105 {dimension_numbers = #tpu.dot_dimension_numbers<[1], [0], [0], [1], [0, 0, 1, 1], [], []>} : vector<2x32xbf16>, vector<32x128xbf16>, vector<2x128xf32> -> vector<2x128xf32>
    %335 = arith.addf %332, %334 : vector<2x128xf32>
    %cst_106 = arith.constant -3.000000e+01 : f32
    %336 = vector.broadcast %cst_106 : f32 to vector<2x128xf32>
    %337 = arith.maximumf %335, %336 : vector<2x128xf32>
    %cst_107 = arith.constant 0.000000e+00 : f32
    %338 = vector.broadcast %cst_107 : f32 to vector<2x128xf32>
    %339 = arith.subf %338, %337 : vector<2x128xf32>
    %340 = math.exp %339 : vector<2x128xf32>
    %cst_108 = arith.constant 1.000000e+00 : f32
    %341 = vector.broadcast %cst_108 : f32 to vector<2x128xf32>
    %342 = arith.addf %341, %340 : vector<2x128xf32>
    %343 = tpu.reciprocal %342 {approx = true} : vector<2x128xf32> -> vector<2x128xf32>
    %344 = vector.extract_strided_slice %343 {offsets = [0, 0], sizes = [2, 32], strides = [1, 1]} : vector<2x128xf32> to vector<2x32xf32>
    %345 = vector.extract_strided_slice %343 {offsets = [0, 32], sizes = [2, 32], strides = [1, 1]} : vector<2x128xf32> to vector<2x32xf32>
    %346 = vector.extract_strided_slice %343 {offsets = [0, 96], sizes = [2, 32], strides = [1, 1]} : vector<2x128xf32> to vector<2x32xf32>
    %347 = vector.extract_strided_slice %335 {offsets = [0, 64], sizes = [2, 32], strides = [1, 1]} : vector<2x128xf32> to vector<2x32xf32>
    %348 = math.tanh %347 : vector<2x32xf32>
    %349 = arith.mulf %345, %328 : vector<2x32xf32>
    %350 = arith.mulf %344, %348 : vector<2x32xf32>
    %351 = arith.addf %349, %350 : vector<2x32xf32>
    %352 = math.tanh %351 : vector<2x32xf32>
    %353 = arith.mulf %346, %352 : vector<2x32xf32>
    %c10_109 = arith.constant 10 : index
    %c0_110 = arith.constant 0 : index
    %354 = vector.load %arg28[%c10_109, %c0_110] : memref<16x32xf32, #tpu.memory_space<vmem>>, vector<2x32xf32>
    tpu.vector_store %arg28[%c10_109, %c0_110], %353 {strides = array<i32>} : memref<16x32xf32, #tpu.memory_space<vmem>>, vector<2x32xf32>,
    %355 = vector.extract_strided_slice %212 {offsets = [12, 0], sizes = [2, 128], strides = [1, 1]} : vector<16x128xf32> to vector<2x128xf32>
    %356 = arith.truncf %353 : vector<2x32xf32> to vector<2x32xbf16>
    %cst_111 = arith.constant dense<0.000000e+00> : vector<2x128xf32>
    %357 = tpu.matmul %356, %207, %cst_111 {dimension_numbers = #tpu.dot_dimension_numbers<[1], [0], [0], [1], [0, 0, 1, 1], [], []>} : vector<2x32xbf16>, vector<32x128xbf16>, vector<2x128xf32> -> vector<2x128xf32>
    %358 = arith.addf %355, %357 : vector<2x128xf32>
    %cst_112 = arith.constant -3.000000e+01 : f32
    %359 = vector.broadcast %cst_112 : f32 to vector<2x128xf32>
    %360 = arith.maximumf %358, %359 : vector<2x128xf32>
    %cst_113 = arith.constant 0.000000e+00 : f32
    %361 = vector.broadcast %cst_113 : f32 to vector<2x128xf32>
    %362 = arith.subf %361, %360 : vector<2x128xf32>
    %363 = math.exp %362 : vector<2x128xf32>
    %cst_114 = arith.constant 1.000000e+00 : f32
    %364 = vector.broadcast %cst_114 : f32 to vector<2x128xf32>
    %365 = arith.addf %364, %363 : vector<2x128xf32>
    %366 = tpu.reciprocal %365 {approx = true} : vector<2x128xf32> -> vector<2x128xf32>
    %367 = vector.extract_strided_slice %366 {offsets = [0, 0], sizes = [2, 32], strides = [1, 1]} : vector<2x128xf32> to vector<2x32xf32>
    %368 = vector.extract_strided_slice %366 {offsets = [0, 32], sizes = [2, 32], strides = [1, 1]} : vector<2x128xf32> to vector<2x32xf32>
    %369 = vector.extract_strided_slice %366 {offsets = [0, 96], sizes = [2, 32], strides = [1, 1]} : vector<2x128xf32> to vector<2x32xf32>
    %370 = vector.extract_strided_slice %358 {offsets = [0, 64], sizes = [2, 32], strides = [1, 1]} : vector<2x128xf32> to vector<2x32xf32>
    %371 = math.tanh %370 : vector<2x32xf32>
    %372 = arith.mulf %368, %351 : vector<2x32xf32>
    %373 = arith.mulf %367, %371 : vector<2x32xf32>
    %374 = arith.addf %372, %373 : vector<2x32xf32>
    %375 = math.tanh %374 : vector<2x32xf32>
    %376 = arith.mulf %369, %375 : vector<2x32xf32>
    %c12_115 = arith.constant 12 : index
    %c0_116 = arith.constant 0 : index
    %377 = vector.load %arg28[%c12_115, %c0_116] : memref<16x32xf32, #tpu.memory_space<vmem>>, vector<2x32xf32>
    tpu.vector_store %arg28[%c12_115, %c0_116], %376 {strides = array<i32>} : memref<16x32xf32, #tpu.memory_space<vmem>>, vector<2x32xf32>,
    %378 = vector.extract_strided_slice %212 {offsets = [14, 0], sizes = [2, 128], strides = [1, 1]} : vector<16x128xf32> to vector<2x128xf32>
    %379 = arith.truncf %376 : vector<2x32xf32> to vector<2x32xbf16>
    %cst_117 = arith.constant dense<0.000000e+00> : vector<2x128xf32>
    %380 = tpu.matmul %379, %207, %cst_117 {dimension_numbers = #tpu.dot_dimension_numbers<[1], [0], [0], [1], [0, 0, 1, 1], [], []>} : vector<2x32xbf16>, vector<32x128xbf16>, vector<2x128xf32> -> vector<2x128xf32>
    %381 = arith.addf %378, %380 : vector<2x128xf32>
    %cst_118 = arith.constant -3.000000e+01 : f32
    %382 = vector.broadcast %cst_118 : f32 to vector<2x128xf32>
    %383 = arith.maximumf %381, %382 : vector<2x128xf32>
    %cst_119 = arith.constant 0.000000e+00 : f32
    %384 = vector.broadcast %cst_119 : f32 to vector<2x128xf32>
    %385 = arith.subf %384, %383 : vector<2x128xf32>
    %386 = math.exp %385 : vector<2x128xf32>
    %cst_120 = arith.constant 1.000000e+00 : f32
    %387 = vector.broadcast %cst_120 : f32 to vector<2x128xf32>
    %388 = arith.addf %387, %386 : vector<2x128xf32>
    %389 = tpu.reciprocal %388 {approx = true} : vector<2x128xf32> -> vector<2x128xf32>
    %390 = vector.extract_strided_slice %389 {offsets = [0, 0], sizes = [2, 32], strides = [1, 1]} : vector<2x128xf32> to vector<2x32xf32>
    %391 = vector.extract_strided_slice %389 {offsets = [0, 32], sizes = [2, 32], strides = [1, 1]} : vector<2x128xf32> to vector<2x32xf32>
    %392 = vector.extract_strided_slice %389 {offsets = [0, 96], sizes = [2, 32], strides = [1, 1]} : vector<2x128xf32> to vector<2x32xf32>
    %393 = vector.extract_strided_slice %381 {offsets = [0, 64], sizes = [2, 32], strides = [1, 1]} : vector<2x128xf32> to vector<2x32xf32>
    %394 = math.tanh %393 : vector<2x32xf32>
    %395 = arith.mulf %391, %374 : vector<2x32xf32>
    %396 = arith.mulf %390, %394 : vector<2x32xf32>
    %397 = arith.addf %395, %396 : vector<2x32xf32>
    %398 = math.tanh %397 : vector<2x32xf32>
    %399 = arith.mulf %392, %398 : vector<2x32xf32>
    %c14_121 = arith.constant 14 : index
    %c0_122 = arith.constant 0 : index
    %400 = vector.load %arg28[%c14_121, %c0_122] : memref<16x32xf32, #tpu.memory_space<vmem>>, vector<2x32xf32>
    tpu.vector_store %arg28[%c14_121, %c0_122], %399 {strides = array<i32>} : memref<16x32xf32, #tpu.memory_space<vmem>>, vector<2x32xf32>,
    %c1_123 = arith.constant 1 : index
    %c0_124 = arith.constant 0 : index
    %c0_125 = arith.constant 0 : index
    %401 = vector.load %arg24[%c1_123, %c0_124, %c0_125] : memref<2x2x32xf32, #tpu.memory_space<vmem>>, vector<1x2x32xf32>
    %402 = vector.shape_cast %401 : vector<1x2x32xf32> to vector<2x32xf32>
    %403 = vector.shape_cast %399 : vector<2x32xf32> to vector<1x2x32xf32>
    tpu.vector_store %arg24[%c1_123, %c0_124, %c0_125], %403 {strides = array<i32>} : memref<2x2x32xf32, #tpu.memory_space<vmem>>, vector<1x2x32xf32>,
    %c1_126 = arith.constant 1 : index
    %c0_127 = arith.constant 0 : index
    %c0_128 = arith.constant 0 : index
    %404 = vector.load %arg25[%c1_126, %c0_127, %c0_128] : memref<2x2x32xf32, #tpu.memory_space<vmem>>, vector<1x2x32xf32>
    %405 = vector.shape_cast %404 : vector<1x2x32xf32> to vector<2x32xf32>
    %406 = vector.shape_cast %397 : vector<2x32xf32> to vector<1x2x32xf32>
    tpu.vector_store %arg25[%c1_126, %c0_127, %c0_128], %406 {strides = array<i32>} : memref<2x2x32xf32, #tpu.memory_space<vmem>>, vector<1x2x32xf32>,
    %c0_129 = arith.constant 0 : index
    %c0_130 = arith.constant 0 : index
    %407 = vector.load %arg28[%c0_129, %c0_130] : memref<16x32xf32, #tpu.memory_space<vmem>>, vector<16x32xf32>
    %408 = arith.truncf %407 : vector<16x32xf32> to vector<16x32xbf16>
    %c0_131 = arith.constant 0 : index
    %c0_132 = arith.constant 0 : index
    %409 = vector.load %arg15[%c0_131, %c0_132] : memref<32x32xbf16, #tpu.memory_space<vmem>>, vector<32x32xbf16>
    %cst_133 = arith.constant dense<0.000000e+00> : vector<16x32xf32>
    %410 = tpu.matmul %408, %409, %cst_133 {dimension_numbers = #tpu.dot_dimension_numbers<[1], [0], [0], [1], [0, 0, 1, 1], [], []>} : vector<16x32xbf16>, vector<32x32xbf16>, vector<16x32xf32> -> vector<16x32xf32>
    %c0_134 = arith.constant 0 : index
    %c0_135 = arith.constant 0 : index
    %411 = vector.load %arg16[%c0_134, %c0_135] : memref<1x32xf32, #tpu.memory_space<vmem>>, vector<1x32xf32>
    %412 = vector.broadcast %411 : vector<1x32xf32> to vector<16x32xf32>
    %413 = arith.addf %410, %412 : vector<16x32xf32>
    %414 = vector.extract_strided_slice %413 {offsets = [0, 0], sizes = [16, 16], strides = [1, 1]} : vector<16x32xf32> to vector<16x16xf32>
    %415 = vector.extract_strided_slice %413 {offsets = [0, 16], sizes = [16, 16], strides = [1, 1]} : vector<16x32xf32> to vector<16x16xf32>
    %cst_136 = arith.constant 5.000000e-01 : f32
    %416 = vector.broadcast %cst_136 : f32 to vector<16x16xf32>
    %417 = arith.mulf %416, %415 : vector<16x16xf32>
    %418 = math.exp %417 : vector<16x16xf32>
    %c0_137 = arith.constant 0 : index
    %c0_138 = arith.constant 0 : index
    %419 = vector.load %arg2[%c0_137, %c0_138] : memref<16x16xf32, #tpu.memory_space<vmem>>, vector<16x16xf32>
    %420 = arith.mulf %419, %418 : vector<16x16xf32>
    %421 = arith.addf %420, %414 : vector<16x16xf32>
    %c0_139 = arith.constant 0 : index
    %c0_140 = arith.constant 0 : index
    %422 = vector.load %arg19[%c0_139, %c0_140] : memref<16x16xf32, #tpu.memory_space<vmem>>, vector<16x16xf32>
    tpu.vector_store %arg19[%c0_139, %c0_140], %414 {strides = array<i32>} : memref<16x16xf32, #tpu.memory_space<vmem>>, vector<16x16xf32>,
    %c0_141 = arith.constant 0 : index
    %c0_142 = arith.constant 0 : index
    %423 = vector.load %arg20[%c0_141, %c0_142] : memref<16x16xf32, #tpu.memory_space<vmem>>, vector<16x16xf32>
    tpu.vector_store %arg20[%c0_141, %c0_142], %418 {strides = array<i32>} : memref<16x16xf32, #tpu.memory_space<vmem>>, vector<16x16xf32>,
    %c0_143 = arith.constant 0 : index
    %c0_144 = arith.constant 0 : index
    %424 = vector.load %arg21[%c0_143, %c0_144] : memref<16x16xf32, #tpu.memory_space<vmem>>, vector<16x16xf32>
    tpu.vector_store %arg21[%c0_143, %c0_144], %421 {strides = array<i32>} : memref<16x16xf32, #tpu.memory_space<vmem>>, vector<16x16xf32>,
    %c0_145 = arith.constant 0 : index
    %c0_146 = arith.constant 0 : index
    %425 = vector.load %arg9[%c0_145, %c0_146] : memref<16x128xbf16, #tpu.memory_space<vmem>>, vector<16x128xbf16>
    %c0_147 = arith.constant 0 : index
    %c0_148 = arith.constant 0 : index
    %426 = vector.load %arg10[%c0_147, %c0_148] : memref<32x128xbf16, #tpu.memory_space<vmem>>, vector<32x128xbf16>
    %c0_149 = arith.constant 0 : index
    %c0_150 = arith.constant 0 : index
    %427 = vector.load %arg11[%c0_149, %c0_150] : memref<1x128xf32, #tpu.memory_space<vmem>>, vector<1x128xf32>
    %428 = arith.truncf %421 : vector<16x16xf32> to vector<16x16xbf16>
    %cst_151 = arith.constant dense<0.000000e+00> : vector<16x128xf32>
    %429 = tpu.matmul %428, %425, %cst_151 {dimension_numbers = #tpu.dot_dimension_numbers<[1], [0], [0], [1], [0, 0, 1, 1], [], []>} : vector<16x16xbf16>, vector<16x128xbf16>, vector<16x128xf32> -> vector<16x128xf32>
    %430 = vector.broadcast %427 : vector<1x128xf32> to vector<16x128xf32>
    %431 = arith.addf %429, %430 : vector<16x128xf32>
    %c0_152 = arith.constant 0 : index
    %c0_153 = arith.constant 0 : index
    %c0_154 = arith.constant 0 : index
    %432 = vector.load %arg26[%c0_152, %c0_153, %c0_154] : memref<2x2x32xf32, #tpu.memory_space<vmem>>, vector<1x2x32xf32>
    %433 = vector.shape_cast %432 : vector<1x2x32xf32> to vector<2x32xf32>
    %c0_155 = arith.constant 0 : index
    %c0_156 = arith.constant 0 : index
    %c0_157 = arith.constant 0 : index
    %434 = vector.load %arg27[%c0_155, %c0_156, %c0_157] : memref<2x2x32xf32, #tpu.memory_space<vmem>>, vector<1x2x32xf32>
    %435 = vector.shape_cast %434 : vector<1x2x32xf32> to vector<2x32xf32>
    %436 = vector.extract_strided_slice %431 {offsets = [0, 0], sizes = [2, 128], strides = [1, 1]} : vector<16x128xf32> to vector<2x128xf32>
    %437 = arith.truncf %433 : vector<2x32xf32> to vector<2x32xbf16>
    %cst_158 = arith.constant dense<0.000000e+00> : vector<2x128xf32>
    %438 = tpu.matmul %437, %426, %cst_158 {dimension_numbers = #tpu.dot_dimension_numbers<[1], [0], [0], [1], [0, 0, 1, 1], [], []>} : vector<2x32xbf16>, vector<32x128xbf16>, vector<2x128xf32> -> vector<2x128xf32>
    %439 = arith.addf %436, %438 : vector<2x128xf32>
    %cst_159 = arith.constant -3.000000e+01 : f32
    %440 = vector.broadcast %cst_159 : f32 to vector<2x128xf32>
    %441 = arith.maximumf %439, %440 : vector<2x128xf32>
    %cst_160 = arith.constant 0.000000e+00 : f32
    %442 = vector.broadcast %cst_160 : f32 to vector<2x128xf32>
    %443 = arith.subf %442, %441 : vector<2x128xf32>
    %444 = math.exp %443 : vector<2x128xf32>
    %cst_161 = arith.constant 1.000000e+00 : f32
    %445 = vector.broadcast %cst_161 : f32 to vector<2x128xf32>
    %446 = arith.addf %445, %444 : vector<2x128xf32>
    %447 = tpu.reciprocal %446 {approx = true} : vector<2x128xf32> -> vector<2x128xf32>
    %448 = vector.extract_strided_slice %447 {offsets = [0, 0], sizes = [2, 32], strides = [1, 1]} : vector<2x128xf32> to vector<2x32xf32>
    %449 = vector.extract_strided_slice %447 {offsets = [0, 32], sizes = [2, 32], strides = [1, 1]} : vector<2x128xf32> to vector<2x32xf32>
    %450 = vector.extract_strided_slice %447 {offsets = [0, 96], sizes = [2, 32], strides = [1, 1]} : vector<2x128xf32> to vector<2x32xf32>
    %451 = vector.extract_strided_slice %439 {offsets = [0, 64], sizes = [2, 32], strides = [1, 1]} : vector<2x128xf32> to vector<2x32xf32>
    %452 = math.tanh %451 : vector<2x32xf32>
    %453 = arith.mulf %449, %435 : vector<2x32xf32>
    %454 = arith.mulf %448, %452 : vector<2x32xf32>
    %455 = arith.addf %453, %454 : vector<2x32xf32>
    %456 = math.tanh %455 : vector<2x32xf32>
    %457 = arith.mulf %450, %456 : vector<2x32xf32>
    %c0_162 = arith.constant 0 : index
    %c0_163 = arith.constant 0 : index
    %458 = vector.load %arg28[%c0_162, %c0_163] : memref<16x32xf32, #tpu.memory_space<vmem>>, vector<2x32xf32>
    tpu.vector_store %arg28[%c0_162, %c0_163], %457 {strides = array<i32>} : memref<16x32xf32, #tpu.memory_space<vmem>>, vector<2x32xf32>,
    %459 = vector.extract_strided_slice %431 {offsets = [2, 0], sizes = [2, 128], strides = [1, 1]} : vector<16x128xf32> to vector<2x128xf32>
    %460 = arith.truncf %457 : vector<2x32xf32> to vector<2x32xbf16>
    %cst_164 = arith.constant dense<0.000000e+00> : vector<2x128xf32>
    %461 = tpu.matmul %460, %426, %cst_164 {dimension_numbers = #tpu.dot_dimension_numbers<[1], [0], [0], [1], [0, 0, 1, 1], [], []>} : vector<2x32xbf16>, vector<32x128xbf16>, vector<2x128xf32> -> vector<2x128xf32>
    %462 = arith.addf %459, %461 : vector<2x128xf32>
    %cst_165 = arith.constant -3.000000e+01 : f32
    %463 = vector.broadcast %cst_165 : f32 to vector<2x128xf32>
    %464 = arith.maximumf %462, %463 : vector<2x128xf32>
    %cst_166 = arith.constant 0.000000e+00 : f32
    %465 = vector.broadcast %cst_166 : f32 to vector<2x128xf32>
    %466 = arith.subf %465, %464 : vector<2x128xf32>
    %467 = math.exp %466 : vector<2x128xf32>
    %cst_167 = arith.constant 1.000000e+00 : f32
    %468 = vector.broadcast %cst_167 : f32 to vector<2x128xf32>
    %469 = arith.addf %468, %467 : vector<2x128xf32>
    %470 = tpu.reciprocal %469 {approx = true} : vector<2x128xf32> -> vector<2x128xf32>
    %471 = vector.extract_strided_slice %470 {offsets = [0, 0], sizes = [2, 32], strides = [1, 1]} : vector<2x128xf32> to vector<2x32xf32>
    %472 = vector.extract_strided_slice %470 {offsets = [0, 32], sizes = [2, 32], strides = [1, 1]} : vector<2x128xf32> to vector<2x32xf32>
    %473 = vector.extract_strided_slice %470 {offsets = [0, 96], sizes = [2, 32], strides = [1, 1]} : vector<2x128xf32> to vector<2x32xf32>
    %474 = vector.extract_strided_slice %462 {offsets = [0, 64], sizes = [2, 32], strides = [1, 1]} : vector<2x128xf32> to vector<2x32xf32>
    %475 = math.tanh %474 : vector<2x32xf32>
    %476 = arith.mulf %472, %455 : vector<2x32xf32>
    %477 = arith.mulf %471, %475 : vector<2x32xf32>
    %478 = arith.addf %476, %477 : vector<2x32xf32>
    %479 = math.tanh %478 : vector<2x32xf32>
    %480 = arith.mulf %473, %479 : vector<2x32xf32>
    %c2_168 = arith.constant 2 : index
    %c0_169 = arith.constant 0 : index
    %481 = vector.load %arg28[%c2_168, %c0_169] : memref<16x32xf32, #tpu.memory_space<vmem>>, vector<2x32xf32>
    tpu.vector_store %arg28[%c2_168, %c0_169], %480 {strides = array<i32>} : memref<16x32xf32, #tpu.memory_space<vmem>>, vector<2x32xf32>,
    %482 = vector.extract_strided_slice %431 {offsets = [4, 0], sizes = [2, 128], strides = [1, 1]} : vector<16x128xf32> to vector<2x128xf32>
    %483 = arith.truncf %480 : vector<2x32xf32> to vector<2x32xbf16>
    %cst_170 = arith.constant dense<0.000000e+00> : vector<2x128xf32>
    %484 = tpu.matmul %483, %426, %cst_170 {dimension_numbers = #tpu.dot_dimension_numbers<[1], [0], [0], [1], [0, 0, 1, 1], [], []>} : vector<2x32xbf16>, vector<32x128xbf16>, vector<2x128xf32> -> vector<2x128xf32>
    %485 = arith.addf %482, %484 : vector<2x128xf32>
    %cst_171 = arith.constant -3.000000e+01 : f32
    %486 = vector.broadcast %cst_171 : f32 to vector<2x128xf32>
    %487 = arith.maximumf %485, %486 : vector<2x128xf32>
    %cst_172 = arith.constant 0.000000e+00 : f32
    %488 = vector.broadcast %cst_172 : f32 to vector<2x128xf32>
    %489 = arith.subf %488, %487 : vector<2x128xf32>
    %490 = math.exp %489 : vector<2x128xf32>
    %cst_173 = arith.constant 1.000000e+00 : f32
    %491 = vector.broadcast %cst_173 : f32 to vector<2x128xf32>
    %492 = arith.addf %491, %490 : vector<2x128xf32>
    %493 = tpu.reciprocal %492 {approx = true} : vector<2x128xf32> -> vector<2x128xf32>
    %494 = vector.extract_strided_slice %493 {offsets = [0, 0], sizes = [2, 32], strides = [1, 1]} : vector<2x128xf32> to vector<2x32xf32>
    %495 = vector.extract_strided_slice %493 {offsets = [0, 32], sizes = [2, 32], strides = [1, 1]} : vector<2x128xf32> to vector<2x32xf32>
    %496 = vector.extract_strided_slice %493 {offsets = [0, 96], sizes = [2, 32], strides = [1, 1]} : vector<2x128xf32> to vector<2x32xf32>
    %497 = vector.extract_strided_slice %485 {offsets = [0, 64], sizes = [2, 32], strides = [1, 1]} : vector<2x128xf32> to vector<2x32xf32>
    %498 = math.tanh %497 : vector<2x32xf32>
    %499 = arith.mulf %495, %478 : vector<2x32xf32>
    %500 = arith.mulf %494, %498 : vector<2x32xf32>
    %501 = arith.addf %499, %500 : vector<2x32xf32>
    %502 = math.tanh %501 : vector<2x32xf32>
    %503 = arith.mulf %496, %502 : vector<2x32xf32>
    %c4_174 = arith.constant 4 : index
    %c0_175 = arith.constant 0 : index
    %504 = vector.load %arg28[%c4_174, %c0_175] : memref<16x32xf32, #tpu.memory_space<vmem>>, vector<2x32xf32>
    tpu.vector_store %arg28[%c4_174, %c0_175], %503 {strides = array<i32>} : memref<16x32xf32, #tpu.memory_space<vmem>>, vector<2x32xf32>,
    %505 = vector.extract_strided_slice %431 {offsets = [6, 0], sizes = [2, 128], strides = [1, 1]} : vector<16x128xf32> to vector<2x128xf32>
    %506 = arith.truncf %503 : vector<2x32xf32> to vector<2x32xbf16>
    %cst_176 = arith.constant dense<0.000000e+00> : vector<2x128xf32>
    %507 = tpu.matmul %506, %426, %cst_176 {dimension_numbers = #tpu.dot_dimension_numbers<[1], [0], [0], [1], [0, 0, 1, 1], [], []>} : vector<2x32xbf16>, vector<32x128xbf16>, vector<2x128xf32> -> vector<2x128xf32>
    %508 = arith.addf %505, %507 : vector<2x128xf32>
    %cst_177 = arith.constant -3.000000e+01 : f32
    %509 = vector.broadcast %cst_177 : f32 to vector<2x128xf32>
    %510 = arith.maximumf %508, %509 : vector<2x128xf32>
    %cst_178 = arith.constant 0.000000e+00 : f32
    %511 = vector.broadcast %cst_178 : f32 to vector<2x128xf32>
    %512 = arith.subf %511, %510 : vector<2x128xf32>
    %513 = math.exp %512 : vector<2x128xf32>
    %cst_179 = arith.constant 1.000000e+00 : f32
    %514 = vector.broadcast %cst_179 : f32 to vector<2x128xf32>
    %515 = arith.addf %514, %513 : vector<2x128xf32>
    %516 = tpu.reciprocal %515 {approx = true} : vector<2x128xf32> -> vector<2x128xf32>
    %517 = vector.extract_strided_slice %516 {offsets = [0, 0], sizes = [2, 32], strides = [1, 1]} : vector<2x128xf32> to vector<2x32xf32>
    %518 = vector.extract_strided_slice %516 {offsets = [0, 32], sizes = [2, 32], strides = [1, 1]} : vector<2x128xf32> to vector<2x32xf32>
    %519 = vector.extract_strided_slice %516 {offsets = [0, 96], sizes = [2, 32], strides = [1, 1]} : vector<2x128xf32> to vector<2x32xf32>
    %520 = vector.extract_strided_slice %508 {offsets = [0, 64], sizes = [2, 32], strides = [1, 1]} : vector<2x128xf32> to vector<2x32xf32>
    %521 = math.tanh %520 : vector<2x32xf32>
    %522 = arith.mulf %518, %501 : vector<2x32xf32>
    %523 = arith.mulf %517, %521 : vector<2x32xf32>
    %524 = arith.addf %522, %523 : vector<2x32xf32>
    %525 = math.tanh %524 : vector<2x32xf32>
    %526 = arith.mulf %519, %525 : vector<2x32xf32>
    %c6_180 = arith.constant 6 : index
    %c0_181 = arith.constant 0 : index
    %527 = vector.load %arg28[%c6_180, %c0_181] : memref<16x32xf32, #tpu.memory_space<vmem>>, vector<2x32xf32>
    tpu.vector_store %arg28[%c6_180, %c0_181], %526 {strides = array<i32>} : memref<16x32xf32, #tpu.memory_space<vmem>>, vector<2x32xf32>,
    %528 = vector.extract_strided_slice %431 {offsets = [8, 0], sizes = [2, 128], strides = [1, 1]} : vector<16x128xf32> to vector<2x128xf32>
    %529 = arith.truncf %526 : vector<2x32xf32> to vector<2x32xbf16>
    %cst_182 = arith.constant dense<0.000000e+00> : vector<2x128xf32>
    %530 = tpu.matmul %529, %426, %cst_182 {dimension_numbers = #tpu.dot_dimension_numbers<[1], [0], [0], [1], [0, 0, 1, 1], [], []>} : vector<2x32xbf16>, vector<32x128xbf16>, vector<2x128xf32> -> vector<2x128xf32>
    %531 = arith.addf %528, %530 : vector<2x128xf32>
    %cst_183 = arith.constant -3.000000e+01 : f32
    %532 = vector.broadcast %cst_183 : f32 to vector<2x128xf32>
    %533 = arith.maximumf %531, %532 : vector<2x128xf32>
    %cst_184 = arith.constant 0.000000e+00 : f32
    %534 = vector.broadcast %cst_184 : f32 to vector<2x128xf32>
    %535 = arith.subf %534, %533 : vector<2x128xf32>
    %536 = math.exp %535 : vector<2x128xf32>
    %cst_185 = arith.constant 1.000000e+00 : f32
    %537 = vector.broadcast %cst_185 : f32 to vector<2x128xf32>
    %538 = arith.addf %537, %536 : vector<2x128xf32>
    %539 = tpu.reciprocal %538 {approx = true} : vector<2x128xf32> -> vector<2x128xf32>
    %540 = vector.extract_strided_slice %539 {offsets = [0, 0], sizes = [2, 32], strides = [1, 1]} : vector<2x128xf32> to vector<2x32xf32>
    %541 = vector.extract_strided_slice %539 {offsets = [0, 32], sizes = [2, 32], strides = [1, 1]} : vector<2x128xf32> to vector<2x32xf32>
    %542 = vector.extract_strided_slice %539 {offsets = [0, 96], sizes = [2, 32], strides = [1, 1]} : vector<2x128xf32> to vector<2x32xf32>
    %543 = vector.extract_strided_slice %531 {offsets = [0, 64], sizes = [2, 32], strides = [1, 1]} : vector<2x128xf32> to vector<2x32xf32>
    %544 = math.tanh %543 : vector<2x32xf32>
    %545 = arith.mulf %541, %524 : vector<2x32xf32>
    %546 = arith.mulf %540, %544 : vector<2x32xf32>
    %547 = arith.addf %545, %546 : vector<2x32xf32>
    %548 = math.tanh %547 : vector<2x32xf32>
    %549 = arith.mulf %542, %548 : vector<2x32xf32>
    %c8_186 = arith.constant 8 : index
    %c0_187 = arith.constant 0 : index
    %550 = vector.load %arg28[%c8_186, %c0_187] : memref<16x32xf32, #tpu.memory_space<vmem>>, vector<2x32xf32>
    tpu.vector_store %arg28[%c8_186, %c0_187], %549 {strides = array<i32>} : memref<16x32xf32, #tpu.memory_space<vmem>>, vector<2x32xf32>,
    %551 = vector.extract_strided_slice %431 {offsets = [10, 0], sizes = [2, 128], strides = [1, 1]} : vector<16x128xf32> to vector<2x128xf32>
    %552 = arith.truncf %549 : vector<2x32xf32> to vector<2x32xbf16>
    %cst_188 = arith.constant dense<0.000000e+00> : vector<2x128xf32>
    %553 = tpu.matmul %552, %426, %cst_188 {dimension_numbers = #tpu.dot_dimension_numbers<[1], [0], [0], [1], [0, 0, 1, 1], [], []>} : vector<2x32xbf16>, vector<32x128xbf16>, vector<2x128xf32> -> vector<2x128xf32>
    %554 = arith.addf %551, %553 : vector<2x128xf32>
    %cst_189 = arith.constant -3.000000e+01 : f32
    %555 = vector.broadcast %cst_189 : f32 to vector<2x128xf32>
    %556 = arith.maximumf %554, %555 : vector<2x128xf32>
    %cst_190 = arith.constant 0.000000e+00 : f32
    %557 = vector.broadcast %cst_190 : f32 to vector<2x128xf32>
    %558 = arith.subf %557, %556 : vector<2x128xf32>
    %559 = math.exp %558 : vector<2x128xf32>
    %cst_191 = arith.constant 1.000000e+00 : f32
    %560 = vector.broadcast %cst_191 : f32 to vector<2x128xf32>
    %561 = arith.addf %560, %559 : vector<2x128xf32>
    %562 = tpu.reciprocal %561 {approx = true} : vector<2x128xf32> -> vector<2x128xf32>
    %563 = vector.extract_strided_slice %562 {offsets = [0, 0], sizes = [2, 32], strides = [1, 1]} : vector<2x128xf32> to vector<2x32xf32>
    %564 = vector.extract_strided_slice %562 {offsets = [0, 32], sizes = [2, 32], strides = [1, 1]} : vector<2x128xf32> to vector<2x32xf32>
    %565 = vector.extract_strided_slice %562 {offsets = [0, 96], sizes = [2, 32], strides = [1, 1]} : vector<2x128xf32> to vector<2x32xf32>
    %566 = vector.extract_strided_slice %554 {offsets = [0, 64], sizes = [2, 32], strides = [1, 1]} : vector<2x128xf32> to vector<2x32xf32>
    %567 = math.tanh %566 : vector<2x32xf32>
    %568 = arith.mulf %564, %547 : vector<2x32xf32>
    %569 = arith.mulf %563, %567 : vector<2x32xf32>
    %570 = arith.addf %568, %569 : vector<2x32xf32>
    %571 = math.tanh %570 : vector<2x32xf32>
    %572 = arith.mulf %565, %571 : vector<2x32xf32>
    %c10_192 = arith.constant 10 : index
    %c0_193 = arith.constant 0 : index
    %573 = vector.load %arg28[%c10_192, %c0_193] : memref<16x32xf32, #tpu.memory_space<vmem>>, vector<2x32xf32>
    tpu.vector_store %arg28[%c10_192, %c0_193], %572 {strides = array<i32>} : memref<16x32xf32, #tpu.memory_space<vmem>>, vector<2x32xf32>,
    %574 = vector.extract_strided_slice %431 {offsets = [12, 0], sizes = [2, 128], strides = [1, 1]} : vector<16x128xf32> to vector<2x128xf32>
    %575 = arith.truncf %572 : vector<2x32xf32> to vector<2x32xbf16>
    %cst_194 = arith.constant dense<0.000000e+00> : vector<2x128xf32>
    %576 = tpu.matmul %575, %426, %cst_194 {dimension_numbers = #tpu.dot_dimension_numbers<[1], [0], [0], [1], [0, 0, 1, 1], [], []>} : vector<2x32xbf16>, vector<32x128xbf16>, vector<2x128xf32> -> vector<2x128xf32>
    %577 = arith.addf %574, %576 : vector<2x128xf32>
    %cst_195 = arith.constant -3.000000e+01 : f32
    %578 = vector.broadcast %cst_195 : f32 to vector<2x128xf32>
    %579 = arith.maximumf %577, %578 : vector<2x128xf32>
    %cst_196 = arith.constant 0.000000e+00 : f32
    %580 = vector.broadcast %cst_196 : f32 to vector<2x128xf32>
    %581 = arith.subf %580, %579 : vector<2x128xf32>
    %582 = math.exp %581 : vector<2x128xf32>
    %cst_197 = arith.constant 1.000000e+00 : f32
    %583 = vector.broadcast %cst_197 : f32 to vector<2x128xf32>
    %584 = arith.addf %583, %582 : vector<2x128xf32>
    %585 = tpu.reciprocal %584 {approx = true} : vector<2x128xf32> -> vector<2x128xf32>
    %586 = vector.extract_strided_slice %585 {offsets = [0, 0], sizes = [2, 32], strides = [1, 1]} : vector<2x128xf32> to vector<2x32xf32>
    %587 = vector.extract_strided_slice %585 {offsets = [0, 32], sizes = [2, 32], strides = [1, 1]} : vector<2x128xf32> to vector<2x32xf32>
    %588 = vector.extract_strided_slice %585 {offsets = [0, 96], sizes = [2, 32], strides = [1, 1]} : vector<2x128xf32> to vector<2x32xf32>
    %589 = vector.extract_strided_slice %577 {offsets = [0, 64], sizes = [2, 32], strides = [1, 1]} : vector<2x128xf32> to vector<2x32xf32>
    %590 = math.tanh %589 : vector<2x32xf32>
    %591 = arith.mulf %587, %570 : vector<2x32xf32>
    %592 = arith.mulf %586, %590 : vector<2x32xf32>
    %593 = arith.addf %591, %592 : vector<2x32xf32>
    %594 = math.tanh %593 : vector<2x32xf32>
    %595 = arith.mulf %588, %594 : vector<2x32xf32>
    %c12_198 = arith.constant 12 : index
    %c0_199 = arith.constant 0 : index
    %596 = vector.load %arg28[%c12_198, %c0_199] : memref<16x32xf32, #tpu.memory_space<vmem>>, vector<2x32xf32>
    tpu.vector_store %arg28[%c12_198, %c0_199], %595 {strides = array<i32>} : memref<16x32xf32, #tpu.memory_space<vmem>>, vector<2x32xf32>,
    %597 = vector.extract_strided_slice %431 {offsets = [14, 0], sizes = [2, 128], strides = [1, 1]} : vector<16x128xf32> to vector<2x128xf32>
    %598 = arith.truncf %595 : vector<2x32xf32> to vector<2x32xbf16>
    %cst_200 = arith.constant dense<0.000000e+00> : vector<2x128xf32>
    %599 = tpu.matmul %598, %426, %cst_200 {dimension_numbers = #tpu.dot_dimension_numbers<[1], [0], [0], [1], [0, 0, 1, 1], [], []>} : vector<2x32xbf16>, vector<32x128xbf16>, vector<2x128xf32> -> vector<2x128xf32>
    %600 = arith.addf %597, %599 : vector<2x128xf32>
    %cst_201 = arith.constant -3.000000e+01 : f32
    %601 = vector.broadcast %cst_201 : f32 to vector<2x128xf32>
    %602 = arith.maximumf %600, %601 : vector<2x128xf32>
    %cst_202 = arith.constant 0.000000e+00 : f32
    %603 = vector.broadcast %cst_202 : f32 to vector<2x128xf32>
    %604 = arith.subf %603, %602 : vector<2x128xf32>
    %605 = math.exp %604 : vector<2x128xf32>
    %cst_203 = arith.constant 1.000000e+00 : f32
    %606 = vector.broadcast %cst_203 : f32 to vector<2x128xf32>
    %607 = arith.addf %606, %605 : vector<2x128xf32>
    %608 = tpu.reciprocal %607 {approx = true} : vector<2x128xf32> -> vector<2x128xf32>
    %609 = vector.extract_strided_slice %608 {offsets = [0, 0], sizes = [2, 32], strides = [1, 1]} : vector<2x128xf32> to vector<2x32xf32>
    %610 = vector.extract_strided_slice %608 {offsets = [0, 32], sizes = [2, 32], strides = [1, 1]} : vector<2x128xf32> to vector<2x32xf32>
    %611 = vector.extract_strided_slice %608 {offsets = [0, 96], sizes = [2, 32], strides = [1, 1]} : vector<2x128xf32> to vector<2x32xf32>
    %612 = vector.extract_strided_slice %600 {offsets = [0, 64], sizes = [2, 32], strides = [1, 1]} : vector<2x128xf32> to vector<2x32xf32>
    %613 = math.tanh %612 : vector<2x32xf32>
    %614 = arith.mulf %610, %593 : vector<2x32xf32>
    %615 = arith.mulf %609, %613 : vector<2x32xf32>
    %616 = arith.addf %614, %615 : vector<2x32xf32>
    %617 = math.tanh %616 : vector<2x32xf32>
    %618 = arith.mulf %611, %617 : vector<2x32xf32>
    %c14_204 = arith.constant 14 : index
    %c0_205 = arith.constant 0 : index
    %619 = vector.load %arg28[%c14_204, %c0_205] : memref<16x32xf32, #tpu.memory_space<vmem>>, vector<2x32xf32>
    tpu.vector_store %arg28[%c14_204, %c0_205], %618 {strides = array<i32>} : memref<16x32xf32, #tpu.memory_space<vmem>>, vector<2x32xf32>,
    %c0_206 = arith.constant 0 : index
    %c0_207 = arith.constant 0 : index
    %c0_208 = arith.constant 0 : index
    %620 = vector.load %arg26[%c0_206, %c0_207, %c0_208] : memref<2x2x32xf32, #tpu.memory_space<vmem>>, vector<1x2x32xf32>
    %621 = vector.shape_cast %620 : vector<1x2x32xf32> to vector<2x32xf32>
    %622 = vector.shape_cast %618 : vector<2x32xf32> to vector<1x2x32xf32>
    tpu.vector_store %arg26[%c0_206, %c0_207, %c0_208], %622 {strides = array<i32>} : memref<2x2x32xf32, #tpu.memory_space<vmem>>, vector<1x2x32xf32>,
    %c0_209 = arith.constant 0 : index
    %c0_210 = arith.constant 0 : index
    %c0_211 = arith.constant 0 : index
    %623 = vector.load %arg27[%c0_209, %c0_210, %c0_211] : memref<2x2x32xf32, #tpu.memory_space<vmem>>, vector<1x2x32xf32>
    %624 = vector.shape_cast %623 : vector<1x2x32xf32> to vector<2x32xf32>
    %625 = vector.shape_cast %616 : vector<2x32xf32> to vector<1x2x32xf32>
    tpu.vector_store %arg27[%c0_209, %c0_210, %c0_211], %625 {strides = array<i32>} : memref<2x2x32xf32, #tpu.memory_space<vmem>>, vector<1x2x32xf32>,
    %c0_212 = arith.constant 0 : index
    %c0_213 = arith.constant 0 : index
    %626 = vector.load %arg28[%c0_212, %c0_213] : memref<16x32xf32, #tpu.memory_space<vmem>>, vector<16x32xf32>
    %c0_214 = arith.constant 0 : index
    %c0_215 = arith.constant 0 : index
    %627 = vector.load %arg12[%c0_214, %c0_215] : memref<32x128xbf16, #tpu.memory_space<vmem>>, vector<32x128xbf16>
    %c0_216 = arith.constant 0 : index
    %c0_217 = arith.constant 0 : index
    %628 = vector.load %arg13[%c0_216, %c0_217] : memref<32x128xbf16, #tpu.memory_space<vmem>>, vector<32x128xbf16>
    %c0_218 = arith.constant 0 : index
    %c0_219 = arith.constant 0 : index
    %629 = vector.load %arg14[%c0_218, %c0_219] : memref<1x128xf32, #tpu.memory_space<vmem>>, vector<1x128xf32>
    %630 = arith.truncf %626 : vector<16x32xf32> to vector<16x32xbf16>
    %cst_220 = arith.constant dense<0.000000e+00> : vector<16x128xf32>
    %631 = tpu.matmul %630, %627, %cst_220 {dimension_numbers = #tpu.dot_dimension_numbers<[1], [0], [0], [1], [0, 0, 1, 1], [], []>} : vector<16x32xbf16>, vector<32x128xbf16>, vector<16x128xf32> -> vector<16x128xf32>
    %632 = vector.broadcast %629 : vector<1x128xf32> to vector<16x128xf32>
    %633 = arith.addf %631, %632 : vector<16x128xf32>
    %c1_221 = arith.constant 1 : index
    %c0_222 = arith.constant 0 : index
    %c0_223 = arith.constant 0 : index
    %634 = vector.load %arg26[%c1_221, %c0_222, %c0_223] : memref<2x2x32xf32, #tpu.memory_space<vmem>>, vector<1x2x32xf32>
    %635 = vector.shape_cast %634 : vector<1x2x32xf32> to vector<2x32xf32>
    %c1_224 = arith.constant 1 : index
    %c0_225 = arith.constant 0 : index
    %c0_226 = arith.constant 0 : index
    %636 = vector.load %arg27[%c1_224, %c0_225, %c0_226] : memref<2x2x32xf32, #tpu.memory_space<vmem>>, vector<1x2x32xf32>
    %637 = vector.shape_cast %636 : vector<1x2x32xf32> to vector<2x32xf32>
    %638 = vector.extract_strided_slice %633 {offsets = [0, 0], sizes = [2, 128], strides = [1, 1]} : vector<16x128xf32> to vector<2x128xf32>
    %639 = arith.truncf %635 : vector<2x32xf32> to vector<2x32xbf16>
    %cst_227 = arith.constant dense<0.000000e+00> : vector<2x128xf32>
    %640 = tpu.matmul %639, %628, %cst_227 {dimension_numbers = #tpu.dot_dimension_numbers<[1], [0], [0], [1], [0, 0, 1, 1], [], []>} : vector<2x32xbf16>, vector<32x128xbf16>, vector<2x128xf32> -> vector<2x128xf32>
    %641 = arith.addf %638, %640 : vector<2x128xf32>
    %cst_228 = arith.constant -3.000000e+01 : f32
    %642 = vector.broadcast %cst_228 : f32 to vector<2x128xf32>
    %643 = arith.maximumf %641, %642 : vector<2x128xf32>
    %cst_229 = arith.constant 0.000000e+00 : f32
    %644 = vector.broadcast %cst_229 : f32 to vector<2x128xf32>
    %645 = arith.subf %644, %643 : vector<2x128xf32>
    %646 = math.exp %645 : vector<2x128xf32>
    %cst_230 = arith.constant 1.000000e+00 : f32
    %647 = vector.broadcast %cst_230 : f32 to vector<2x128xf32>
    %648 = arith.addf %647, %646 : vector<2x128xf32>
    %649 = tpu.reciprocal %648 {approx = true} : vector<2x128xf32> -> vector<2x128xf32>
    %650 = vector.extract_strided_slice %649 {offsets = [0, 0], sizes = [2, 32], strides = [1, 1]} : vector<2x128xf32> to vector<2x32xf32>
    %651 = vector.extract_strided_slice %649 {offsets = [0, 32], sizes = [2, 32], strides = [1, 1]} : vector<2x128xf32> to vector<2x32xf32>
    %652 = vector.extract_strided_slice %649 {offsets = [0, 96], sizes = [2, 32], strides = [1, 1]} : vector<2x128xf32> to vector<2x32xf32>
    %653 = vector.extract_strided_slice %641 {offsets = [0, 64], sizes = [2, 32], strides = [1, 1]} : vector<2x128xf32> to vector<2x32xf32>
    %654 = math.tanh %653 : vector<2x32xf32>
    %655 = arith.mulf %651, %637 : vector<2x32xf32>
    %656 = arith.mulf %650, %654 : vector<2x32xf32>
    %657 = arith.addf %655, %656 : vector<2x32xf32>
    %658 = math.tanh %657 : vector<2x32xf32>
    %659 = arith.mulf %652, %658 : vector<2x32xf32>
    %c0_231 = arith.constant 0 : index
    %c0_232 = arith.constant 0 : index
    %660 = vector.load %arg28[%c0_231, %c0_232] : memref<16x32xf32, #tpu.memory_space<vmem>>, vector<2x32xf32>
    tpu.vector_store %arg28[%c0_231, %c0_232], %659 {strides = array<i32>} : memref<16x32xf32, #tpu.memory_space<vmem>>, vector<2x32xf32>,
    %661 = vector.extract_strided_slice %633 {offsets = [2, 0], sizes = [2, 128], strides = [1, 1]} : vector<16x128xf32> to vector<2x128xf32>
    %662 = arith.truncf %659 : vector<2x32xf32> to vector<2x32xbf16>
    %cst_233 = arith.constant dense<0.000000e+00> : vector<2x128xf32>
    %663 = tpu.matmul %662, %628, %cst_233 {dimension_numbers = #tpu.dot_dimension_numbers<[1], [0], [0], [1], [0, 0, 1, 1], [], []>} : vector<2x32xbf16>, vector<32x128xbf16>, vector<2x128xf32> -> vector<2x128xf32>
    %664 = arith.addf %661, %663 : vector<2x128xf32>
    %cst_234 = arith.constant -3.000000e+01 : f32
    %665 = vector.broadcast %cst_234 : f32 to vector<2x128xf32>
    %666 = arith.maximumf %664, %665 : vector<2x128xf32>
    %cst_235 = arith.constant 0.000000e+00 : f32
    %667 = vector.broadcast %cst_235 : f32 to vector<2x128xf32>
    %668 = arith.subf %667, %666 : vector<2x128xf32>
    %669 = math.exp %668 : vector<2x128xf32>
    %cst_236 = arith.constant 1.000000e+00 : f32
    %670 = vector.broadcast %cst_236 : f32 to vector<2x128xf32>
    %671 = arith.addf %670, %669 : vector<2x128xf32>
    %672 = tpu.reciprocal %671 {approx = true} : vector<2x128xf32> -> vector<2x128xf32>
    %673 = vector.extract_strided_slice %672 {offsets = [0, 0], sizes = [2, 32], strides = [1, 1]} : vector<2x128xf32> to vector<2x32xf32>
    %674 = vector.extract_strided_slice %672 {offsets = [0, 32], sizes = [2, 32], strides = [1, 1]} : vector<2x128xf32> to vector<2x32xf32>
    %675 = vector.extract_strided_slice %672 {offsets = [0, 96], sizes = [2, 32], strides = [1, 1]} : vector<2x128xf32> to vector<2x32xf32>
    %676 = vector.extract_strided_slice %664 {offsets = [0, 64], sizes = [2, 32], strides = [1, 1]} : vector<2x128xf32> to vector<2x32xf32>
    %677 = math.tanh %676 : vector<2x32xf32>
    %678 = arith.mulf %674, %657 : vector<2x32xf32>
    %679 = arith.mulf %673, %677 : vector<2x32xf32>
    %680 = arith.addf %678, %679 : vector<2x32xf32>
    %681 = math.tanh %680 : vector<2x32xf32>
    %682 = arith.mulf %675, %681 : vector<2x32xf32>
    %c2_237 = arith.constant 2 : index
    %c0_238 = arith.constant 0 : index
    %683 = vector.load %arg28[%c2_237, %c0_238] : memref<16x32xf32, #tpu.memory_space<vmem>>, vector<2x32xf32>
    tpu.vector_store %arg28[%c2_237, %c0_238], %682 {strides = array<i32>} : memref<16x32xf32, #tpu.memory_space<vmem>>, vector<2x32xf32>,
    %684 = vector.extract_strided_slice %633 {offsets = [4, 0], sizes = [2, 128], strides = [1, 1]} : vector<16x128xf32> to vector<2x128xf32>
    %685 = arith.truncf %682 : vector<2x32xf32> to vector<2x32xbf16>
    %cst_239 = arith.constant dense<0.000000e+00> : vector<2x128xf32>
    %686 = tpu.matmul %685, %628, %cst_239 {dimension_numbers = #tpu.dot_dimension_numbers<[1], [0], [0], [1], [0, 0, 1, 1], [], []>} : vector<2x32xbf16>, vector<32x128xbf16>, vector<2x128xf32> -> vector<2x128xf32>
    %687 = arith.addf %684, %686 : vector<2x128xf32>
    %cst_240 = arith.constant -3.000000e+01 : f32
    %688 = vector.broadcast %cst_240 : f32 to vector<2x128xf32>
    %689 = arith.maximumf %687, %688 : vector<2x128xf32>
    %cst_241 = arith.constant 0.000000e+00 : f32
    %690 = vector.broadcast %cst_241 : f32 to vector<2x128xf32>
    %691 = arith.subf %690, %689 : vector<2x128xf32>
    %692 = math.exp %691 : vector<2x128xf32>
    %cst_242 = arith.constant 1.000000e+00 : f32
    %693 = vector.broadcast %cst_242 : f32 to vector<2x128xf32>
    %694 = arith.addf %693, %692 : vector<2x128xf32>
    %695 = tpu.reciprocal %694 {approx = true} : vector<2x128xf32> -> vector<2x128xf32>
    %696 = vector.extract_strided_slice %695 {offsets = [0, 0], sizes = [2, 32], strides = [1, 1]} : vector<2x128xf32> to vector<2x32xf32>
    %697 = vector.extract_strided_slice %695 {offsets = [0, 32], sizes = [2, 32], strides = [1, 1]} : vector<2x128xf32> to vector<2x32xf32>
    %698 = vector.extract_strided_slice %695 {offsets = [0, 96], sizes = [2, 32], strides = [1, 1]} : vector<2x128xf32> to vector<2x32xf32>
    %699 = vector.extract_strided_slice %687 {offsets = [0, 64], sizes = [2, 32], strides = [1, 1]} : vector<2x128xf32> to vector<2x32xf32>
    %700 = math.tanh %699 : vector<2x32xf32>
    %701 = arith.mulf %697, %680 : vector<2x32xf32>
    %702 = arith.mulf %696, %700 : vector<2x32xf32>
    %703 = arith.addf %701, %702 : vector<2x32xf32>
    %704 = math.tanh %703 : vector<2x32xf32>
    %705 = arith.mulf %698, %704 : vector<2x32xf32>
    %c4_243 = arith.constant 4 : index
    %c0_244 = arith.constant 0 : index
    %706 = vector.load %arg28[%c4_243, %c0_244] : memref<16x32xf32, #tpu.memory_space<vmem>>, vector<2x32xf32>
    tpu.vector_store %arg28[%c4_243, %c0_244], %705 {strides = array<i32>} : memref<16x32xf32, #tpu.memory_space<vmem>>, vector<2x32xf32>,
    %707 = vector.extract_strided_slice %633 {offsets = [6, 0], sizes = [2, 128], strides = [1, 1]} : vector<16x128xf32> to vector<2x128xf32>
    %708 = arith.truncf %705 : vector<2x32xf32> to vector<2x32xbf16>
    %cst_245 = arith.constant dense<0.000000e+00> : vector<2x128xf32>
    %709 = tpu.matmul %708, %628, %cst_245 {dimension_numbers = #tpu.dot_dimension_numbers<[1], [0], [0], [1], [0, 0, 1, 1], [], []>} : vector<2x32xbf16>, vector<32x128xbf16>, vector<2x128xf32> -> vector<2x128xf32>
    %710 = arith.addf %707, %709 : vector<2x128xf32>
    %cst_246 = arith.constant -3.000000e+01 : f32
    %711 = vector.broadcast %cst_246 : f32 to vector<2x128xf32>
    %712 = arith.maximumf %710, %711 : vector<2x128xf32>
    %cst_247 = arith.constant 0.000000e+00 : f32
    %713 = vector.broadcast %cst_247 : f32 to vector<2x128xf32>
    %714 = arith.subf %713, %712 : vector<2x128xf32>
    %715 = math.exp %714 : vector<2x128xf32>
    %cst_248 = arith.constant 1.000000e+00 : f32
    %716 = vector.broadcast %cst_248 : f32 to vector<2x128xf32>
    %717 = arith.addf %716, %715 : vector<2x128xf32>
    %718 = tpu.reciprocal %717 {approx = true} : vector<2x128xf32> -> vector<2x128xf32>
    %719 = vector.extract_strided_slice %718 {offsets = [0, 0], sizes = [2, 32], strides = [1, 1]} : vector<2x128xf32> to vector<2x32xf32>
    %720 = vector.extract_strided_slice %718 {offsets = [0, 32], sizes = [2, 32], strides = [1, 1]} : vector<2x128xf32> to vector<2x32xf32>
    %721 = vector.extract_strided_slice %718 {offsets = [0, 96], sizes = [2, 32], strides = [1, 1]} : vector<2x128xf32> to vector<2x32xf32>
    %722 = vector.extract_strided_slice %710 {offsets = [0, 64], sizes = [2, 32], strides = [1, 1]} : vector<2x128xf32> to vector<2x32xf32>
    %723 = math.tanh %722 : vector<2x32xf32>
    %724 = arith.mulf %720, %703 : vector<2x32xf32>
    %725 = arith.mulf %719, %723 : vector<2x32xf32>
    %726 = arith.addf %724, %725 : vector<2x32xf32>
    %727 = math.tanh %726 : vector<2x32xf32>
    %728 = arith.mulf %721, %727 : vector<2x32xf32>
    %c6_249 = arith.constant 6 : index
    %c0_250 = arith.constant 0 : index
    %729 = vector.load %arg28[%c6_249, %c0_250] : memref<16x32xf32, #tpu.memory_space<vmem>>, vector<2x32xf32>
    tpu.vector_store %arg28[%c6_249, %c0_250], %728 {strides = array<i32>} : memref<16x32xf32, #tpu.memory_space<vmem>>, vector<2x32xf32>,
    %730 = vector.extract_strided_slice %633 {offsets = [8, 0], sizes = [2, 128], strides = [1, 1]} : vector<16x128xf32> to vector<2x128xf32>
    %731 = arith.truncf %728 : vector<2x32xf32> to vector<2x32xbf16>
    %cst_251 = arith.constant dense<0.000000e+00> : vector<2x128xf32>
    %732 = tpu.matmul %731, %628, %cst_251 {dimension_numbers = #tpu.dot_dimension_numbers<[1], [0], [0], [1], [0, 0, 1, 1], [], []>} : vector<2x32xbf16>, vector<32x128xbf16>, vector<2x128xf32> -> vector<2x128xf32>
    %733 = arith.addf %730, %732 : vector<2x128xf32>
    %cst_252 = arith.constant -3.000000e+01 : f32
    %734 = vector.broadcast %cst_252 : f32 to vector<2x128xf32>
    %735 = arith.maximumf %733, %734 : vector<2x128xf32>
    %cst_253 = arith.constant 0.000000e+00 : f32
    %736 = vector.broadcast %cst_253 : f32 to vector<2x128xf32>
    %737 = arith.subf %736, %735 : vector<2x128xf32>
    %738 = math.exp %737 : vector<2x128xf32>
    %cst_254 = arith.constant 1.000000e+00 : f32
    %739 = vector.broadcast %cst_254 : f32 to vector<2x128xf32>
    %740 = arith.addf %739, %738 : vector<2x128xf32>
    %741 = tpu.reciprocal %740 {approx = true} : vector<2x128xf32> -> vector<2x128xf32>
    %742 = vector.extract_strided_slice %741 {offsets = [0, 0], sizes = [2, 32], strides = [1, 1]} : vector<2x128xf32> to vector<2x32xf32>
    %743 = vector.extract_strided_slice %741 {offsets = [0, 32], sizes = [2, 32], strides = [1, 1]} : vector<2x128xf32> to vector<2x32xf32>
    %744 = vector.extract_strided_slice %741 {offsets = [0, 96], sizes = [2, 32], strides = [1, 1]} : vector<2x128xf32> to vector<2x32xf32>
    %745 = vector.extract_strided_slice %733 {offsets = [0, 64], sizes = [2, 32], strides = [1, 1]} : vector<2x128xf32> to vector<2x32xf32>
    %746 = math.tanh %745 : vector<2x32xf32>
    %747 = arith.mulf %743, %726 : vector<2x32xf32>
    %748 = arith.mulf %742, %746 : vector<2x32xf32>
    %749 = arith.addf %747, %748 : vector<2x32xf32>
    %750 = math.tanh %749 : vector<2x32xf32>
    %751 = arith.mulf %744, %750 : vector<2x32xf32>
    %c8_255 = arith.constant 8 : index
    %c0_256 = arith.constant 0 : index
    %752 = vector.load %arg28[%c8_255, %c0_256] : memref<16x32xf32, #tpu.memory_space<vmem>>, vector<2x32xf32>
    tpu.vector_store %arg28[%c8_255, %c0_256], %751 {strides = array<i32>} : memref<16x32xf32, #tpu.memory_space<vmem>>, vector<2x32xf32>,
    %753 = vector.extract_strided_slice %633 {offsets = [10, 0], sizes = [2, 128], strides = [1, 1]} : vector<16x128xf32> to vector<2x128xf32>
    %754 = arith.truncf %751 : vector<2x32xf32> to vector<2x32xbf16>
    %cst_257 = arith.constant dense<0.000000e+00> : vector<2x128xf32>
    %755 = tpu.matmul %754, %628, %cst_257 {dimension_numbers = #tpu.dot_dimension_numbers<[1], [0], [0], [1], [0, 0, 1, 1], [], []>} : vector<2x32xbf16>, vector<32x128xbf16>, vector<2x128xf32> -> vector<2x128xf32>
    %756 = arith.addf %753, %755 : vector<2x128xf32>
    %cst_258 = arith.constant -3.000000e+01 : f32
    %757 = vector.broadcast %cst_258 : f32 to vector<2x128xf32>
    %758 = arith.maximumf %756, %757 : vector<2x128xf32>
    %cst_259 = arith.constant 0.000000e+00 : f32
    %759 = vector.broadcast %cst_259 : f32 to vector<2x128xf32>
    %760 = arith.subf %759, %758 : vector<2x128xf32>
    %761 = math.exp %760 : vector<2x128xf32>
    %cst_260 = arith.constant 1.000000e+00 : f32
    %762 = vector.broadcast %cst_260 : f32 to vector<2x128xf32>
    %763 = arith.addf %762, %761 : vector<2x128xf32>
    %764 = tpu.reciprocal %763 {approx = true} : vector<2x128xf32> -> vector<2x128xf32>
    %765 = vector.extract_strided_slice %764 {offsets = [0, 0], sizes = [2, 32], strides = [1, 1]} : vector<2x128xf32> to vector<2x32xf32>
    %766 = vector.extract_strided_slice %764 {offsets = [0, 32], sizes = [2, 32], strides = [1, 1]} : vector<2x128xf32> to vector<2x32xf32>
    %767 = vector.extract_strided_slice %764 {offsets = [0, 96], sizes = [2, 32], strides = [1, 1]} : vector<2x128xf32> to vector<2x32xf32>
    %768 = vector.extract_strided_slice %756 {offsets = [0, 64], sizes = [2, 32], strides = [1, 1]} : vector<2x128xf32> to vector<2x32xf32>
    %769 = math.tanh %768 : vector<2x32xf32>
    %770 = arith.mulf %766, %749 : vector<2x32xf32>
    %771 = arith.mulf %765, %769 : vector<2x32xf32>
    %772 = arith.addf %770, %771 : vector<2x32xf32>
    %773 = math.tanh %772 : vector<2x32xf32>
    %774 = arith.mulf %767, %773 : vector<2x32xf32>
    %c10_261 = arith.constant 10 : index
    %c0_262 = arith.constant 0 : index
    %775 = vector.load %arg28[%c10_261, %c0_262] : memref<16x32xf32, #tpu.memory_space<vmem>>, vector<2x32xf32>
    tpu.vector_store %arg28[%c10_261, %c0_262], %774 {strides = array<i32>} : memref<16x32xf32, #tpu.memory_space<vmem>>, vector<2x32xf32>,
    %776 = vector.extract_strided_slice %633 {offsets = [12, 0], sizes = [2, 128], strides = [1, 1]} : vector<16x128xf32> to vector<2x128xf32>
    %777 = arith.truncf %774 : vector<2x32xf32> to vector<2x32xbf16>
    %cst_263 = arith.constant dense<0.000000e+00> : vector<2x128xf32>
    %778 = tpu.matmul %777, %628, %cst_263 {dimension_numbers = #tpu.dot_dimension_numbers<[1], [0], [0], [1], [0, 0, 1, 1], [], []>} : vector<2x32xbf16>, vector<32x128xbf16>, vector<2x128xf32> -> vector<2x128xf32>
    %779 = arith.addf %776, %778 : vector<2x128xf32>
    %cst_264 = arith.constant -3.000000e+01 : f32
    %780 = vector.broadcast %cst_264 : f32 to vector<2x128xf32>
    %781 = arith.maximumf %779, %780 : vector<2x128xf32>
    %cst_265 = arith.constant 0.000000e+00 : f32
    %782 = vector.broadcast %cst_265 : f32 to vector<2x128xf32>
    %783 = arith.subf %782, %781 : vector<2x128xf32>
    %784 = math.exp %783 : vector<2x128xf32>
    %cst_266 = arith.constant 1.000000e+00 : f32
    %785 = vector.broadcast %cst_266 : f32 to vector<2x128xf32>
    %786 = arith.addf %785, %784 : vector<2x128xf32>
    %787 = tpu.reciprocal %786 {approx = true} : vector<2x128xf32> -> vector<2x128xf32>
    %788 = vector.extract_strided_slice %787 {offsets = [0, 0], sizes = [2, 32], strides = [1, 1]} : vector<2x128xf32> to vector<2x32xf32>
    %789 = vector.extract_strided_slice %787 {offsets = [0, 32], sizes = [2, 32], strides = [1, 1]} : vector<2x128xf32> to vector<2x32xf32>
    %790 = vector.extract_strided_slice %787 {offsets = [0, 96], sizes = [2, 32], strides = [1, 1]} : vector<2x128xf32> to vector<2x32xf32>
    %791 = vector.extract_strided_slice %779 {offsets = [0, 64], sizes = [2, 32], strides = [1, 1]} : vector<2x128xf32> to vector<2x32xf32>
    %792 = math.tanh %791 : vector<2x32xf32>
    %793 = arith.mulf %789, %772 : vector<2x32xf32>
    %794 = arith.mulf %788, %792 : vector<2x32xf32>
    %795 = arith.addf %793, %794 : vector<2x32xf32>
    %796 = math.tanh %795 : vector<2x32xf32>
    %797 = arith.mulf %790, %796 : vector<2x32xf32>
    %c12_267 = arith.constant 12 : index
    %c0_268 = arith.constant 0 : index
    %798 = vector.load %arg28[%c12_267, %c0_268] : memref<16x32xf32, #tpu.memory_space<vmem>>, vector<2x32xf32>
    tpu.vector_store %arg28[%c12_267, %c0_268], %797 {strides = array<i32>} : memref<16x32xf32, #tpu.memory_space<vmem>>, vector<2x32xf32>,
    %799 = vector.extract_strided_slice %633 {offsets = [14, 0], sizes = [2, 128], strides = [1, 1]} : vector<16x128xf32> to vector<2x128xf32>
    %800 = arith.truncf %797 : vector<2x32xf32> to vector<2x32xbf16>
    %cst_269 = arith.constant dense<0.000000e+00> : vector<2x128xf32>
    %801 = tpu.matmul %800, %628, %cst_269 {dimension_numbers = #tpu.dot_dimension_numbers<[1], [0], [0], [1], [0, 0, 1, 1], [], []>} : vector<2x32xbf16>, vector<32x128xbf16>, vector<2x128xf32> -> vector<2x128xf32>
    %802 = arith.addf %799, %801 : vector<2x128xf32>
    %cst_270 = arith.constant -3.000000e+01 : f32
    %803 = vector.broadcast %cst_270 : f32 to vector<2x128xf32>
    %804 = arith.maximumf %802, %803 : vector<2x128xf32>
    %cst_271 = arith.constant 0.000000e+00 : f32
    %805 = vector.broadcast %cst_271 : f32 to vector<2x128xf32>
    %806 = arith.subf %805, %804 : vector<2x128xf32>
    %807 = math.exp %806 : vector<2x128xf32>
    %cst_272 = arith.constant 1.000000e+00 : f32
    %808 = vector.broadcast %cst_272 : f32 to vector<2x128xf32>
    %809 = arith.addf %808, %807 : vector<2x128xf32>
    %810 = tpu.reciprocal %809 {approx = true} : vector<2x128xf32> -> vector<2x128xf32>
    %811 = vector.extract_strided_slice %810 {offsets = [0, 0], sizes = [2, 32], strides = [1, 1]} : vector<2x128xf32> to vector<2x32xf32>
    %812 = vector.extract_strided_slice %810 {offsets = [0, 32], sizes = [2, 32], strides = [1, 1]} : vector<2x128xf32> to vector<2x32xf32>
    %813 = vector.extract_strided_slice %810 {offsets = [0, 96], sizes = [2, 32], strides = [1, 1]} : vector<2x128xf32> to vector<2x32xf32>
    %814 = vector.extract_strided_slice %802 {offsets = [0, 64], sizes = [2, 32], strides = [1, 1]} : vector<2x128xf32> to vector<2x32xf32>
    %815 = math.tanh %814 : vector<2x32xf32>
    %816 = arith.mulf %812, %795 : vector<2x32xf32>
    %817 = arith.mulf %811, %815 : vector<2x32xf32>
    %818 = arith.addf %816, %817 : vector<2x32xf32>
    %819 = math.tanh %818 : vector<2x32xf32>
    %820 = arith.mulf %813, %819 : vector<2x32xf32>
    %c14_273 = arith.constant 14 : index
    %c0_274 = arith.constant 0 : index
    %821 = vector.load %arg28[%c14_273, %c0_274] : memref<16x32xf32, #tpu.memory_space<vmem>>, vector<2x32xf32>
    tpu.vector_store %arg28[%c14_273, %c0_274], %820 {strides = array<i32>} : memref<16x32xf32, #tpu.memory_space<vmem>>, vector<2x32xf32>,
    %c1_275 = arith.constant 1 : index
    %c0_276 = arith.constant 0 : index
    %c0_277 = arith.constant 0 : index
    %822 = vector.load %arg26[%c1_275, %c0_276, %c0_277] : memref<2x2x32xf32, #tpu.memory_space<vmem>>, vector<1x2x32xf32>
    %823 = vector.shape_cast %822 : vector<1x2x32xf32> to vector<2x32xf32>
    %824 = vector.shape_cast %820 : vector<2x32xf32> to vector<1x2x32xf32>
    tpu.vector_store %arg26[%c1_275, %c0_276, %c0_277], %824 {strides = array<i32>} : memref<2x2x32xf32, #tpu.memory_space<vmem>>, vector<1x2x32xf32>,
    %c1_278 = arith.constant 1 : index
    %c0_279 = arith.constant 0 : index
    %c0_280 = arith.constant 0 : index
    %825 = vector.load %arg27[%c1_278, %c0_279, %c0_280] : memref<2x2x32xf32, #tpu.memory_space<vmem>>, vector<1x2x32xf32>
    %826 = vector.shape_cast %825 : vector<1x2x32xf32> to vector<2x32xf32>
    %827 = vector.shape_cast %818 : vector<2x32xf32> to vector<1x2x32xf32>
    tpu.vector_store %arg27[%c1_278, %c0_279, %c0_280], %827 {strides = array<i32>} : memref<2x2x32xf32, #tpu.memory_space<vmem>>, vector<1x2x32xf32>,
    %c0_281 = arith.constant 0 : index
    %c0_282 = arith.constant 0 : index
    %828 = vector.load %arg28[%c0_281, %c0_282] : memref<16x32xf32, #tpu.memory_space<vmem>>, vector<16x32xf32>
    %829 = arith.truncf %828 : vector<16x32xf32> to vector<16x32xbf16>
    %c0_283 = arith.constant 0 : index
    %c0_284 = arith.constant 0 : index
    %830 = vector.load %arg17[%c0_283, %c0_284] : memref<32x8xbf16, #tpu.memory_space<vmem>>, vector<32x8xbf16>
    %cst_285 = arith.constant dense<0.000000e+00> : vector<16x8xf32>
    %831 = tpu.matmul %829, %830, %cst_285 {dimension_numbers = #tpu.dot_dimension_numbers<[1], [0], [0], [1], [0, 0, 1, 1], [], []>} : vector<16x32xbf16>, vector<32x8xbf16>, vector<16x8xf32> -> vector<16x8xf32>
    %c0_286 = arith.constant 0 : index
    %c0_287 = arith.constant 0 : index
    %832 = vector.load %arg18[%c0_286, %c0_287] : memref<1x8xf32, #tpu.memory_space<vmem>>, vector<1x8xf32>
    %833 = vector.broadcast %832 : vector<1x8xf32> to vector<16x8xf32>
    %834 = arith.addf %831, %833 : vector<16x8xf32>
    %835 = vector.extract_strided_slice %834 {offsets = [0, 0], sizes = [16, 4], strides = [1, 1]} : vector<16x8xf32> to vector<16x4xf32>
    %c0_288 = arith.constant 0 : index
    %c0_289 = arith.constant 0 : index
    %836 = vector.load %arg22[%c0_288, %c0_289] : memref<16x4xf32, #tpu.memory_space<vmem>>, vector<16x4xf32>
    tpu.vector_store %arg22[%c0_288, %c0_289], %835 {strides = array<i32>} : memref<16x4xf32, #tpu.memory_space<vmem>>, vector<16x4xf32>,
    %837 = vector.extract_strided_slice %834 {offsets = [0, 4], sizes = [16, 4], strides = [1, 1]} : vector<16x8xf32> to vector<16x4xf32>
    %cst_290 = arith.constant 0.000000e+00 : f32
    %838 = vector.broadcast %cst_290 : f32 to vector<16x4xf32>
    %839 = arith.maximumf %837, %838 : vector<16x4xf32>
    %840 = math.absf %837 : vector<16x4xf32>
    %cst_291 = arith.constant 0.000000e+00 : f32
    %841 = vector.broadcast %cst_291 : f32 to vector<16x4xf32>
    %842 = arith.subf %841, %840 : vector<16x4xf32>
    %843 = math.exp %842 : vector<16x4xf32>
    %cst_292 = arith.constant 1.000000e+00 : f32
    %844 = vector.broadcast %cst_292 : f32 to vector<16x4xf32>
    %845 = arith.addf %844, %843 : vector<16x4xf32>
    %846 = math.log %845 : vector<16x4xf32>
    %847 = arith.addf %839, %846 : vector<16x4xf32>
    %c0_293 = arith.constant 0 : index
    %c0_294 = arith.constant 0 : index
    %848 = vector.load %arg23[%c0_293, %c0_294] : memref<16x4xf32, #tpu.memory_space<vmem>>, vector<16x4xf32>
    tpu.vector_store %arg23[%c0_293, %c0_294], %847 {strides = array<i32>} : memref<16x4xf32, #tpu.memory_space<vmem>>, vector<16x4xf32>,
    return
  }
  func.func @transform_0(%arg0: i32) -> (i32, i32) {
    %c0_i32 = arith.constant 0 : i32
    %c0_i32_0 = arith.constant 0 : i32
    return %arg0, %c0_i32 : i32, i32
  }
  func.func @transform_1(%arg0: i32) -> (i32, i32) {
    %c0_i32 = arith.constant 0 : i32
    %c0_i32_0 = arith.constant 0 : i32
    return %arg0, %c0_i32 : i32, i32
  }
  func.func @transform_2(%arg0: i32) -> (i32, i32) {
    %c0_i32 = arith.constant 0 : i32
    %c0_i32_0 = arith.constant 0 : i32
    %c0_i32_1 = arith.constant 0 : i32
    return %c0_i32, %c0_i32_0 : i32, i32
  }
  func.func @transform_3(%arg0: i32) -> (i32, i32) {
    %c0_i32 = arith.constant 0 : i32
    %c0_i32_0 = arith.constant 0 : i32
    %c0_i32_1 = arith.constant 0 : i32
    return %c0_i32, %c0_i32_0 : i32, i32
  }
  func.func @transform_4(%arg0: i32) -> (i32, i32) {
    %c0_i32 = arith.constant 0 : i32
    %c0_i32_0 = arith.constant 0 : i32
    %c0_i32_1 = arith.constant 0 : i32
    return %c0_i32, %c0_i32_0 : i32, i32
  }
  func.func @transform_5(%arg0: i32) -> (i32, i32) {
    %c0_i32 = arith.constant 0 : i32
    %c0_i32_0 = arith.constant 0 : i32
    %c0_i32_1 = arith.constant 0 : i32
    return %c0_i32, %c0_i32_0 : i32, i32
  }
  func.func @transform_6(%arg0: i32) -> (i32, i32) {
    %c0_i32 = arith.constant 0 : i32
    %c0_i32_0 = arith.constant 0 : i32
    %c0_i32_1 = arith.constant 0 : i32
    return %c0_i32, %c0_i32_0 : i32, i32
  }
  func.func @transform_7(%arg0: i32) -> (i32, i32) {
    %c0_i32 = arith.constant 0 : i32
    %c0_i32_0 = arith.constant 0 : i32
    %c0_i32_1 = arith.constant 0 : i32
    return %c0_i32, %c0_i32_0 : i32, i32
  }
  func.func @transform_8(%arg0: i32) -> (i32, i32) {
    %c0_i32 = arith.constant 0 : i32
    %c0_i32_0 = arith.constant 0 : i32
    %c0_i32_1 = arith.constant 0 : i32
    return %c0_i32, %c0_i32_0 : i32, i32
  }
  func.func @transform_9(%arg0: i32) -> (i32, i32) {
    %c0_i32 = arith.constant 0 : i32
    %c0_i32_0 = arith.constant 0 : i32
    %c0_i32_1 = arith.constant 0 : i32
    return %c0_i32, %c0_i32_0 : i32, i32
  }
  func.func @transform_10(%arg0: i32) -> (i32, i32) {
    %c0_i32 = arith.constant 0 : i32
    %c0_i32_0 = arith.constant 0 : i32
    %c0_i32_1 = arith.constant 0 : i32
    return %c0_i32, %c0_i32_0 : i32, i32
  }
  func.func @transform_11(%arg0: i32) -> (i32, i32) {
    %c0_i32 = arith.constant 0 : i32
    %c0_i32_0 = arith.constant 0 : i32
    %c0_i32_1 = arith.constant 0 : i32
    return %c0_i32, %c0_i32_0 : i32, i32
  }
  func.func @transform_12(%arg0: i32) -> (i32, i32) {
    %c0_i32 = arith.constant 0 : i32
    %c0_i32_0 = arith.constant 0 : i32
    %c0_i32_1 = arith.constant 0 : i32
    return %c0_i32, %c0_i32_0 : i32, i32
  }
  func.func @transform_13(%arg0: i32) -> (i32, i32) {
    %c0_i32 = arith.constant 0 : i32
    %c0_i32_0 = arith.constant 0 : i32
    %c0_i32_1 = arith.constant 0 : i32
    return %c0_i32, %c0_i32_0 : i32, i32
  }
  func.func @transform_14(%arg0: i32) -> (i32, i32) {
    %c0_i32 = arith.constant 0 : i32
    %c0_i32_0 = arith.constant 0 : i32
    %c0_i32_1 = arith.constant 0 : i32
    return %c0_i32, %c0_i32_0 : i32, i32
  }
  func.func @transform_15(%arg0: i32) -> (i32, i32) {
    %c0_i32 = arith.constant 0 : i32
    %c0_i32_0 = arith.constant 0 : i32
    %c0_i32_1 = arith.constant 0 : i32
    return %c0_i32, %c0_i32_0 : i32, i32
  }
  func.func @transform_16(%arg0: i32) -> (i32, i32) {
    %c0_i32 = arith.constant 0 : i32
    %c0_i32_0 = arith.constant 0 : i32
    %c0_i32_1 = arith.constant 0 : i32
    return %c0_i32, %c0_i32_0 : i32, i32
  }
  func.func @transform_17(%arg0: i32) -> (i32, i32) {
    %c0_i32 = arith.constant 0 : i32
    %c0_i32_0 = arith.constant 0 : i32
    %c0_i32_1 = arith.constant 0 : i32
    return %c0_i32, %c0_i32_0 : i32, i32
  }
  func.func @transform_18(%arg0: i32) -> (i32, i32) {
    %c0_i32 = arith.constant 0 : i32
    %c0_i32_0 = arith.constant 0 : i32
    return %arg0, %c0_i32 : i32, i32
  }
  func.func @transform_19(%arg0: i32) -> (i32, i32) {
    %c0_i32 = arith.constant 0 : i32
    %c0_i32_0 = arith.constant 0 : i32
    return %arg0, %c0_i32 : i32, i32
  }
  func.func @transform_20(%arg0: i32) -> (i32, i32) {
    %c0_i32 = arith.constant 0 : i32
    %c0_i32_0 = arith.constant 0 : i32
    return %arg0, %c0_i32 : i32, i32
  }
  func.func @transform_21(%arg0: i32) -> (i32, i32) {
    %c0_i32 = arith.constant 0 : i32
    %c0_i32_0 = arith.constant 0 : i32
    return %arg0, %c0_i32 : i32, i32
  }
  func.func @transform_22(%arg0: i32) -> (i32, i32) {
    %c0_i32 = arith.constant 0 : i32
    %c0_i32_0 = arith.constant 0 : i32
    return %arg0, %c0_i32 : i32, i32
  }
}

</mosaic_0001>

<llo_original>
// kernel: lstmvae_forward.1
$region0: #{lstmvae_forward.1}
  #allocation0 [shape = 'u32[]', space=smem, size = 0x4, offset = 0x4, fixed_abs, tag = 'smem constant byte address 0x4 - core index']
  #allocation1 [shape = 'u32[144,128]{1,0:T(1,128)}', space=vmem, size = 0x12000, scoped, tag = 'internal scratch']
  #allocation2 [shape = 'f32[2,2,32]{2,1,0:T(2,128)}', space=vmem, size = 0x800, scoped, tag = 'scratch operand']
  #allocation3 [shape = 'f32[2,2,32]{2,1,0:T(2,128)}', space=vmem, size = 0x800, scoped, tag = 'scratch operand']
  #allocation4 [shape = 'f32[2,2,32]{2,1,0:T(2,128)}', space=vmem, size = 0x800, scoped, tag = 'scratch operand']
  #allocation5 [shape = 'f32[2,2,32]{2,1,0:T(2,128)}', space=vmem, size = 0x800, scoped, tag = 'scratch operand']
  #allocation6 [shape = 'f32[16,32]{1,0:T(8,128)}', space=vmem, size = 0x2000, scoped, tag = 'scratch operand']
  %s0 = inlined_call_operand.vmem [shape: f32[16,4], index: 0, kind: input, shape index: {}]
  %s1 = inlined_call_operand.hbm [shape: f32[16,16], index: 1, kind: input, shape index: {}]
  %s2 = inlined_call_operand.hbm [shape: bf16[4,128], index: 2, kind: input, shape index: {}]
  %s3 = inlined_call_operand.hbm [shape: bf16[32,128], index: 3, kind: input, shape index: {}]
  %s4 = inlined_call_operand.hbm [shape: f32[1,128], index: 4, kind: input, shape index: {}]
  %s5 = inlined_call_operand.hbm [shape: bf16[32,128], index: 5, kind: input, shape index: {}]
  %s6 = inlined_call_operand.vmem [shape: bf16[32,128], index: 6, kind: input, shape index: {}]
  %s7 = inlined_call_operand.hbm [shape: f32[1,128], index: 7, kind: input, shape index: {}]
  %s8 = inlined_call_operand.vmem [shape: bf16[16,128], index: 8, kind: input, shape index: {}]
  %s9 = inlined_call_operand.vmem [shape: bf16[32,128], index: 9, kind: input, shape index: {}]
  %s10 = inlined_call_operand.hbm [shape: f32[1,128], index: 10, kind: input, shape index: {}]
  %s11 = inlined_call_operand.vmem [shape: bf16[32,128], index: 11, kind: input, shape index: {}]
  %s12 = inlined_call_operand.vmem [shape: bf16[32,128], index: 12, kind: input, shape index: {}]
  %s13 = inlined_call_operand.vmem [shape: f32[1,128], index: 13, kind: input, shape index: {}]
  %s14 = inlined_call_operand.vmem [shape: bf16[32,32], index: 14, kind: input, shape index: {}]
  %s15 = inlined_call_operand.vmem [shape: f32[1,32], index: 15, kind: input, shape index: {}]
  %s16 = inlined_call_operand.vmem [shape: bf16[32,8], index: 16, kind: input, shape index: {}]
  %s17 = inlined_call_operand.vmem [shape: f32[1,8], index: 17, kind: input, shape index: {}]
  %s18 = inlined_call_operand.hbm [shape: f32[16,16], index: 18, kind: output, shape index: {0}]
  %s19 = inlined_call_operand.hbm [shape: f32[16,16], index: 19, kind: output, shape index: {1}]
  %s20 = inlined_call_operand.hbm [shape: f32[16,16], index: 20, kind: output, shape index: {2}]
  %s21 = inlined_call_operand.vmem [shape: f32[16,4], index: 21, kind: output, shape index: {3}]
  %s22 = inlined_call_operand.vmem [shape: f32[16,4], index: 22, kind: output, shape index: {4}]
  %23 = xla_tuple %s18, %s19, %s20, %s21, %s22
  %s24 = sld [smem:[#allocation0]]
  $region146: #{lstmvae_forward.1} parent=0
    _
  %s26 = ssub.s32 1, %s24
  %s27 = scalar_select 0, %s26, %s24
  $region1: #{lstmvae_forward.1} parent=0
    #allocation7 [shape = 'u8[8192]{0}', space=vmem, size = 0x2000, scoped, tag = 'input window, operand 1, single buffered']
    #allocation8 [shape = 's32[1]{0}', space=sflag, size = 0x4, scoped, tag = 'scoped memory for lstmvae_forward.1']
    #allocation9 [shape = 's32[1]{0}', space=sflag, size = 0x4, scoped, tag = 'scoped memory for lstmvae_forward.1']
    #allocation10 [shape = 'u8[1024]{0}', space=vmem, size = 0x400, scoped, tag = 'input window, operand 2, single buffered']
    #allocation11 [shape = 's32[1]{0}', space=sflag, size = 0x4, scoped, tag = 'scoped memory for lstmvae_forward.1']
    #allocation12 [shape = 'u8[8192]{0}', space=vmem, size = 0x2000, scoped, tag = 'input window, operand 3, single buffered']
    #allocation13 [shape = 'u8[512]{0}', space=vmem, size = 0x400, scoped, tag = 'input window, operand 4, single buffered']
    #allocation14 [shape = 's32[1]{0}', space=sflag, size = 0x4, scoped, tag = 'scoped memory for lstmvae_forward.1']
    #allocation15 [shape = 'u8[8192]{0}', space=vmem, size = 0x2000, scoped, tag = 'input window, operand 5, single buffered']
    #allocation16 [shape = 'u8[512]{0}', space=vmem, size = 0x400, scoped, tag = 'input window, operand 7, single buffered']
    #allocation17 [shape = 's32[1]{0}', space=sflag, size = 0x4, scoped, tag = 'scoped memory for lstmvae_forward.1']
    #allocation18 [shape = 'u8[512]{0}', space=vmem, size = 0x400, scoped, tag = 'input window, operand 10, single buffered']
    #allocation19 [shape = 'u8[8192]{0}', space=vmem, size = 0x2000, scoped, tag = 'output window, operand 0, single buffered']
    #allocation20 [shape = 'u8[8192]{0}', space=vmem, size = 0x2000, scoped, tag = 'output window, operand 1, single buffered']
    #allocation21 [shape = 's32[1]{0}', space=sflag, size = 0x4, scoped, tag = 'scoped memory for lstmvae_forward.1']
    #allocation22 [shape = 'u8[8192]{0}', space=vmem, size = 0x2000, scoped, tag = 'output window, operand 2, single buffered']
    %28 = vsyncpa [#allocation8], 0
    %29 = vsyncpa [#allocation11], 0
    %30 = vsyncpa [#allocation14], 0
    %31 = vsyncpa [#allocation17], 0
    %32 = vsyncpa [#allocation9], 0
    %33 = vsyncpa [#allocation21], 0
    // Predicated region
    $region2: #{lstmvae_forward.1} parent=1 // pred_check
      _
    $region3: #{lstmvae_forward.1} parent=1 // pred_check_branch
      %35 = sbr.rel (0) target = $region5
    $region4: #{lstmvae_forward.1} parent=1 // pred_region
      _
    $region5: #{lstmvae_forward.1} parent=1 // pred_fallthru
      _
    // Predicated region
    $region6: #{lstmvae_forward.1} parent=1 // pred_check
      _
    $region7: #{lstmvae_forward.1} parent=1 // pred_check_branch
      %37 = sbr.rel (0) target = $region9
    $region8: #{lstmvae_forward.1} parent=1 // pred_region
      %s39 = ssub.s32 256, 256
      %40 = vsyncadd [#allocation8], %s39
      %s41 = sshll.u32 [#allocation7], 4
      %s42 = int_to_ptr.vmem [resolvable:$true] %s41
      %47 = dma.hbm_to_vmem [thread:$0]  %s1, 256, %s42, [#allocation8], 128, 128, 8
    $region9: #{lstmvae_forward.1} parent=1 // pred_fallthru
      _
    // Predicated region
    $region10: #{lstmvae_forward.1} parent=1 // pred_check
      _
    $region11: #{lstmvae_forward.1} parent=1 // pred_check_branch
      %49 = sbr.rel (0) target = $region13
    $region12: #{lstmvae_forward.1} parent=1 // pred_region
      %s51 = ssub.s32 32, 32
      %52 = vsyncadd [#allocation11], %s51
      %s54 = sshll.u32 [#allocation10], 4
      %s55 = int_to_ptr.vmem [resolvable:$true] %s54
      %57 = dma.hbm_to_vmem [thread:$0]  %s2, 32, %s55, [#allocation11]
    $region13: #{lstmvae_forward.1} parent=1 // pred_fallthru
      _
    // Predicated region
    $region14: #{lstmvae_forward.1} parent=1 // pred_check
      _
    $region15: #{lstmvae_forward.1} parent=1 // pred_check_branch
      %59 = sbr.rel (0) target = $region17
    $region16: #{lstmvae_forward.1} parent=1 // pred_region
      %s61 = ssub.s32 256, 256
      %62 = vsyncadd [#allocation11], %s61
      %s63 = sshll.u32 [#allocation12], 4
      %s64 = int_to_ptr.vmem [resolvable:$true] %s63
      %69 = dma.hbm_to_vmem [thread:$0]  %s3, 256, %s64, [#allocation11], 64, 64, 4
    $region17: #{lstmvae_forward.1} parent=1 // pred_fallthru
      _
    // Predicated region
    $region18: #{lstmvae_forward.1} parent=1 // pred_check
      _
    $region19: #{lstmvae_forward.1} parent=1 // pred_check_branch
      %71 = sbr.rel (0) target = $region21
    $region20: #{lstmvae_forward.1} parent=1 // pred_region
      %s73 = ssub.s32 16, 16
      %74 = vsyncadd [#allocation14], %s73
      %s76 = sshll.u32 [#allocation13], 4
      %s77 = int_to_ptr.vmem [resolvable:$true] %s76
      %79 = dma.hbm_to_vmem [thread:$0]  %s4, 16, %s77, [#allocation14]
    $region21: #{lstmvae_forward.1} parent=1 // pred_fallthru
      _
    // Predicated region
    $region22: #{lstmvae_forward.1} parent=1 // pred_check
      _
    $region23: #{lstmvae_forward.1} parent=1 // pred_check_branch
      %81 = sbr.rel (0) target = $region25
    $region24: #{lstmvae_forward.1} parent=1 // pred_region
      %s83 = ssub.s32 256, 256
      %84 = vsyncadd [#allocation14], %s83
      %s85 = sshll.u32 [#allocation15], 4
      %s86 = int_to_ptr.vmem [resolvable:$true] %s85
      %91 = dma.hbm_to_vmem [thread:$0]  %s5, 256, %s86, [#allocation14], 64, 64, 4
    $region25: #{lstmvae_forward.1} parent=1 // pred_fallthru
      _
    // Predicated region
    $region26: #{lstmvae_forward.1} parent=1 // pred_check
      _
    $region27: #{lstmvae_forward.1} parent=1 // pred_check_branch
      %93 = sbr.rel (0) target = $region29
    $region28: #{lstmvae_forward.1} parent=1 // pred_region
      _
    $region29: #{lstmvae_forward.1} parent=1 // pred_fallthru
      _
    // Predicated region
    $region30: #{lstmvae_forward.1} parent=1 // pred_check
      _
    $region31: #{lstmvae_forward.1} parent=1 // pred_check_branch
      %95 = sbr.rel (0) target = $region33
    $region32: #{lstmvae_forward.1} parent=1 // pred_region
      %s97 = ssub.s32 16, 16
      %98 = vsyncadd [#allocation17], %s97
      %s100 = sshll.u32 [#allocation16], 4
      %s101 = int_to_ptr.vmem [resolvable:$true] %s100
      %103 = dma.hbm_to_vmem [thread:$0]  %s7, 16, %s101, [#allocation17]
    $region33: #{lstmvae_forward.1} parent=1 // pred_fallthru
      _
    // Predicated region
    $region34: #{lstmvae_forward.1} parent=1 // pred_check
      _
    $region35: #{lstmvae_forward.1} parent=1 // pred_check_branch
      %105 = sbr.rel (0) target = $region37
    $region36: #{lstmvae_forward.1} parent=1 // pred_region
      _
    $region37: #{lstmvae_forward.1} parent=1 // pred_fallthru
      _
    // Predicated region
    $region38: #{lstmvae_forward.1} parent=1 // pred_check
      _
    $region39: #{lstmvae_forward.1} parent=1 // pred_check_branch
      %107 = sbr.rel (0) target = $region41
    $region40: #{lstmvae_forward.1} parent=1 // pred_region
      _
    $region41: #{lstmvae_forward.1} parent=1 // pred_fallthru
      _
    // Predicated region
    $region42: #{lstmvae_forward.1} parent=1 // pred_check
      _
    $region43: #{lstmvae_forward.1} parent=1 // pred_check_branch
      %109 = sbr.rel (0) target = $region45
    $region44: #{lstmvae_forward.1} parent=1 // pred_region
      %s111 = ssub.s32 16, 16
      %112 = vsyncadd [#allocation17], %s111
      %s114 = sshll.u32 [#allocation18], 4
      %s115 = int_to_ptr.vmem [resolvable:$true] %s114
      %117 = dma.hbm_to_vmem [thread:$0]  %s10, 16, %s115, [#allocation17]
    $region45: #{lstmvae_forward.1} parent=1 // pred_fallthru
      _
    // Predicated region
    $region46: #{lstmvae_forward.1} parent=1 // pred_check
      _
    $region47: #{lstmvae_forward.1} parent=1 // pred_check_branch
      %119 = sbr.rel (0) target = $region49
    $region48: #{lstmvae_forward.1} parent=1 // pred_region
      _
    $region49: #{lstmvae_forward.1} parent=1 // pred_fallthru
      _
    // Predicated region
    $region50: #{lstmvae_forward.1} parent=1 // pred_check
      _
    $region51: #{lstmvae_forward.1} parent=1 // pred_check_branch
      %121 = sbr.rel (0) target = $region53
    $region52: #{lstmvae_forward.1} parent=1 // pred_region
      _
    $region53: #{lstmvae_forward.1} parent=1 // pred_fallthru
      _
    // Predicated region
    $region54: #{lstmvae_forward.1} parent=1 // pred_check
      _
    $region55: #{lstmvae_forward.1} parent=1 // pred_check_branch
      %123 = sbr.rel (0) target = $region57
    $region56: #{lstmvae_forward.1} parent=1 // pred_region
      _
    $region57: #{lstmvae_forward.1} parent=1 // pred_fallthru
      _
    // Predicated region
    $region58: #{lstmvae_forward.1} parent=1 // pred_check
      _
    $region59: #{lstmvae_forward.1} parent=1 // pred_check_branch
      %125 = sbr.rel (0) target = $region61
    $region60: #{lstmvae_forward.1} parent=1 // pred_region
      _
    $region61: #{lstmvae_forward.1} parent=1 // pred_fallthru
      _
    // Predicated region
    $region62: #{lstmvae_forward.1} parent=1 // pred_check
      _
    $region63: #{lstmvae_forward.1} parent=1 // pred_check_branch
      %127 = sbr.rel (0) target = $region65
    $region64: #{lstmvae_forward.1} parent=1 // pred_region
      _
    $region65: #{lstmvae_forward.1} parent=1 // pred_fallthru
      _
    // Predicated region
    $region66: #{lstmvae_forward.1} parent=1 // pred_check
      _
    $region67: #{lstmvae_forward.1} parent=1 // pred_check_branch
      %129 = sbr.rel (0) target = $region69
    $region68: #{lstmvae_forward.1} parent=1 // pred_region
      _
    $region69: #{lstmvae_forward.1} parent=1 // pred_fallthru
      _
    // Predicated region
    $region70: #{lstmvae_forward.1} parent=1 // pred_check
      _
    $region71: #{lstmvae_forward.1} parent=1 // pred_check_branch
      %131 = sbr.rel (0) target = $region73
    $region72: #{lstmvae_forward.1} parent=1 // pred_region
      _
    $region73: #{lstmvae_forward.1} parent=1 // pred_fallthru
      _
    // Predicated region
    $region74: #{lstmvae_forward.1} parent=1 // pred_check
      _
    $region75: #{lstmvae_forward.1} parent=1 // pred_check_branch
      %133 = sbr.rel (0) target = $region77
    $region76: #{lstmvae_forward.1} parent=1 // pred_region
      %134 = dma.done [#allocation8], 256
    $region77: #{lstmvae_forward.1} parent=1 // pred_fallthru
      _
    // Predicated region
    $region78: #{lstmvae_forward.1} parent=1 // pred_check
      _
    $region79: #{lstmvae_forward.1} parent=1 // pred_check_branch
      %136 = sbr.rel (0) target = $region81
    $region80: #{lstmvae_forward.1} parent=1 // pred_region
      %137 = dma.done [#allocation11], 32
    $region81: #{lstmvae_forward.1} parent=1 // pred_fallthru
      _
    // Predicated region
    $region82: #{lstmvae_forward.1} parent=1 // pred_check
      _
    $region83: #{lstmvae_forward.1} parent=1 // pred_check_branch
      %139 = sbr.rel (0) target = $region85
    $region84: #{lstmvae_forward.1} parent=1 // pred_region
      %140 = dma.done [#allocation11], 256
    $region85: #{lstmvae_forward.1} parent=1 // pred_fallthru
      _
    // Predicated region
    $region86: #{lstmvae_forward.1} parent=1 // pred_check
      _
    $region87: #{lstmvae_forward.1} parent=1 // pred_check_branch
      %142 = sbr.rel (0) target = $region89
    $region88: #{lstmvae_forward.1} parent=1 // pred_region
      %143 = dma.done [#allocation14], 16
    $region89: #{lstmvae_forward.1} parent=1 // pred_fallthru
      _
    // Predicated region
    $region90: #{lstmvae_forward.1} parent=1 // pred_check
      _
    $region91: #{lstmvae_forward.1} parent=1 // pred_check_branch
      %145 = sbr.rel (0) target = $region93
    $region92: #{lstmvae_forward.1} parent=1 // pred_region
      %146 = dma.done [#allocation14], 256
    $region93: #{lstmvae_forward.1} parent=1 // pred_fallthru
      _
    // Predicated region
    $region94: #{lstmvae_forward.1} parent=1 // pred_check
      _
    $region95: #{lstmvae_forward.1} parent=1 // pred_check_branch
      %148 = sbr.rel (0) target = $region97
    $region96: #{lstmvae_forward.1} parent=1 // pred_region
      %149 = dma.done [#allocation17], 16
    $region97: #{lstmvae_forward.1} parent=1 // pred_fallthru
      _
    // Predicated region
    $region98: #{lstmvae_forward.1} parent=1 // pred_check
      _
    $region99: #{lstmvae_forward.1} parent=1 // pred_check_branch
      %151 = sbr.rel (0) target = $region101
    $region100: #{lstmvae_forward.1} parent=1 // pred_region
      %152 = dma.done [#allocation17], 16
    $region101: #{lstmvae_forward.1} parent=1 // pred_fallthru
      _
    %p154 = scmp.eq.s32.totalorder 0, 0
    // Predicated region
    $region102: #{lstmvae_forward.1} parent=1 // pred_check
      %p155 = pneg %p154
    $region103: #{lstmvae_forward.1} parent=1 // pred_check_branch
      %157 = sbr.rel (%p155) target = $region105
    $region104: #{lstmvae_forward.1} parent=1 // pred_region
      %vm158 = vcmask 254976
      %159 = vst.msk [vmem:[#allocation2] sm:$0x3] %vm158, 0.0
      %160 = vst.msk [vmem:[#allocation2 + $0x2] sm:$0x3] %vm158, 0.0
      %161 = vst.msk [vmem:[#allocation3] sm:$0x3] %vm158, 0.0
      %162 = vst.msk [vmem:[#allocation3 + $0x2] sm:$0x3] %vm158, 0.0
      %163 = vst.msk [vmem:[#allocation4] sm:$0x3] %vm158, 0.0
      %164 = vst.msk [vmem:[#allocation4 + $0x2] sm:$0x3] %vm158, 0.0
      %165 = vst.msk [vmem:[#allocation5] sm:$0x3] %vm158, 0.0
      %166 = vst.msk [vmem:[#allocation5 + $0x2] sm:$0x3] %vm158, 0.0
    $region105: #{lstmvae_forward.1} parent=1 // pred_fallthru
      _
    %v167 = vld [vmem:[%s0] sm:$0xff]
    %v168 = vld [vmem:[%s0 + $0x8] sm:$0xff]
    %v169 = vld [vmem:[#allocation10] sm:$0x3]
    %v170 = vld [vmem:[#allocation12] sm:$0xf]
    %v171 = vld [vmem:[#allocation12 + $0x4] sm:$0xf]
    %v172 = vld [vmem:[#allocation12 + $0x8] sm:$0xf]
    %v173 = vld [vmem:[#allocation12 + $0xc] sm:$0xf]
    %v174 = vld [vmem:[#allocation13] sm:$0x1]
    %v175 = vpack.c.bf16 %v168, %v167
    %v177 = vlaneseq
    %v178 = vshrl.u32 %v177, 7
    %v179 = vsub.s32 0, %v178
    %v180 = vrot.slane %v174, %v179
    %vm182 = vcmask 31744
    %v184 = vsel %vm182, %v175, 0
    %vm186 = vcmask 1041408
    %v188 = vsel %vm186, %v169, 0
    %190 = vmatprep.subr.bf16.mxu0 0
    %191 = vmatpush1.bf16.msra.mxu0 %v188
    %192 = vmatprep.subr.bf16.mxu0 0
    %193 = vmatpush1.bf16.msra.mxu0 0
    %194 = vmatprep.subr.bf16.mxu0 0
    %195 = vmatpush1.bf16.msra.mxu0 0
    %196 = vmatprep.subr.bf16.mxu0 0
    %197 = vmatpush1.bf16.msra.mxu0 0
    %198 = vmatprep.subr.bf16.mxu0 0
    %199 = vmatpush1.bf16.msra.mxu0 0
    %200 = vmatprep.subr.bf16.mxu0 0
    %201 = vmatpush1.bf16.msra.mxu0 0
    %202 = vmatprep.subr.bf16.mxu0 0
    %203 = vmatpush1.bf16.msra.mxu0 0
    %204 = vmatprep.subr.bf16.mxu0 0
    %205 = vmatpush1.bf16.msra.mxu0 0
    %206 = vmatprep.subr.bf16.mxu0 0
    %207 = vmatpush1.bf16.msra.mxu0 0
    %208 = vmatprep.subr.bf16.mxu0 0
    %209 = vmatpush1.bf16.msra.mxu0 0
    %210 = vmatprep.subr.bf16.mxu0 0
    %211 = vmatpush1.bf16.msra.mxu0 0
    %212 = vmatprep.subr.bf16.mxu0 0
    %213 = vmatpush1.bf16.msra.mxu0 0
    %214 = vmatprep.subr.bf16.mxu0 0
    %215 = vmatpush1.bf16.msra.mxu0 0
    %216 = vmatprep.subr.bf16.mxu0 0
    %217 = vmatpush1.bf16.msra.mxu0 0
    %218 = vmatprep.subr.bf16.mxu0 0
    %219 = vmatpush1.bf16.msra.mxu0 0
    %220 = vmatprep.subr.bf16.mxu0 0
    %221 = vmatpush1.bf16.msra.mxu0 0
    %222 = vmatprep.mubr.bf16.mxu0 0
    %223 = vmatmul.mubr.bf16.gmra.mrb[0].mxu0 %v184
    %v224 = vpop.f32.mrb[0].mxu0
    %v225 = vadd.f32 %v180, %v224
    %v226 = vpop.f32.mrb[0].mxu0
    %v227 = vpop.f32.mrb[0].mxu0
    %v228 = vadd.f32 %v180, %v227
    %v229 = vpop.f32.mrb[0].mxu0
    %230 = vdwg.mxu0
    %v231 = vld [vmem:[#allocation2] sm:$0x3]
    %v232 = vld [vmem:[#allocation3] sm:$0x3]
    %v233 = vpack.c.bf16 %v231, %v231
    %v238 = vunpack.c.l.b16 %v170
    %v239 = vunpack.c.l.b16 %v171
    %v240 = vunpack.c.l.b16 %v172
    %v241 = vunpack.c.l.b16 %v173
    %v242 = vpack.c.b16 %v239, %v238
    %v243 = vpack.c.b16 %v241, %v240
    %vm246 = vcmask 261120
    %v248 = vsel %vm246, %v233, 0
    %250 = vmatprep.subr.bf16.mxu0 0
    %251 = vmatpush1.bf16.msra.mxu0 %v242
    %252 = vmatprep.subr.bf16.mxu0 0
    %253 = vmatpush1.bf16.msra.mxu0 %v243
    %254 = vmatprep.subr.bf16.mxu0 0
    %255 = vmatpush1.bf16.msra.mxu0 0
    %256 = vmatprep.subr.bf16.mxu0 0
    %257 = vmatpush1.bf16.msra.mxu0 0
    %258 = vmatprep.subr.bf16.mxu0 0
    %259 = vmatpush1.bf16.msra.mxu0 0
    %260 = vmatprep.subr.bf16.mxu0 0
    %261 = vmatpush1.bf16.msra.mxu0 0
    %262 = vmatprep.subr.bf16.mxu0 0
    %263 = vmatpush1.bf16.msra.mxu0 0
    %264 = vmatprep.subr.bf16.mxu0 0
    %265 = vmatpush1.bf16.msra.mxu0 0
    %266 = vmatprep.subr.bf16.mxu0 0
    %267 = vmatpush1.bf16.msra.mxu0 0
    %268 = vmatprep.subr.bf16.mxu0 0
    %269 = vmatpush1.bf16.msra.mxu0 0
    %270 = vmatprep.subr.bf16.mxu0 0
    %271 = vmatpush1.bf16.msra.mxu0 0
    %272 = vmatprep.subr.bf16.mxu0 0
    %273 = vmatpush1.bf16.msra.mxu0 0
    %274 = vmatprep.subr.bf16.mxu0 0
    %275 = vmatpush1.bf16.msra.mxu0 0
    %276 = vmatprep.subr.bf16.mxu0 0
    %277 = vmatpush1.bf16.msra.mxu0 0
    %278 = vmatprep.subr.bf16.mxu0 0
    %279 = vmatpush1.bf16.msra.mxu0 0
    %280 = vmatprep.subr.bf16.mxu0 0
    %281 = vmatpush1.bf16.msra.mxu0 0
    %282 = vmatprep.mubr.bf16.mxu0 0
    %283 = vmatmul.mubr.bf16.gmra.mrb[0].mxu0 %v248
    %v284 = vpop.f32.mrb[0].mxu0
    %v285 = vadd.f32 0.0, %v284
    %v286 = vpop.f32.mrb[0].mxu0
    %v287 = vpop.f32.mrb[0].mxu0
    %v288 = vpop.f32.mrb[0].mxu0
    %289 = vdwg.mxu0
    %v290 = vadd.f32 %v225, %v285
    %v291 = vmax.f32 %v290, -30.0
    %v292 = vsub.f32 0.0, %v291
    %v293 = vmul.f32 %v292, 1.442695
    %v294 = vpow.pop %v293
    %v295 = vadd.f32 %v294, 1.0
    %v296 = vrcp.pop %v295
    %v297 = vtanh.pop %v290
    %299 = vrot.lane.b32.xlu0 %v232, 32
    %v300 = vpop.permute.xlu0 %299
    %v302 = vmul.f32 %v296, %v300
    %304 = vrot.lane.b32.xlu0 %v297, 64
    %v305 = vpop.permute.xlu0 %304
    %v307 = vmul.f32 %v296, %v305
    %309 = vrot.lane.b32.xlu0 %v307, 32
    %v310 = vpop.permute.xlu0 %309
    %v312 = vadd.f32 %v302, %v310
    %v313 = vtanh.pop %v312
    %315 = vrot.lane.b32.xlu0 %v313, 64
    %v316 = vpop.permute.xlu0 %315
    %v318 = vmul.f32 %v296, %v316
    %320 = vrot.lane.b32.xlu0 %v318, 32
    %v321 = vpop.permute.xlu0 %320
    %vm323 = vcmask 254976
    %324 = vst.msk [vmem:[#allocation6] sm:$0x3] %vm323, %v321
    %v325 = vpack.c.bf16 %v318, %v318
    %327 = vrot.lane.b32.xlu0 %v325, 32
    %v328 = vpop.permute.xlu0 %327
    %v330 = vsel %vm246, %v328, 0
    %332 = vmatprep.subr.bf16.mxu0 0
    %333 = vmatpush1.bf16.msra.mxu0 %v242
    %334 = vmatprep.subr.bf16.mxu0 0
    %335 = vmatpush1.bf16.msra.mxu0 %v243
    %336 = vmatprep.subr.bf16.mxu0 0
    %337 = vmatpush1.bf16.msra.mxu0 0
    %338 = vmatprep.subr.bf16.mxu0 0
    %339 = vmatpush1.bf16.msra.mxu0 0
    %340 = vmatprep.subr.bf16.mxu0 0
    %341 = vmatpush1.bf16.msra.mxu0 0
    %342 = vmatprep.subr.bf16.mxu0 0
    %343 = vmatpush1.bf16.msra.mxu0 0
    %344 = vmatprep.subr.bf16.mxu0 0
    %345 = vmatpush1.bf16.msra.mxu0 0
    %346 = vmatprep.subr.bf16.mxu0 0
    %347 = vmatpush1.bf16.msra.mxu0 0
    %348 = vmatprep.subr.bf16.mxu0 0
    %349 = vmatpush1.bf16.msra.mxu0 0
    %350 = vmatprep.subr.bf16.mxu0 0
    %351 = vmatpush1.bf16.msra.mxu0 0
    %352 = vmatprep.subr.bf16.mxu0 0
    %353 = vmatpush1.bf16.msra.mxu0 0
    %354 = vmatprep.subr.bf16.mxu0 0
    %355 = vmatpush1.bf16.msra.mxu0 0
    %356 = vmatprep.subr.bf16.mxu0 0
    %357 = vmatpush1.bf16.msra.mxu0 0
    %358 = vmatprep.subr.bf16.mxu0 0
    %359 = vmatpush1.bf16.msra.mxu0 0
    %360 = vmatprep.subr.bf16.mxu0 0
    %361 = vmatpush1.bf16.msra.mxu0 0
    %362 = vmatprep.subr.bf16.mxu0 0
    %363 = vmatpush1.bf16.msra.mxu0 0
    %364 = vmatprep.mubr.bf16.mxu0 0
    %365 = vmatmul.mubr.bf16.gmra.mrb[0].mxu0 %v330
    %v366 = vpop.f32.mrb[0].mxu0
    %v367 = vadd.f32 0.0, %v366
    %v368 = vpop.f32.mrb[0].mxu0
    %v369 = vpop.f32.mrb[0].mxu0
    %v370 = vpop.f32.mrb[0].mxu0
    %371 = vdwg.mxu0
    %v373 = vrot.slane %v367, 6
    %v375 = vadd.f32 %v225, %v373
    %v376 = vmax.f32 %v375, -30.0
    %v377 = vsub.f32 0.0, %v376
    %v378 = vmul.f32 %v377, 1.442695
    %v379 = vpow.pop %v378
    %v380 = vadd.f32 %v379, 1.0
    %v381 = vrcp.pop %v380
    %v382 = vtanh.pop %v375
    %v384 = vrot.slane %v312, 6
    %v386 = vmul.f32 %v381, %v384
    %388 = vrot.lane.b32.xlu0 %v382, 64
    %v389 = vpop.permute.xlu0 %388
    %v391 = vmul.f32 %v381, %v389
    %393 = vrot.lane.b32.xlu0 %v391, 32
    %v394 = vpop.permute.xlu0 %393
    %v396 = vadd.f32 %v386, %v394
    %v397 = vtanh.pop %v396
    %399 = vrot.lane.b32.xlu0 %v397, 64
    %v400 = vpop.permute.xlu0 %399
    %v402 = vmul.f32 %v381, %v400
    %404 = vrot.lane.b32.xlu0 %v402, 32
    %v405 = vpop.permute.xlu0 %404
    %vm407 = vcmask 257026
    %408 = vst.msk [vmem:[#allocation6] sm:$0xc] %vm407, %v405
    %v409 = vpack.c.bf16 %v402, %v402
    %v411 = vrot.slane %v409, 1
    %412 = vrot.lane.b32.xlu0 %v411, 32
    %v413 = vpop.permute.xlu0 %412
    %v415 = vsel %vm246, %v413, 0
    %417 = vmatprep.subr.bf16.mxu0 0
    %418 = vmatpush1.bf16.msra.mxu0 %v242
    %419 = vmatprep.subr.bf16.mxu0 0
    %420 = vmatpush1.bf16.msra.mxu0 %v243
    %421 = vmatprep.subr.bf16.mxu0 0
    %422 = vmatpush1.bf16.msra.mxu0 0
    %423 = vmatprep.subr.bf16.mxu0 0
    %424 = vmatpush1.bf16.msra.mxu0 0
    %425 = vmatprep.subr.bf16.mxu0 0
    %426 = vmatpush1.bf16.msra.mxu0 0
    %427 = vmatprep.subr.bf16.mxu0 0
    %428 = vmatpush1.bf16.msra.mxu0 0
    %429 = vmatprep.subr.bf16.mxu0 0
    %430 = vmatpush1.bf16.msra.mxu0 0
    %431 = vmatprep.subr.bf16.mxu0 0
    %432 = vmatpush1.bf16.msra.mxu0 0
    %433 = vmatprep.subr.bf16.mxu0 0
    %434 = vmatpush1.bf16.msra.mxu0 0
    %435 = vmatprep.subr.bf16.mxu0 0
    %436 = vmatpush1.bf16.msra.mxu0 0
    %437 = vmatprep.subr.bf16.mxu0 0
    %438 = vmatpush1.bf16.msra.mxu0 0
    %439 = vmatprep.subr.bf16.mxu0 0
    %440 = vmatpush1.bf16.msra.mxu0 0
    %441 = vmatprep.subr.bf16.mxu0 0
    %442 = vmatpush1.bf16.msra.mxu0 0
    %443 = vmatprep.subr.bf16.mxu0 0
    %444 = vmatpush1.bf16.msra.mxu0 0
    %445 = vmatprep.subr.bf16.mxu0 0
    %446 = vmatpush1.bf16.msra.mxu0 0
    %447 = vmatprep.subr.bf16.mxu0 0
    %448 = vmatpush1.bf16.msra.mxu0 0
    %449 = vmatprep.mubr.bf16.mxu0 0
    %450 = vmatmul.mubr.bf16.gmra.mrb[0].mxu0 %v415
    %v451 = vpop.f32.mrb[0].mxu0
    %v452 = vadd.f32 0.0, %v451
    %v453 = vpop.f32.mrb[0].mxu0
    %v454 = vpop.f32.mrb[0].mxu0
    %v455 = vpop.f32.mrb[0].mxu0
    %456 = vdwg.mxu0
    %v458 = vrot.slane %v452, 4
    %v460 = vadd.f32 %v225, %v458
    %v461 = vmax.f32 %v460, -30.0
    %v462 = vsub.f32 0.0, %v461
    %v463 = vmul.f32 %v462, 1.442695
    %v464 = vpow.pop %v463
    %v465 = vadd.f32 %v464, 1.0
    %v466 = vrcp.pop %v465
    %v467 = vtanh.pop %v460
    %v469 = vrot.slane %v396, 6
    %v471 = vmul.f32 %v466, %v469
    %473 = vrot.lane.b32.xlu0 %v467, 64
    %v474 = vpop.permute.xlu0 %473
    %v476 = vmul.f32 %v466, %v474
    %478 = vrot.lane.b32.xlu0 %v476, 32
    %v479 = vpop.permute.xlu0 %478
    %v481 = vadd.f32 %v471, %v479
    %v482 = vtanh.pop %v481
    %484 = vrot.lane.b32.xlu0 %v482, 64
    %v485 = vpop.permute.xlu0 %484
    %v487 = vmul.f32 %v466, %v485
    %489 = vrot.lane.b32.xlu0 %v487, 32
    %v490 = vpop.permute.xlu0 %489
    %vm492 = vcmask 259076
    %493 = vst.msk [vmem:[#allocation6] sm:$0x30] %vm492, %v490
    %v494 = vpack.c.bf16 %v487, %v487
    %v496 = vrot.slane %v494, 2
    %497 = vrot.lane.b32.xlu0 %v496, 32
    %v498 = vpop.permute.xlu0 %497
    %v500 = vsel %vm246, %v498, 0
    %502 = vmatprep.subr.bf16.mxu0 0
    %503 = vmatpush1.bf16.msra.mxu0 %v242
    %504 = vmatprep.subr.bf16.mxu0 0
    %505 = vmatpush1.bf16.msra.mxu0 %v243
    %506 = vmatprep.subr.bf16.mxu0 0
    %507 = vmatpush1.bf16.msra.mxu0 0
    %508 = vmatprep.subr.bf16.mxu0 0
    %509 = vmatpush1.bf16.msra.mxu0 0
    %510 = vmatprep.subr.bf16.mxu0 0
    %511 = vmatpush1.bf16.msra.mxu0 0
    %512 = vmatprep.subr.bf16.mxu0 0
    %513 = vmatpush1.bf16.msra.mxu0 0
    %514 = vmatprep.subr.bf16.mxu0 0
    %515 = vmatpush1.bf16.msra.mxu0 0
    %516 = vmatprep.subr.bf16.mxu0 0
    %517 = vmatpush1.bf16.msra.mxu0 0
    %518 = vmatprep.subr.bf16.mxu0 0
    %519 = vmatpush1.bf16.msra.mxu0 0
    %520 = vmatprep.subr.bf16.mxu0 0
    %521 = vmatpush1.bf16.msra.mxu0 0
    %522 = vmatprep.subr.bf16.mxu0 0
    %523 = vmatpush1.bf16.msra.mxu0 0
    %524 = vmatprep.subr.bf16.mxu0 0
    %525 = vmatpush1.bf16.msra.mxu0 0
    %526 = vmatprep.subr.bf16.mxu0 0
    %527 = vmatpush1.bf16.msra.mxu0 0
    %528 = vmatprep.subr.bf16.mxu0 0
    %529 = vmatpush1.bf16.msra.mxu0 0
    %530 = vmatprep.subr.bf16.mxu0 0
    %531 = vmatpush1.bf16.msra.mxu0 0
    %532 = vmatprep.subr.bf16.mxu0 0
    %533 = vmatpush1.bf16.msra.mxu0 0
    %534 = vmatprep.mubr.bf16.mxu0 0
    %535 = vmatmul.mubr.bf16.gmra.mrb[0].mxu0 %v500
    %v536 = vpop.f32.mrb[0].mxu0
    %v537 = vadd.f32 0.0, %v536
    %v538 = vpop.f32.mrb[0].mxu0
    %v539 = vpop.f32.mrb[0].mxu0
    %v540 = vpop.f32.mrb[0].mxu0
    %541 = vdwg.mxu0
    %v543 = vrot.slane %v537, 2
    %v545 = vadd.f32 %v225, %v543
    %v546 = vmax.f32 %v545, -30.0
    %v547 = vsub.f32 0.0, %v546
    %v548 = vmul.f32 %v547, 1.442695
    %v549 = vpow.pop %v548
    %v550 = vadd.f32 %v549, 1.0
    %v551 = vrcp.pop %v550
    %v552 = vtanh.pop %v545
    %v554 = vrot.slane %v481, 6
    %v556 = vmul.f32 %v551, %v554
    %558 = vrot.lane.b32.xlu0 %v552, 64
    %v559 = vpop.permute.xlu0 %558
    %v561 = vmul.f32 %v551, %v559
    %563 = vrot.lane.b32.xlu0 %v561, 32
    %v564 = vpop.permute.xlu0 %563
    %v566 = vadd.f32 %v556, %v564
    %v567 = vtanh.pop %v566
    %569 = vrot.lane.b32.xlu0 %v567, 64
    %v570 = vpop.permute.xlu0 %569
    %v572 = vmul.f32 %v551, %v570
    %574 = vrot.lane.b32.xlu0 %v572, 32
    %v575 = vpop.permute.xlu0 %574
    %vm577 = vcmask 261126
    %578 = vst.msk [vmem:[#allocation6] sm:$0xc0] %vm577, %v575
    %v579 = vpack.c.bf16 %v572, %v572
    %v581 = vrot.slane %v579, 3
    %582 = vrot.lane.b32.xlu0 %v581, 32
    %v583 = vpop.permute.xlu0 %582
    %v585 = vsel %vm246, %v583, 0
    %587 = vmatprep.subr.bf16.mxu0 0
    %588 = vmatpush1.bf16.msra.mxu0 %v242
    %589 = vmatprep.subr.bf16.mxu0 0
    %590 = vmatpush1.bf16.msra.mxu0 %v243
    %591 = vmatprep.subr.bf16.mxu0 0
    %592 = vmatpush1.bf16.msra.mxu0 0
    %593 = vmatprep.subr.bf16.mxu0 0
    %594 = vmatpush1.bf16.msra.mxu0 0
    %595 = vmatprep.subr.bf16.mxu0 0
    %596 = vmatpush1.bf16.msra.mxu0 0
    %597 = vmatprep.subr.bf16.mxu0 0
    %598 = vmatpush1.bf16.msra.mxu0 0
    %599 = vmatprep.subr.bf16.mxu0 0
    %600 = vmatpush1.bf16.msra.mxu0 0
    %601 = vmatprep.subr.bf16.mxu0 0
    %602 = vmatpush1.bf16.msra.mxu0 0
    %603 = vmatprep.subr.bf16.mxu0 0
    %604 = vmatpush1.bf16.msra.mxu0 0
    %605 = vmatprep.subr.bf16.mxu0 0
    %606 = vmatpush1.bf16.msra.mxu0 0
    %607 = vmatprep.subr.bf16.mxu0 0
    %608 = vmatpush1.bf16.msra.mxu0 0
    %609 = vmatprep.subr.bf16.mxu0 0
    %610 = vmatpush1.bf16.msra.mxu0 0
    %611 = vmatprep.subr.bf16.mxu0 0
    %612 = vmatpush1.bf16.msra.mxu0 0
    %613 = vmatprep.subr.bf16.mxu0 0
    %614 = vmatpush1.bf16.msra.mxu0 0
    %615 = vmatprep.subr.bf16.mxu0 0
    %616 = vmatpush1.bf16.msra.mxu0 0
    %617 = vmatprep.subr.bf16.mxu0 0
    %618 = vmatpush1.bf16.msra.mxu0 0
    %619 = vmatprep.mubr.bf16.mxu0 0
    %620 = vmatmul.mubr.bf16.gmra.mrb[0].mxu0 %v585
    %v621 = vpop.f32.mrb[0].mxu0
    %v622 = vadd.f32 0.0, %v621
    %v623 = vpop.f32.mrb[0].mxu0
    %v624 = vpop.f32.mrb[0].mxu0
    %v625 = vpop.f32.mrb[0].mxu0
    %626 = vdwg.mxu0
    %v627 = vadd.f32 %v228, %v622
    %v628 = vmax.f32 %v627, -30.0
    %v629 = vsub.f32 0.0, %v628
    %v630 = vmul.f32 %v629, 1.442695
    %v631 = vpow.pop %v630
    %v632 = vadd.f32 %v631, 1.0
    %v633 = vrcp.pop %v632
    %v634 = vtanh.pop %v627
    %v636 = vrot.slane %v566, 6
    %v638 = vmul.f32 %v633, %v636
    %640 = vrot.lane.b32.xlu0 %v634, 64
    %v641 = vpop.permute.xlu0 %640
    %v643 = vmul.f32 %v633, %v641
    %645 = vrot.lane.b32.xlu0 %v643, 32
    %v646 = vpop.permute.xlu0 %645
    %v648 = vadd.f32 %v638, %v646
    %v649 = vtanh.pop %v648
    %651 = vrot.lane.b32.xlu0 %v649, 64
    %v652 = vpop.permute.xlu0 %651
    %v654 = vmul.f32 %v633, %v652
    %656 = vrot.lane.b32.xlu0 %v654, 32
    %v657 = vpop.permute.xlu0 %656
    %659 = vst.msk [vmem:[#allocation6 + $0x8] sm:$0x3] %vm323, %v657
    %v660 = vpack.c.bf16 %v654, %v654
    %662 = vrot.lane.b32.xlu0 %v660, 32
    %v663 = vpop.permute.xlu0 %662
    %v665 = vsel %vm246, %v663, 0
    %667 = vmatprep.subr.bf16.mxu0 0
    %668 = vmatpush1.bf16.msra.mxu0 %v242
    %669 = vmatprep.subr.bf16.mxu0 0
    %670 = vmatpush1.bf16.msra.mxu0 %v243
    %671 = vmatprep.subr.bf16.mxu0 0
    %672 = vmatpush1.bf16.msra.mxu0 0
    %673 = vmatprep.subr.bf16.mxu0 0
    %674 = vmatpush1.bf16.msra.mxu0 0
    %675 = vmatprep.subr.bf16.mxu0 0
    %676 = vmatpush1.bf16.msra.mxu0 0
    %677 = vmatprep.subr.bf16.mxu0 0
    %678 = vmatpush1.bf16.msra.mxu0 0
    %679 = vmatprep.subr.bf16.mxu0 0
    %680 = vmatpush1.bf16.msra.mxu0 0
    %681 = vmatprep.subr.bf16.mxu0 0
    %682 = vmatpush1.bf16.msra.mxu0 0
    %683 = vmatprep.subr.bf16.mxu0 0
    %684 = vmatpush1.bf16.msra.mxu0 0
    %685 = vmatprep.subr.bf16.mxu0 0
    %686 = vmatpush1.bf16.msra.mxu0 0
    %687 = vmatprep.subr.bf16.mxu0 0
    %688 = vmatpush1.bf16.msra.mxu0 0
    %689 = vmatprep.subr.bf16.mxu0 0
    %690 = vmatpush1.bf16.msra.mxu0 0
    %691 = vmatprep.subr.bf16.mxu0 0
    %692 = vmatpush1.bf16.msra.mxu0 0
    %693 = vmatprep.subr.bf16.mxu0 0
    %694 = vmatpush1.bf16.msra.mxu0 0
    %695 = vmatprep.subr.bf16.mxu0 0
    %696 = vmatpush1.bf16.msra.mxu0 0
    %697 = vmatprep.subr.bf16.mxu0 0
    %698 = vmatpush1.bf16.msra.mxu0 0
    %699 = vmatprep.mubr.bf16.mxu0 0
    %700 = vmatmul.mubr.bf16.gmra.mrb[0].mxu0 %v665
    %v701 = vpop.f32.mrb[0].mxu0
    %v702 = vadd.f32 0.0, %v701
    %v703 = vpop.f32.mrb[0].mxu0
    %v704 = vpop.f32.mrb[0].mxu0
    %v705 = vpop.f32.mrb[0].mxu0
    %706 = vdwg.mxu0
    %v708 = vrot.slane %v702, 6
    %v710 = vadd.f32 %v228, %v708
    %v711 = vmax.f32 %v710, -30.0
    %v712 = vsub.f32 0.0, %v711
    %v713 = vmul.f32 %v712, 1.442695
    %v714 = vpow.pop %v713
    %v715 = vadd.f32 %v714, 1.0
    %v716 = vrcp.pop %v715
    %v717 = vtanh.pop %v710
    %v719 = vrot.slane %v648, 6
    %v721 = vmul.f32 %v716, %v719
    %723 = vrot.lane.b32.xlu0 %v717, 64
    %v724 = vpop.permute.xlu0 %723
    %v726 = vmul.f32 %v716, %v724
    %728 = vrot.lane.b32.xlu0 %v726, 32
    %v729 = vpop.permute.xlu0 %728
    %v731 = vadd.f32 %v721, %v729
    %v732 = vtanh.pop %v731
    %734 = vrot.lane.b32.xlu0 %v732, 64
    %v735 = vpop.permute.xlu0 %734
    %v737 = vmul.f32 %v716, %v735
    %739 = vrot.lane.b32.xlu0 %v737, 32
    %v740 = vpop.permute.xlu0 %739
    %742 = vst.msk [vmem:[#allocation6 + $0x8] sm:$0xc] %vm407, %v740
    %v743 = vpack.c.bf16 %v737, %v737
    %v745 = vrot.slane %v743, 1
    %746 = vrot.lane.b32.xlu0 %v745, 32
    %v747 = vpop.permute.xlu0 %746
    %v749 = vsel %vm246, %v747, 0
    %751 = vmatprep.subr.bf16.mxu0 0
    %752 = vmatpush1.bf16.msra.mxu0 %v242
    %753 = vmatprep.subr.bf16.mxu0 0
    %754 = vmatpush1.bf16.msra.mxu0 %v243
    %755 = vmatprep.subr.bf16.mxu0 0
    %756 = vmatpush1.bf16.msra.mxu0 0
    %757 = vmatprep.subr.bf16.mxu0 0
    %758 = vmatpush1.bf16.msra.mxu0 0
    %759 = vmatprep.subr.bf16.mxu0 0
    %760 = vmatpush1.bf16.msra.mxu0 0
    %761 = vmatprep.subr.bf16.mxu0 0
    %762 = vmatpush1.bf16.msra.mxu0 0
    %763 = vmatprep.subr.bf16.mxu0 0
    %764 = vmatpush1.bf16.msra.mxu0 0
    %765 = vmatprep.subr.bf16.mxu0 0
    %766 = vmatpush1.bf16.msra.mxu0 0
    %767 = vmatprep.subr.bf16.mxu0 0
    %768 = vmatpush1.bf16.msra.mxu0 0
    %769 = vmatprep.subr.bf16.mxu0 0
    %770 = vmatpush1.bf16.msra.mxu0 0
    %771 = vmatprep.subr.bf16.mxu0 0
    %772 = vmatpush1.bf16.msra.mxu0 0
    %773 = vmatprep.subr.bf16.mxu0 0
    %774 = vmatpush1.bf16.msra.mxu0 0
    %775 = vmatprep.subr.bf16.mxu0 0
    %776 = vmatpush1.bf16.msra.mxu0 0
    %777 = vmatprep.subr.bf16.mxu0 0
    %778 = vmatpush1.bf16.msra.mxu0 0
    %779 = vmatprep.subr.bf16.mxu0 0
    %780 = vmatpush1.bf16.msra.mxu0 0
    %781 = vmatprep.subr.bf16.mxu0 0
    %782 = vmatpush1.bf16.msra.mxu0 0
    %783 = vmatprep.mubr.bf16.mxu0 0
    %784 = vmatmul.mubr.bf16.gmra.mrb[0].mxu0 %v749
    %v785 = vpop.f32.mrb[0].mxu0
    %v786 = vadd.f32 0.0, %v785
    %v787 = vpop.f32.mrb[0].mxu0
    %v788 = vpop.f32.mrb[0].mxu0
    %v789 = vpop.f32.mrb[0].mxu0
    %790 = vdwg.mxu0
    %v792 = vrot.slane %v786, 4
    %v794 = vadd.f32 %v228, %v792
    %v795 = vmax.f32 %v794, -30.0
    %v796 = vsub.f32 0.0, %v795
    %v797 = vmul.f32 %v796, 1.442695
    %v798 = vpow.pop %v797
    %v799 = vadd.f32 %v798, 1.0
    %v800 = vrcp.pop %v799
    %v801 = vtanh.pop %v794
    %v803 = vrot.slane %v731, 6
    %v805 = vmul.f32 %v800, %v803
    %807 = vrot.lane.b32.xlu0 %v801, 64
    %v808 = vpop.permute.xlu0 %807
    %v810 = vmul.f32 %v800, %v808
    %812 = vrot.lane.b32.xlu0 %v810, 32
    %v813 = vpop.permute.xlu0 %812
    %v815 = vadd.f32 %v805, %v813
    %v816 = vtanh.pop %v815
    %818 = vrot.lane.b32.xlu0 %v816, 64
    %v819 = vpop.permute.xlu0 %818
    %v821 = vmul.f32 %v800, %v819
    %823 = vrot.lane.b32.xlu0 %v821, 32
    %v824 = vpop.permute.xlu0 %823
    %826 = vst.msk [vmem:[#allocation6 + $0x8] sm:$0x30] %vm492, %v824
    %v827 = vpack.c.bf16 %v821, %v821
    %v829 = vrot.slane %v827, 2
    %830 = vrot.lane.b32.xlu0 %v829, 32
    %v831 = vpop.permute.xlu0 %830
    %v833 = vsel %vm246, %v831, 0
    %835 = vmatprep.subr.bf16.mxu0 0
    %836 = vmatpush1.bf16.msra.mxu0 %v242
    %837 = vmatprep.subr.bf16.mxu0 0
    %838 = vmatpush1.bf16.msra.mxu0 %v243
    %839 = vmatprep.subr.bf16.mxu0 0
    %840 = vmatpush1.bf16.msra.mxu0 0
    %841 = vmatprep.subr.bf16.mxu0 0
    %842 = vmatpush1.bf16.msra.mxu0 0
    %843 = vmatprep.subr.bf16.mxu0 0
    %844 = vmatpush1.bf16.msra.mxu0 0
    %845 = vmatprep.subr.bf16.mxu0 0
    %846 = vmatpush1.bf16.msra.mxu0 0
    %847 = vmatprep.subr.bf16.mxu0 0
    %848 = vmatpush1.bf16.msra.mxu0 0
    %849 = vmatprep.subr.bf16.mxu0 0
    %850 = vmatpush1.bf16.msra.mxu0 0
    %851 = vmatprep.subr.bf16.mxu0 0
    %852 = vmatpush1.bf16.msra.mxu0 0
    %853 = vmatprep.subr.bf16.mxu0 0
    %854 = vmatpush1.bf16.msra.mxu0 0
    %855 = vmatprep.subr.bf16.mxu0 0
    %856 = vmatpush1.bf16.msra.mxu0 0
    %857 = vmatprep.subr.bf16.mxu0 0
    %858 = vmatpush1.bf16.msra.mxu0 0
    %859 = vmatprep.subr.bf16.mxu0 0
    %860 = vmatpush1.bf16.msra.mxu0 0
    %861 = vmatprep.subr.bf16.mxu0 0
    %862 = vmatpush1.bf16.msra.mxu0 0
    %863 = vmatprep.subr.bf16.mxu0 0
    %864 = vmatpush1.bf16.msra.mxu0 0
    %865 = vmatprep.subr.bf16.mxu0 0
    %866 = vmatpush1.bf16.msra.mxu0 0
    %867 = vmatprep.mubr.bf16.mxu0 0
    %868 = vmatmul.mubr.bf16.gmra.mrb[0].mxu0 %v833
    %v869 = vpop.f32.mrb[0].mxu0
    %v870 = vadd.f32 0.0, %v869
    %v871 = vpop.f32.mrb[0].mxu0
    %v872 = vpop.f32.mrb[0].mxu0
    %v873 = vpop.f32.mrb[0].mxu0
    %874 = vdwg.mxu0
    %v876 = vrot.slane %v870, 2
    %v878 = vadd.f32 %v228, %v876
    %v879 = vmax.f32 %v878, -30.0
    %v880 = vsub.f32 0.0, %v879
    %v881 = vmul.f32 %v880, 1.442695
    %v882 = vpow.pop %v881
    %v883 = vadd.f32 %v882, 1.0
    %v884 = vrcp.pop %v883
    %v885 = vtanh.pop %v878
    %v887 = vrot.slane %v815, 6
    %v889 = vmul.f32 %v884, %v887
    %891 = vrot.lane.b32.xlu0 %v885, 64
    %v892 = vpop.permute.xlu0 %891
    %v894 = vmul.f32 %v884, %v892
    %896 = vrot.lane.b32.xlu0 %v894, 32
    %v897 = vpop.permute.xlu0 %896
    %v899 = vadd.f32 %v889, %v897
    %v900 = vtanh.pop %v899
    %902 = vrot.lane.b32.xlu0 %v900, 64
    %v903 = vpop.permute.xlu0 %902
    %v905 = vmul.f32 %v884, %v903
    %907 = vrot.lane.b32.xlu0 %v905, 32
    %v908 = vpop.permute.xlu0 %907
    %910 = vst.msk [vmem:[#allocation6 + $0x8] sm:$0xc0] %vm577, %v908
    %911 = vst.msk [vmem:[#allocation2 - $0x6] sm:$0xc0] %vm577, %v908
    %913 = vrot.lane.b32.xlu0 %v899, 96
    %v914 = vpop.permute.xlu0 %913
    %916 = vst.msk [vmem:[#allocation3 - $0x6] sm:$0xc0] %vm577, %v914
    %v917 = vld [vmem:[#allocation6] sm:$0xff]
    %v918 = vld [vmem:[#allocation6 + $0x8] sm:$0xff]
    %v919 = vld [vmem:[#allocation15] sm:$0xf]
    %v920 = vld [vmem:[#allocation15 + $0x4] sm:$0xf]
    %v921 = vld [vmem:[#allocation15 + $0x8] sm:$0xf]
    %v922 = vld [vmem:[#allocation15 + $0xc] sm:$0xf]
    %v923 = vld [vmem:[%s6] sm:$0xf]
    %v924 = vld [vmem:[%s6 + $0x4] sm:$0xf]
    %v925 = vld [vmem:[%s6 + $0x8] sm:$0xf]
    %v926 = vld [vmem:[%s6 + $0xc] sm:$0xf]
    %v927 = vld [vmem:[#allocation16] sm:$0x1]
    %v928 = vpack.c.bf16 %v918, %v917
    %v930 = vlaneseq
    %v931 = vshrl.u32 %v930, 7
    %v932 = vsub.s32 0, %v931
    %v933 = vrot.slane %v927, %v932
    %v939 = vunpack.c.l.b16 %v919
    %v940 = vunpack.c.l.b16 %v920
    %v941 = vunpack.c.l.b16 %v921
    %v942 = vunpack.c.l.b16 %v922
    %v943 = vpack.c.b16 %v940, %v939
    %v944 = vpack.c.b16 %v942, %v941
    %v948 = vsel %vm246, %v928, 0
    %950 = vmatprep.subr.bf16.mxu0 0
    %951 = vmatpush1.bf16.msra.mxu0 %v943
    %952 = vmatprep.subr.bf16.mxu0 0
    %953 = vmatpush1.bf16.msra.mxu0 %v944
    %954 = vmatprep.subr.bf16.mxu0 0
    %955 = vmatpush1.bf16.msra.mxu0 0
    %956 = vmatprep.subr.bf16.mxu0 0
    %957 = vmatpush1.bf16.msra.mxu0 0
    %958 = vmatprep.subr.bf16.mxu0 0
    %959 = vmatpush1.bf16.msra.mxu0 0
    %960 = vmatprep.subr.bf16.mxu0 0
    %961 = vmatpush1.bf16.msra.mxu0 0
    %962 = vmatprep.subr.bf16.mxu0 0
    %963 = vmatpush1.bf16.msra.mxu0 0
    %964 = vmatprep.subr.bf16.mxu0 0
    %965 = vmatpush1.bf16.msra.mxu0 0
    %966 = vmatprep.subr.bf16.mxu0 0
    %967 = vmatpush1.bf16.msra.mxu0 0
    %968 = vmatprep.subr.bf16.mxu0 0
    %969 = vmatpush1.bf16.msra.mxu0 0
    %970 = vmatprep.subr.bf16.mxu0 0
    %971 = vmatpush1.bf16.msra.mxu0 0
    %972 = vmatprep.subr.bf16.mxu0 0
    %973 = vmatpush1.bf16.msra.mxu0 0
    %974 = vmatprep.subr.bf16.mxu0 0
    %975 = vmatpush1.bf16.msra.mxu0 0
    %976 = vmatprep.subr.bf16.mxu0 0
    %977 = vmatpush1.bf16.msra.mxu0 0
    %978 = vmatprep.subr.bf16.mxu0 0
    %979 = vmatpush1.bf16.msra.mxu0 0
    %980 = vmatprep.subr.bf16.mxu0 0
    %981 = vmatpush1.bf16.msra.mxu0 0
    %982 = vmatprep.mubr.bf16.mxu0 0
    %983 = vmatmul.mubr.bf16.gmra.mrb[0].mxu0 %v948
    %v984 = vpop.f32.mrb[0].mxu0
    %v985 = vadd.f32 %v933, %v984
    %v986 = vpop.f32.mrb[0].mxu0
    %v987 = vpop.f32.mrb[0].mxu0
    %v988 = vadd.f32 %v933, %v987
    %v989 = vpop.f32.mrb[0].mxu0
    %990 = vdwg.mxu0
    %s991 = scalar_lea.vmem [#allocation2], 2
    %v992 = vld [vmem:[%s991] sm:$0x3]
    %s993 = scalar_lea.vmem [#allocation3], 2
    %v994 = vld [vmem:[%s993] sm:$0x3]
    %v995 = vpack.c.bf16 %v992, %v992
    %v1000 = vunpack.c.l.b16 %v923
    %v1001 = vunpack.c.l.b16 %v924
    %v1002 = vunpack.c.l.b16 %v925
    %v1003 = vunpack.c.l.b16 %v926
    %v1004 = vpack.c.b16 %v1001, %v1000
    %v1005 = vpack.c.b16 %v1003, %v1002
    %v1009 = vsel %vm246, %v995, 0
    %1011 = vmatprep.subr.bf16.mxu0 0
    %1012 = vmatpush1.bf16.msra.mxu0 %v1004
    %1013 = vmatprep.subr.bf16.mxu0 0
    %1014 = vmatpush1.bf16.msra.mxu0 %v1005
    %1015 = vmatprep.subr.bf16.mxu0 0
    %1016 = vmatpush1.bf16.msra.mxu0 0
    %1017 = vmatprep.subr.bf16.mxu0 0
    %1018 = vmatpush1.bf16.msra.mxu0 0
    %1019 = vmatprep.subr.bf16.mxu0 0
    %1020 = vmatpush1.bf16.msra.mxu0 0
    %1021 = vmatprep.subr.bf16.mxu0 0
    %1022 = vmatpush1.bf16.msra.mxu0 0
    %1023 = vmatprep.subr.bf16.mxu0 0
    %1024 = vmatpush1.bf16.msra.mxu0 0
    %1025 = vmatprep.subr.bf16.mxu0 0
    %1026 = vmatpush1.bf16.msra.mxu0 0
    %1027 = vmatprep.subr.bf16.mxu0 0
    %1028 = vmatpush1.bf16.msra.mxu0 0
    %1029 = vmatprep.subr.bf16.mxu0 0
    %1030 = vmatpush1.bf16.msra.mxu0 0
    %1031 = vmatprep.subr.bf16.mxu0 0
    %1032 = vmatpush1.bf16.msra.mxu0 0
    %1033 = vmatprep.subr.bf16.mxu0 0
    %1034 = vmatpush1.bf16.msra.mxu0 0
    %1035 = vmatprep.subr.bf16.mxu0 0
    %1036 = vmatpush1.bf16.msra.mxu0 0
    %1037 = vmatprep.subr.bf16.mxu0 0
    %1038 = vmatpush1.bf16.msra.mxu0 0
    %1039 = vmatprep.subr.bf16.mxu0 0
    %1040 = vmatpush1.bf16.msra.mxu0 0
    %1041 = vmatprep.subr.bf16.mxu0 0
    %1042 = vmatpush1.bf16.msra.mxu0 0
    %1043 = vmatprep.mubr.bf16.mxu0 0
    %1044 = vmatmul.mubr.bf16.gmra.mrb[0].mxu0 %v1009
    %v1045 = vpop.f32.mrb[0].mxu0
    %v1046 = vadd.f32 0.0, %v1045
    %v1047 = vpop.f32.mrb[0].mxu0
    %v1048 = vpop.f32.mrb[0].mxu0
    %v1049 = vpop.f32.mrb[0].mxu0
    %1050 = vdwg.mxu0
    %v1051 = vadd.f32 %v985, %v1046
    %v1052 = vmax.f32 %v1051, -30.0
    %v1053 = vsub.f32 0.0, %v1052
    %v1054 = vmul.f32 %v1053, 1.442695
    %v1055 = vpow.pop %v1054
    %v1056 = vadd.f32 %v1055, 1.0
    %v1057 = vrcp.pop %v1056
    %v1058 = vtanh.pop %v1051
    %1060 = vrot.lane.b32.xlu0 %v994, 32
    %v1061 = vpop.permute.xlu0 %1060
    %v1063 = vmul.f32 %v1057, %v1061
    %1065 = vrot.lane.b32.xlu0 %v1058, 64
    %v1066 = vpop.permute.xlu0 %1065
    %v1068 = vmul.f32 %v1057, %v1066
    %1070 = vrot.lane.b32.xlu0 %v1068, 32
    %v1071 = vpop.permute.xlu0 %1070
    %v1073 = vadd.f32 %v1063, %v1071
    %v1074 = vtanh.pop %v1073
    %1076 = vrot.lane.b32.xlu0 %v1074, 64
    %v1077 = vpop.permute.xlu0 %1076
    %v1079 = vmul.f32 %v1057, %v1077
    %1081 = vrot.lane.b32.xlu0 %v1079, 32
    %v1082 = vpop.permute.xlu0 %1081
    %1084 = vst.msk [vmem:[#allocation6] sm:$0x3] %vm323, %v1082
    %v1085 = vpack.c.bf16 %v1079, %v1079
    %1087 = vrot.lane.b32.xlu0 %v1085, 32
    %v1088 = vpop.permute.xlu0 %1087
    %v1090 = vsel %vm246, %v1088, 0
    %1092 = vmatprep.subr.bf16.mxu0 0
    %1093 = vmatpush1.bf16.msra.mxu0 %v1004
    %1094 = vmatprep.subr.bf16.mxu0 0
    %1095 = vmatpush1.bf16.msra.mxu0 %v1005
    %1096 = vmatprep.subr.bf16.mxu0 0
    %1097 = vmatpush1.bf16.msra.mxu0 0
    %1098 = vmatprep.subr.bf16.mxu0 0
    %1099 = vmatpush1.bf16.msra.mxu0 0
    %1100 = vmatprep.subr.bf16.mxu0 0
    %1101 = vmatpush1.bf16.msra.mxu0 0
    %1102 = vmatprep.subr.bf16.mxu0 0
    %1103 = vmatpush1.bf16.msra.mxu0 0
    %1104 = vmatprep.subr.bf16.mxu0 0
    %1105 = vmatpush1.bf16.msra.mxu0 0
    %1106 = vmatprep.subr.bf16.mxu0 0
    %1107 = vmatpush1.bf16.msra.mxu0 0
    %1108 = vmatprep.subr.bf16.mxu0 0
    %1109 = vmatpush1.bf16.msra.mxu0 0
    %1110 = vmatprep.subr.bf16.mxu0 0
    %1111 = vmatpush1.bf16.msra.mxu0 0
    %1112 = vmatprep.subr.bf16.mxu0 0
    %1113 = vmatpush1.bf16.msra.mxu0 0
    %1114 = vmatprep.subr.bf16.mxu0 0
    %1115 = vmatpush1.bf16.msra.mxu0 0
    %1116 = vmatprep.subr.bf16.mxu0 0
    %1117 = vmatpush1.bf16.msra.mxu0 0
    %1118 = vmatprep.subr.bf16.mxu0 0
    %1119 = vmatpush1.bf16.msra.mxu0 0
    %1120 = vmatprep.subr.bf16.mxu0 0
    %1121 = vmatpush1.bf16.msra.mxu0 0
    %1122 = vmatprep.subr.bf16.mxu0 0
    %1123 = vmatpush1.bf16.msra.mxu0 0
    %1124 = vmatprep.mubr.bf16.mxu0 0
    %1125 = vmatmul.mubr.bf16.gmra.mrb[0].mxu0 %v1090
    %v1126 = vpop.f32.mrb[0].mxu0
    %v1127 = vadd.f32 0.0, %v1126
    %v1128 = vpop.f32.mrb[0].mxu0
    %v1129 = vpop.f32.mrb[0].mxu0
    %v1130 = vpop.f32.mrb[0].mxu0
    %1131 = vdwg.mxu0
    %v1133 = vrot.slane %v1127, 6
    %v1135 = vadd.f32 %v985, %v1133
    %v1136 = vmax.f32 %v1135, -30.0
    %v1137 = vsub.f32 0.0, %v1136
    %v1138 = vmul.f32 %v1137, 1.442695
    %v1139 = vpow.pop %v1138
    %v1140 = vadd.f32 %v1139, 1.0
    %v1141 = vrcp.pop %v1140
    %v1142 = vtanh.pop %v1135
    %v1144 = vrot.slane %v1073, 6
    %v1146 = vmul.f32 %v1141, %v1144
    %1148 = vrot.lane.b32.xlu0 %v1142, 64
    %v1149 = vpop.permute.xlu0 %1148
    %v1151 = vmul.f32 %v1141, %v1149
    %1153 = vrot.lane.b32.xlu0 %v1151, 32
    %v1154 = vpop.permute.xlu0 %1153
    %v1156 = vadd.f32 %v1146, %v1154
    %v1157 = vtanh.pop %v1156
    %1159 = vrot.lane.b32.xlu0 %v1157, 64
    %v1160 = vpop.permute.xlu0 %1159
    %v1162 = vmul.f32 %v1141, %v1160
    %1164 = vrot.lane.b32.xlu0 %v1162, 32
    %v1165 = vpop.permute.xlu0 %1164
    %1167 = vst.msk [vmem:[#allocation6] sm:$0xc] %vm407, %v1165
    %v1168 = vpack.c.bf16 %v1162, %v1162
    %v1170 = vrot.slane %v1168, 1
    %1171 = vrot.lane.b32.xlu0 %v1170, 32
    %v1172 = vpop.permute.xlu0 %1171
    %v1174 = vsel %vm246, %v1172, 0
    %1176 = vmatprep.subr.bf16.mxu0 0
    %1177 = vmatpush1.bf16.msra.mxu0 %v1004
    %1178 = vmatprep.subr.bf16.mxu0 0
    %1179 = vmatpush1.bf16.msra.mxu0 %v1005
    %1180 = vmatprep.subr.bf16.mxu0 0
    %1181 = vmatpush1.bf16.msra.mxu0 0
    %1182 = vmatprep.subr.bf16.mxu0 0
    %1183 = vmatpush1.bf16.msra.mxu0 0
    %1184 = vmatprep.subr.bf16.mxu0 0
    %1185 = vmatpush1.bf16.msra.mxu0 0
    %1186 = vmatprep.subr.bf16.mxu0 0
    %1187 = vmatpush1.bf16.msra.mxu0 0
    %1188 = vmatprep.subr.bf16.mxu0 0
    %1189 = vmatpush1.bf16.msra.mxu0 0
    %1190 = vmatprep.subr.bf16.mxu0 0
    %1191 = vmatpush1.bf16.msra.mxu0 0
    %1192 = vmatprep.subr.bf16.mxu0 0
    %1193 = vmatpush1.bf16.msra.mxu0 0
    %1194 = vmatprep.subr.bf16.mxu0 0
    %1195 = vmatpush1.bf16.msra.mxu0 0
    %1196 = vmatprep.subr.bf16.mxu0 0
    %1197 = vmatpush1.bf16.msra.mxu0 0
    %1198 = vmatprep.subr.bf16.mxu0 0
    %1199 = vmatpush1.bf16.msra.mxu0 0
    %1200 = vmatprep.subr.bf16.mxu0 0
    %1201 = vmatpush1.bf16.msra.mxu0 0
    %1202 = vmatprep.subr.bf16.mxu0 0
    %1203 = vmatpush1.bf16.msra.mxu0 0
    %1204 = vmatprep.subr.bf16.mxu0 0
    %1205 = vmatpush1.bf16.msra.mxu0 0
    %1206 = vmatprep.subr.bf16.mxu0 0
    %1207 = vmatpush1.bf16.msra.mxu0 0
    %1208 = vmatprep.mubr.bf16.mxu0 0
    %1209 = vmatmul.mubr.bf16.gmra.mrb[0].mxu0 %v1174
    %v1210 = vpop.f32.mrb[0].mxu0
    %v1211 = vadd.f32 0.0, %v1210
    %v1212 = vpop.f32.mrb[0].mxu0
    %v1213 = vpop.f32.mrb[0].mxu0
    %v1214 = vpop.f32.mrb[0].mxu0
    %1215 = vdwg.mxu0
    %v1217 = vrot.slane %v1211, 4
    %v1219 = vadd.f32 %v985, %v1217
    %v1220 = vmax.f32 %v1219, -30.0
    %v1221 = vsub.f32 0.0, %v1220
    %v1222 = vmul.f32 %v1221, 1.442695
    %v1223 = vpow.pop %v1222
    %v1224 = vadd.f32 %v1223, 1.0
    %v1225 = vrcp.pop %v1224
    %v1226 = vtanh.pop %v1219
    %v1228 = vrot.slane %v1156, 6
    %v1230 = vmul.f32 %v1225, %v1228
    %1232 = vrot.lane.b32.xlu0 %v1226, 64
    %v1233 = vpop.permute.xlu0 %1232
    %v1235 = vmul.f32 %v1225, %v1233
    %1237 = vrot.lane.b32.xlu0 %v1235, 32
    %v1238 = vpop.permute.xlu0 %1237
    %v1240 = vadd.f32 %v1230, %v1238
    %v1241 = vtanh.pop %v1240
    %1243 = vrot.lane.b32.xlu0 %v1241, 64
    %v1244 = vpop.permute.xlu0 %1243
    %v1246 = vmul.f32 %v1225, %v1244
    %1248 = vrot.lane.b32.xlu0 %v1246, 32
    %v1249 = vpop.permute.xlu0 %1248
    %1251 = vst.msk [vmem:[#allocation6] sm:$0x30] %vm492, %v1249
    %v1252 = vpack.c.bf16 %v1246, %v1246
    %v1254 = vrot.slane %v1252, 2
    %1255 = vrot.lane.b32.xlu0 %v1254, 32
    %v1256 = vpop.permute.xlu0 %1255
    %v1258 = vsel %vm246, %v1256, 0
    %1260 = vmatprep.subr.bf16.mxu0 0
    %1261 = vmatpush1.bf16.msra.mxu0 %v1004
    %1262 = vmatprep.subr.bf16.mxu0 0
    %1263 = vmatpush1.bf16.msra.mxu0 %v1005
    %1264 = vmatprep.subr.bf16.mxu0 0
    %1265 = vmatpush1.bf16.msra.mxu0 0
    %1266 = vmatprep.subr.bf16.mxu0 0
    %1267 = vmatpush1.bf16.msra.mxu0 0
    %1268 = vmatprep.subr.bf16.mxu0 0
    %1269 = vmatpush1.bf16.msra.mxu0 0
    %1270 = vmatprep.subr.bf16.mxu0 0
    %1271 = vmatpush1.bf16.msra.mxu0 0
    %1272 = vmatprep.subr.bf16.mxu0 0
    %1273 = vmatpush1.bf16.msra.mxu0 0
    %1274 = vmatprep.subr.bf16.mxu0 0
    %1275 = vmatpush1.bf16.msra.mxu0 0
    %1276 = vmatprep.subr.bf16.mxu0 0
    %1277 = vmatpush1.bf16.msra.mxu0 0
    %1278 = vmatprep.subr.bf16.mxu0 0
    %1279 = vmatpush1.bf16.msra.mxu0 0
    %1280 = vmatprep.subr.bf16.mxu0 0
    %1281 = vmatpush1.bf16.msra.mxu0 0
    %1282 = vmatprep.subr.bf16.mxu0 0
    %1283 = vmatpush1.bf16.msra.mxu0 0
    %1284 = vmatprep.subr.bf16.mxu0 0
    %1285 = vmatpush1.bf16.msra.mxu0 0
    %1286 = vmatprep.subr.bf16.mxu0 0
    %1287 = vmatpush1.bf16.msra.mxu0 0
    %1288 = vmatprep.subr.bf16.mxu0 0
    %1289 = vmatpush1.bf16.msra.mxu0 0
    %1290 = vmatprep.subr.bf16.mxu0 0
    %1291 = vmatpush1.bf16.msra.mxu0 0
    %1292 = vmatprep.mubr.bf16.mxu0 0
    %1293 = vmatmul.mubr.bf16.gmra.mrb[0].mxu0 %v1258
    %v1294 = vpop.f32.mrb[0].mxu0
    %v1295 = vadd.f32 0.0, %v1294
    %v1296 = vpop.f32.mrb[0].mxu0
    %v1297 = vpop.f32.mrb[0].mxu0
    %v1298 = vpop.f32.mrb[0].mxu0
    %1299 = vdwg.mxu0
    %v1301 = vrot.slane %v1295, 2
    %v1303 = vadd.f32 %v985, %v1301
    %v1304 = vmax.f32 %v1303, -30.0
    %v1305 = vsub.f32 0.0, %v1304
    %v1306 = vmul.f32 %v1305, 1.442695
    %v1307 = vpow.pop %v1306
    %v1308 = vadd.f32 %v1307, 1.0
    %v1309 = vrcp.pop %v1308
    %v1310 = vtanh.pop %v1303
    %v1312 = vrot.slane %v1240, 6
    %v1314 = vmul.f32 %v1309, %v1312
    %1316 = vrot.lane.b32.xlu0 %v1310, 64
    %v1317 = vpop.permute.xlu0 %1316
    %v1319 = vmul.f32 %v1309, %v1317
    %1321 = vrot.lane.b32.xlu0 %v1319, 32
    %v1322 = vpop.permute.xlu0 %1321
    %v1324 = vadd.f32 %v1314, %v1322
    %v1325 = vtanh.pop %v1324
    %1327 = vrot.lane.b32.xlu0 %v1325, 64
    %v1328 = vpop.permute.xlu0 %1327
    %v1330 = vmul.f32 %v1309, %v1328
    %1332 = vrot.lane.b32.xlu0 %v1330, 32
    %v1333 = vpop.permute.xlu0 %1332
    %1335 = vst.msk [vmem:[#allocation6] sm:$0xc0] %vm577, %v1333
    %v1336 = vpack.c.bf16 %v1330, %v1330
    %v1338 = vrot.slane %v1336, 3
    %1339 = vrot.lane.b32.xlu0 %v1338, 32
    %v1340 = vpop.permute.xlu0 %1339
    %v1342 = vsel %vm246, %v1340, 0
    %1344 = vmatprep.subr.bf16.mxu0 0
    %1345 = vmatpush1.bf16.msra.mxu0 %v1004
    %1346 = vmatprep.subr.bf16.mxu0 0
    %1347 = vmatpush1.bf16.msra.mxu0 %v1005
    %1348 = vmatprep.subr.bf16.mxu0 0
    %1349 = vmatpush1.bf16.msra.mxu0 0
    %1350 = vmatprep.subr.bf16.mxu0 0
    %1351 = vmatpush1.bf16.msra.mxu0 0
    %1352 = vmatprep.subr.bf16.mxu0 0
    %1353 = vmatpush1.bf16.msra.mxu0 0
    %1354 = vmatprep.subr.bf16.mxu0 0
    %1355 = vmatpush1.bf16.msra.mxu0 0
    %1356 = vmatprep.subr.bf16.mxu0 0
    %1357 = vmatpush1.bf16.msra.mxu0 0
    %1358 = vmatprep.subr.bf16.mxu0 0
    %1359 = vmatpush1.bf16.msra.mxu0 0
    %1360 = vmatprep.subr.bf16.mxu0 0
    %1361 = vmatpush1.bf16.msra.mxu0 0
    %1362 = vmatprep.subr.bf16.mxu0 0
    %1363 = vmatpush1.bf16.msra.mxu0 0
    %1364 = vmatprep.subr.bf16.mxu0 0
    %1365 = vmatpush1.bf16.msra.mxu0 0
    %1366 = vmatprep.subr.bf16.mxu0 0
    %1367 = vmatpush1.bf16.msra.mxu0 0
    %1368 = vmatprep.subr.bf16.mxu0 0
    %1369 = vmatpush1.bf16.msra.mxu0 0
    %1370 = vmatprep.subr.bf16.mxu0 0
    %1371 = vmatpush1.bf16.msra.mxu0 0
    %1372 = vmatprep.subr.bf16.mxu0 0
    %1373 = vmatpush1.bf16.msra.mxu0 0
    %1374 = vmatprep.subr.bf16.mxu0 0
    %1375 = vmatpush1.bf16.msra.mxu0 0
    %1376 = vmatprep.mubr.bf16.mxu0 0
    %1377 = vmatmul.mubr.bf16.gmra.mrb[0].mxu0 %v1342
    %v1378 = vpop.f32.mrb[0].mxu0
    %v1379 = vadd.f32 0.0, %v1378
    %v1380 = vpop.f32.mrb[0].mxu0
    %v1381 = vpop.f32.mrb[0].mxu0
    %v1382 = vpop.f32.mrb[0].mxu0
    %1383 = vdwg.mxu0
    %v1384 = vadd.f32 %v988, %v1379
    %v1385 = vmax.f32 %v1384, -30.0
    %v1386 = vsub.f32 0.0, %v1385
    %v1387 = vmul.f32 %v1386, 1.442695
    %v1388 = vpow.pop %v1387
    %v1389 = vadd.f32 %v1388, 1.0
    %v1390 = vrcp.pop %v1389
    %v1391 = vtanh.pop %v1384
    %v1393 = vrot.slane %v1324, 6
    %v1395 = vmul.f32 %v1390, %v1393
    %1397 = vrot.lane.b32.xlu0 %v1391, 64
    %v1398 = vpop.permute.xlu0 %1397
    %v1400 = vmul.f32 %v1390, %v1398
    %1402 = vrot.lane.b32.xlu0 %v1400, 32
    %v1403 = vpop.permute.xlu0 %1402
    %v1405 = vadd.f32 %v1395, %v1403
    %v1406 = vtanh.pop %v1405
    %1408 = vrot.lane.b32.xlu0 %v1406, 64
    %v1409 = vpop.permute.xlu0 %1408
    %v1411 = vmul.f32 %v1390, %v1409
    %1413 = vrot.lane.b32.xlu0 %v1411, 32
    %v1414 = vpop.permute.xlu0 %1413
    %1416 = vst.msk [vmem:[#allocation6 + $0x8] sm:$0x3] %vm323, %v1414
    %v1417 = vpack.c.bf16 %v1411, %v1411
    %1419 = vrot.lane.b32.xlu0 %v1417, 32
    %v1420 = vpop.permute.xlu0 %1419
    %v1422 = vsel %vm246, %v1420, 0
    %1424 = vmatprep.subr.bf16.mxu0 0
    %1425 = vmatpush1.bf16.msra.mxu0 %v1004
    %1426 = vmatprep.subr.bf16.mxu0 0
    %1427 = vmatpush1.bf16.msra.mxu0 %v1005
    %1428 = vmatprep.subr.bf16.mxu0 0
    %1429 = vmatpush1.bf16.msra.mxu0 0
    %1430 = vmatprep.subr.bf16.mxu0 0
    %1431 = vmatpush1.bf16.msra.mxu0 0
    %1432 = vmatprep.subr.bf16.mxu0 0
    %1433 = vmatpush1.bf16.msra.mxu0 0
    %1434 = vmatprep.subr.bf16.mxu0 0
    %1435 = vmatpush1.bf16.msra.mxu0 0
    %1436 = vmatprep.subr.bf16.mxu0 0
    %1437 = vmatpush1.bf16.msra.mxu0 0
    %1438 = vmatprep.subr.bf16.mxu0 0
    %1439 = vmatpush1.bf16.msra.mxu0 0
    %1440 = vmatprep.subr.bf16.mxu0 0
    %1441 = vmatpush1.bf16.msra.mxu0 0
    %1442 = vmatprep.subr.bf16.mxu0 0
    %1443 = vmatpush1.bf16.msra.mxu0 0
    %1444 = vmatprep.subr.bf16.mxu0 0
    %1445 = vmatpush1.bf16.msra.mxu0 0
    %1446 = vmatprep.subr.bf16.mxu0 0
    %1447 = vmatpush1.bf16.msra.mxu0 0
    %1448 = vmatprep.subr.bf16.mxu0 0
    %1449 = vmatpush1.bf16.msra.mxu0 0
    %1450 = vmatprep.subr.bf16.mxu0 0
    %1451 = vmatpush1.bf16.msra.mxu0 0
    %1452 = vmatprep.subr.bf16.mxu0 0
    %1453 = vmatpush1.bf16.msra.mxu0 0
    %1454 = vmatprep.subr.bf16.mxu0 0
    %1455 = vmatpush1.bf16.msra.mxu0 0
    %1456 = vmatprep.mubr.bf16.mxu0 0
    %1457 = vmatmul.mubr.bf16.gmra.mrb[0].mxu0 %v1422
    %v1458 = vpop.f32.mrb[0].mxu0
    %v1459 = vadd.f32 0.0, %v1458
    %v1460 = vpop.f32.mrb[0].mxu0
    %v1461 = vpop.f32.mrb[0].mxu0
    %v1462 = vpop.f32.mrb[0].mxu0
    %1463 = vdwg.mxu0
    %v1465 = vrot.slane %v1459, 6
    %v1467 = vadd.f32 %v988, %v1465
    %v1468 = vmax.f32 %v1467, -30.0
    %v1469 = vsub.f32 0.0, %v1468
    %v1470 = vmul.f32 %v1469, 1.442695
    %v1471 = vpow.pop %v1470
    %v1472 = vadd.f32 %v1471, 1.0
    %v1473 = vrcp.pop %v1472
    %v1474 = vtanh.pop %v1467
    %v1476 = vrot.slane %v1405, 6
    %v1478 = vmul.f32 %v1473, %v1476
    %1480 = vrot.lane.b32.xlu0 %v1474, 64
    %v1481 = vpop.permute.xlu0 %1480
    %v1483 = vmul.f32 %v1473, %v1481
    %1485 = vrot.lane.b32.xlu0 %v1483, 32
    %v1486 = vpop.permute.xlu0 %1485
    %v1488 = vadd.f32 %v1478, %v1486
    %v1489 = vtanh.pop %v1488
    %1491 = vrot.lane.b32.xlu0 %v1489, 64
    %v1492 = vpop.permute.xlu0 %1491
    %v1494 = vmul.f32 %v1473, %v1492
    %1496 = vrot.lane.b32.xlu0 %v1494, 32
    %v1497 = vpop.permute.xlu0 %1496
    %1499 = vst.msk [vmem:[#allocation6 + $0x8] sm:$0xc] %vm407, %v1497
    %v1500 = vpack.c.bf16 %v1494, %v1494
    %v1502 = vrot.slane %v1500, 1
    %1503 = vrot.lane.b32.xlu0 %v1502, 32
    %v1504 = vpop.permute.xlu0 %1503
    %v1506 = vsel %vm246, %v1504, 0
    %1508 = vmatprep.subr.bf16.mxu0 0
    %1509 = vmatpush1.bf16.msra.mxu0 %v1004
    %1510 = vmatprep.subr.bf16.mxu0 0
    %1511 = vmatpush1.bf16.msra.mxu0 %v1005
    %1512 = vmatprep.subr.bf16.mxu0 0
    %1513 = vmatpush1.bf16.msra.mxu0 0
    %1514 = vmatprep.subr.bf16.mxu0 0
    %1515 = vmatpush1.bf16.msra.mxu0 0
    %1516 = vmatprep.subr.bf16.mxu0 0
    %1517 = vmatpush1.bf16.msra.mxu0 0
    %1518 = vmatprep.subr.bf16.mxu0 0
    %1519 = vmatpush1.bf16.msra.mxu0 0
    %1520 = vmatprep.subr.bf16.mxu0 0
    %1521 = vmatpush1.bf16.msra.mxu0 0
    %1522 = vmatprep.subr.bf16.mxu0 0
    %1523 = vmatpush1.bf16.msra.mxu0 0
    %1524 = vmatprep.subr.bf16.mxu0 0
    %1525 = vmatpush1.bf16.msra.mxu0 0
    %1526 = vmatprep.subr.bf16.mxu0 0
    %1527 = vmatpush1.bf16.msra.mxu0 0
    %1528 = vmatprep.subr.bf16.mxu0 0
    %1529 = vmatpush1.bf16.msra.mxu0 0
    %1530 = vmatprep.subr.bf16.mxu0 0
    %1531 = vmatpush1.bf16.msra.mxu0 0
    %1532 = vmatprep.subr.bf16.mxu0 0
    %1533 = vmatpush1.bf16.msra.mxu0 0
    %1534 = vmatprep.subr.bf16.mxu0 0
    %1535 = vmatpush1.bf16.msra.mxu0 0
    %1536 = vmatprep.subr.bf16.mxu0 0
    %1537 = vmatpush1.bf16.msra.mxu0 0
    %1538 = vmatprep.subr.bf16.mxu0 0
    %1539 = vmatpush1.bf16.msra.mxu0 0
    %1540 = vmatprep.mubr.bf16.mxu0 0
    %1541 = vmatmul.mubr.bf16.gmra.mrb[0].mxu0 %v1506
    %v1542 = vpop.f32.mrb[0].mxu0
    %v1543 = vadd.f32 0.0, %v1542
    %v1544 = vpop.f32.mrb[0].mxu0
    %v1545 = vpop.f32.mrb[0].mxu0
    %v1546 = vpop.f32.mrb[0].mxu0
    %1547 = vdwg.mxu0
    %v1549 = vrot.slane %v1543, 4
    %v1551 = vadd.f32 %v988, %v1549
    %v1552 = vmax.f32 %v1551, -30.0
    %v1553 = vsub.f32 0.0, %v1552
    %v1554 = vmul.f32 %v1553, 1.442695
    %v1555 = vpow.pop %v1554
    %v1556 = vadd.f32 %v1555, 1.0
    %v1557 = vrcp.pop %v1556
    %v1558 = vtanh.pop %v1551
    %v1560 = vrot.slane %v1488, 6
    %v1562 = vmul.f32 %v1557, %v1560
    %1564 = vrot.lane.b32.xlu0 %v1558, 64
    %v1565 = vpop.permute.xlu0 %1564
    %v1567 = vmul.f32 %v1557, %v1565
    %1569 = vrot.lane.b32.xlu0 %v1567, 32
    %v1570 = vpop.permute.xlu0 %1569
    %v1572 = vadd.f32 %v1562, %v1570
    %v1573 = vtanh.pop %v1572
    %1575 = vrot.lane.b32.xlu0 %v1573, 64
    %v1576 = vpop.permute.xlu0 %1575
    %v1578 = vmul.f32 %v1557, %v1576
    %1580 = vrot.lane.b32.xlu0 %v1578, 32
    %v1581 = vpop.permute.xlu0 %1580
    %1583 = vst.msk [vmem:[#allocation6 + $0x8] sm:$0x30] %vm492, %v1581
    %v1584 = vpack.c.bf16 %v1578, %v1578
    %v1586 = vrot.slane %v1584, 2
    %1587 = vrot.lane.b32.xlu0 %v1586, 32
    %v1588 = vpop.permute.xlu0 %1587
    %v1590 = vsel %vm246, %v1588, 0
    %1592 = vmatprep.subr.bf16.mxu0 0
    %1593 = vmatpush1.bf16.msra.mxu0 %v1004
    %1594 = vmatprep.subr.bf16.mxu0 0
    %1595 = vmatpush1.bf16.msra.mxu0 %v1005
    %1596 = vmatprep.subr.bf16.mxu0 0
    %1597 = vmatpush1.bf16.msra.mxu0 0
    %1598 = vmatprep.subr.bf16.mxu0 0
    %1599 = vmatpush1.bf16.msra.mxu0 0
    %1600 = vmatprep.subr.bf16.mxu0 0
    %1601 = vmatpush1.bf16.msra.mxu0 0
    %1602 = vmatprep.subr.bf16.mxu0 0
    %1603 = vmatpush1.bf16.msra.mxu0 0
    %1604 = vmatprep.subr.bf16.mxu0 0
    %1605 = vmatpush1.bf16.msra.mxu0 0
    %1606 = vmatprep.subr.bf16.mxu0 0
    %1607 = vmatpush1.bf16.msra.mxu0 0
    %1608 = vmatprep.subr.bf16.mxu0 0
    %1609 = vmatpush1.bf16.msra.mxu0 0
    %1610 = vmatprep.subr.bf16.mxu0 0
    %1611 = vmatpush1.bf16.msra.mxu0 0
    %1612 = vmatprep.subr.bf16.mxu0 0
    %1613 = vmatpush1.bf16.msra.mxu0 0
    %1614 = vmatprep.subr.bf16.mxu0 0
    %1615 = vmatpush1.bf16.msra.mxu0 0
    %1616 = vmatprep.subr.bf16.mxu0 0
    %1617 = vmatpush1.bf16.msra.mxu0 0
    %1618 = vmatprep.subr.bf16.mxu0 0
    %1619 = vmatpush1.bf16.msra.mxu0 0
    %1620 = vmatprep.subr.bf16.mxu0 0
    %1621 = vmatpush1.bf16.msra.mxu0 0
    %1622 = vmatprep.subr.bf16.mxu0 0
    %1623 = vmatpush1.bf16.msra.mxu0 0
    %1624 = vmatprep.mubr.bf16.mxu0 0
    %1625 = vmatmul.mubr.bf16.gmra.mrb[0].mxu0 %v1590
    %v1626 = vpop.f32.mrb[0].mxu0
    %v1627 = vadd.f32 0.0, %v1626
    %v1628 = vpop.f32.mrb[0].mxu0
    %v1629 = vpop.f32.mrb[0].mxu0
    %v1630 = vpop.f32.mrb[0].mxu0
    %1631 = vdwg.mxu0
    %v1633 = vrot.slane %v1627, 2
    %v1635 = vadd.f32 %v988, %v1633
    %v1636 = vmax.f32 %v1635, -30.0
    %v1637 = vsub.f32 0.0, %v1636
    %v1638 = vmul.f32 %v1637, 1.442695
    %v1639 = vpow.pop %v1638
    %v1640 = vadd.f32 %v1639, 1.0
    %v1641 = vrcp.pop %v1640
    %v1642 = vtanh.pop %v1635
    %v1644 = vrot.slane %v1572, 6
    %v1646 = vmul.f32 %v1641, %v1644
    %1648 = vrot.lane.b32.xlu0 %v1642, 64
    %v1649 = vpop.permute.xlu0 %1648
    %v1651 = vmul.f32 %v1641, %v1649
    %1653 = vrot.lane.b32.xlu0 %v1651, 32
    %v1654 = vpop.permute.xlu0 %1653
    %v1656 = vadd.f32 %v1646, %v1654
    %v1657 = vtanh.pop %v1656
    %1659 = vrot.lane.b32.xlu0 %v1657, 64
    %v1660 = vpop.permute.xlu0 %1659
    %v1662 = vmul.f32 %v1641, %v1660
    %1664 = vrot.lane.b32.xlu0 %v1662, 32
    %v1665 = vpop.permute.xlu0 %1664
    %1667 = vst.msk [vmem:[#allocation6 + $0x8] sm:$0xc0] %vm577, %v1665
    %1668 = vst.msk [vmem:[%s991 - $0x6] sm:$0xc0] %vm577, %v1665
    %1670 = vrot.lane.b32.xlu0 %v1656, 96
    %v1671 = vpop.permute.xlu0 %1670
    %1673 = vst.msk [vmem:[%s993 - $0x6] sm:$0xc0] %vm577, %v1671
    %v1674 = vld [vmem:[#allocation6] sm:$0xff]
    %v1675 = vld [vmem:[#allocation6 + $0x8] sm:$0xff]
    %v1676 = vpack.c.bf16 %v1675, %v1674
    %v1677 = vld [vmem:[%s14] sm:$0xf]
    %v1678 = vld [vmem:[%s14 + $0x4] sm:$0xf]
    %v1679 = vld [vmem:[%s14 + $0x8] sm:$0xf]
    %v1680 = vld [vmem:[%s14 + $0xc] sm:$0xf]
    %v1681 = vld [vmem:[%s15] sm:$0x1]
    %v1683 = vlaneseq
    %v1684 = vshrl.u32 %v1683, 7
    %v1685 = vsub.s32 0, %v1684
    %v1686 = vrot.slane %v1681, %v1685
    %v1692 = vunpack.c.l.b16 %v1677
    %v1693 = vunpack.c.l.b16 %v1678
    %v1694 = vunpack.c.l.b16 %v1679
    %v1695 = vunpack.c.l.b16 %v1680
    %v1696 = vpack.c.b16 %v1693, %v1692
    %v1697 = vpack.c.b16 %v1695, %v1694
    %v1701 = vsel %vm246, %v1676, 0
    %1703 = vmatprep.subr.bf16.mxu0 0
    %1704 = vmatpush1.bf16.msra.mxu0 %v1696
    %1705 = vmatprep.subr.bf16.mxu0 0
    %1706 = vmatpush1.bf16.msra.mxu0 %v1697
    %1707 = vmatprep.subr.bf16.mxu0 0
    %1708 = vmatpush1.bf16.msra.mxu0 0
    %1709 = vmatprep.subr.bf16.mxu0 0
    %1710 = vmatpush1.bf16.msra.mxu0 0
    %1711 = vmatprep.subr.bf16.mxu0 0
    %1712 = vmatpush1.bf16.msra.mxu0 0
    %1713 = vmatprep.subr.bf16.mxu0 0
    %1714 = vmatpush1.bf16.msra.mxu0 0
    %1715 = vmatprep.subr.bf16.mxu0 0
    %1716 = vmatpush1.bf16.msra.mxu0 0
    %1717 = vmatprep.subr.bf16.mxu0 0
    %1718 = vmatpush1.bf16.msra.mxu0 0
    %1719 = vmatprep.subr.bf16.mxu0 0
    %1720 = vmatpush1.bf16.msra.mxu0 0
    %1721 = vmatprep.subr.bf16.mxu0 0
    %1722 = vmatpush1.bf16.msra.mxu0 0
    %1723 = vmatprep.subr.bf16.mxu0 0
    %1724 = vmatpush1.bf16.msra.mxu0 0
    %1725 = vmatprep.subr.bf16.mxu0 0
    %1726 = vmatpush1.bf16.msra.mxu0 0
    %1727 = vmatprep.subr.bf16.mxu0 0
    %1728 = vmatpush1.bf16.msra.mxu0 0
    %1729 = vmatprep.subr.bf16.mxu0 0
    %1730 = vmatpush1.bf16.msra.mxu0 0
    %1731 = vmatprep.subr.bf16.mxu0 0
    %1732 = vmatpush1.bf16.msra.mxu0 0
    %1733 = vmatprep.subr.bf16.mxu0 0
    %1734 = vmatpush1.bf16.msra.mxu0 0
    %1735 = vmatprep.mubr.bf16.mxu0 0
    %1736 = vmatmul.mubr.bf16.gmra.mrb[0].mxu0 %v1701
    %v1737 = vpop.f32.mrb[0].mxu0
    %v1738 = vadd.f32 %v1686, %v1737
    %v1739 = vpop.f32.mrb[0].mxu0
    %v1740 = vpop.f32.mrb[0].mxu0
    %v1741 = vadd.f32 %v1686, %v1740
    %v1742 = vpop.f32.mrb[0].mxu0
    %1743 = vdwg.mxu0
    %v1744 = vmul.f32 %v1738, 0.5
    %v1745 = vmul.f32 %v1741, 0.5
    %v1746 = vmul.f32 %v1744, 1.442695
    %v1747 = vpow.pop %v1746
    %v1748 = vmul.f32 %v1745, 1.442695
    %v1749 = vpow.pop %v1748
    %v1750 = vld [vmem:[#allocation7] sm:$0xff]
    %v1751 = vld [vmem:[#allocation7 + $0x8] sm:$0xff]
    %1754 = vrot.lane.b32.xlu0 %v1747, 112
    %v1755 = vpop.permute.xlu0 %1754
    %1756 = vrot.lane.b32.xlu0 %v1749, 112
    %v1757 = vpop.permute.xlu0 %1756
    %v1760 = vmul.f32 %v1750, %v1755
    %v1761 = vmul.f32 %v1751, %v1757
    %v1762 = vadd.f32 %v1760, %v1738
    %v1763 = vadd.f32 %v1761, %v1741
    %vm1764 = vcmask 130048
    %1765 = vst.msk [vmem:[#allocation19] sm:$0xff] %vm1764, %v1738
    %1766 = vst.msk [vmem:[#allocation19 + $0x8] sm:$0xff] %vm1764, %v1741
    %1767 = vst.msk [vmem:[#allocation20] sm:$0xff] %vm1764, %v1755
    %1768 = vst.msk [vmem:[#allocation20 + $0x8] sm:$0xff] %vm1764, %v1757
    %1769 = vst.msk [vmem:[#allocation22] sm:$0xff] %vm1764, %v1762
    %1770 = vst.msk [vmem:[#allocation22 + $0x8] sm:$0xff] %vm1764, %v1763
    %v1771 = vld [vmem:[%s8] sm:$0xf]
    %v1772 = vld [vmem:[%s8 + $0x4] sm:$0xf]
    %v1773 = vld [vmem:[%s9] sm:$0xf]
    %v1774 = vld [vmem:[%s9 + $0x4] sm:$0xf]
    %v1775 = vld [vmem:[%s9 + $0x8] sm:$0xf]
    %v1776 = vld [vmem:[%s9 + $0xc] sm:$0xf]
    %v1777 = vld [vmem:[#allocation18] sm:$0x1]
    %v1778 = vpack.c.bf16 %v1763, %v1762
    %v1780 = vlaneseq
    %v1781 = vshrl.u32 %v1780, 7
    %v1782 = vsub.s32 0, %v1781
    %v1783 = vrot.slane %v1777, %v1782
    %v1787 = vunpack.c.l.b16 %v1771
    %v1788 = vunpack.c.l.b16 %v1772
    %v1789 = vpack.c.b16 %v1788, %v1787
    %v1792 = vsel %vm1764, %v1778, 0
    %1794 = vmatprep.subr.bf16.mxu0 0
    %1795 = vmatpush1.bf16.msra.mxu0 %v1789
    %1796 = vmatprep.subr.bf16.mxu0 0
    %1797 = vmatpush1.bf16.msra.mxu0 0
    %1798 = vmatprep.subr.bf16.mxu0 0
    %1799 = vmatpush1.bf16.msra.mxu0 0
    %1800 = vmatprep.subr.bf16.mxu0 0
    %1801 = vmatpush1.bf16.msra.mxu0 0
    %1802 = vmatprep.subr.bf16.mxu0 0
    %1803 = vmatpush1.bf16.msra.mxu0 0
    %1804 = vmatprep.subr.bf16.mxu0 0
    %1805 = vmatpush1.bf16.msra.mxu0 0
    %1806 = vmatprep.subr.bf16.mxu0 0
    %1807 = vmatpush1.bf16.msra.mxu0 0
    %1808 = vmatprep.subr.bf16.mxu0 0
    %1809 = vmatpush1.bf16.msra.mxu0 0
    %1810 = vmatprep.subr.bf16.mxu0 0
    %1811 = vmatpush1.bf16.msra.mxu0 0
    %1812 = vmatprep.subr.bf16.mxu0 0
    %1813 = vmatpush1.bf16.msra.mxu0 0
    %1814 = vmatprep.subr.bf16.mxu0 0
    %1815 = vmatpush1.bf16.msra.mxu0 0
    %1816 = vmatprep.subr.bf16.mxu0 0
    %1817 = vmatpush1.bf16.msra.mxu0 0
    %1818 = vmatprep.subr.bf16.mxu0 0
    %1819 = vmatpush1.bf16.msra.mxu0 0
    %1820 = vmatprep.subr.bf16.mxu0 0
    %1821 = vmatpush1.bf16.msra.mxu0 0
    %1822 = vmatprep.subr.bf16.mxu0 0
    %1823 = vmatpush1.bf16.msra.mxu0 0
    %1824 = vmatprep.subr.bf16.mxu0 0
    %1825 = vmatpush1.bf16.msra.mxu0 0
    %1826 = vmatprep.mubr.bf16.mxu0 0
    %1827 = vmatmul.mubr.bf16.gmra.mrb[0].mxu0 %v1792
    %v1828 = vpop.f32.mrb[0].mxu0
    %v1829 = vadd.f32 %v1783, %v1828
    %v1830 = vpop.f32.mrb[0].mxu0
    %v1831 = vpop.f32.mrb[0].mxu0
    %v1832 = vadd.f32 %v1783, %v1831
    %v1833 = vpop.f32.mrb[0].mxu0
    %1834 = vdwg.mxu0
    %v1835 = vld [vmem:[#allocation4] sm:$0x3]
    %v1836 = vld [vmem:[#allocation5] sm:$0x3]
    %v1837 = vpack.c.bf16 %v1835, %v1835
    %v1842 = vunpack.c.l.b16 %v1773
    %v1843 = vunpack.c.l.b16 %v1774
    %v1844 = vunpack.c.l.b16 %v1775
    %v1845 = vunpack.c.l.b16 %v1776
    %v1846 = vpack.c.b16 %v1843, %v1842
    %v1847 = vpack.c.b16 %v1845, %v1844
    %v1851 = vsel %vm246, %v1837, 0
    %1853 = vmatprep.subr.bf16.mxu0 0
    %1854 = vmatpush1.bf16.msra.mxu0 %v1846
    %1855 = vmatprep.subr.bf16.mxu0 0
    %1856 = vmatpush1.bf16.msra.mxu0 %v1847
    %1857 = vmatprep.subr.bf16.mxu0 0
    %1858 = vmatpush1.bf16.msra.mxu0 0
    %1859 = vmatprep.subr.bf16.mxu0 0
    %1860 = vmatpush1.bf16.msra.mxu0 0
    %1861 = vmatprep.subr.bf16.mxu0 0
    %1862 = vmatpush1.bf16.msra.mxu0 0
    %1863 = vmatprep.subr.bf16.mxu0 0
    %1864 = vmatpush1.bf16.msra.mxu0 0
    %1865 = vmatprep.subr.bf16.mxu0 0
    %1866 = vmatpush1.bf16.msra.mxu0 0
    %1867 = vmatprep.subr.bf16.mxu0 0
    %1868 = vmatpush1.bf16.msra.mxu0 0
    %1869 = vmatprep.subr.bf16.mxu0 0
    %1870 = vmatpush1.bf16.msra.mxu0 0
    %1871 = vmatprep.subr.bf16.mxu0 0
    %1872 = vmatpush1.bf16.msra.mxu0 0
    %1873 = vmatprep.subr.bf16.mxu0 0
    %1874 = vmatpush1.bf16.msra.mxu0 0
    %1875 = vmatprep.subr.bf16.mxu0 0
    %1876 = vmatpush1.bf16.msra.mxu0 0
    %1877 = vmatprep.subr.bf16.mxu0 0
    %1878 = vmatpush1.bf16.msra.mxu0 0
    %1879 = vmatprep.subr.bf16.mxu0 0
    %1880 = vmatpush1.bf16.msra.mxu0 0
    %1881 = vmatprep.subr.bf16.mxu0 0
    %1882 = vmatpush1.bf16.msra.mxu0 0
    %1883 = vmatprep.subr.bf16.mxu0 0
    %1884 = vmatpush1.bf16.msra.mxu0 0
    %1885 = vmatprep.mubr.bf16.mxu0 0
    %1886 = vmatmul.mubr.bf16.gmra.mrb[0].mxu0 %v1851
    %v1887 = vpop.f32.mrb[0].mxu0
    %v1888 = vadd.f32 0.0, %v1887
    %v1889 = vpop.f32.mrb[0].mxu0
    %v1890 = vpop.f32.mrb[0].mxu0
    %v1891 = vpop.f32.mrb[0].mxu0
    %1892 = vdwg.mxu0
    %v1893 = vadd.f32 %v1829, %v1888
    %v1894 = vmax.f32 %v1893, -30.0
    %v1895 = vsub.f32 0.0, %v1894
    %v1896 = vmul.f32 %v1895, 1.442695
    %v1897 = vpow.pop %v1896
    %v1898 = vadd.f32 %v1897, 1.0
    %v1899 = vrcp.pop %v1898
    %v1900 = vtanh.pop %v1893
    %1902 = vrot.lane.b32.xlu0 %v1836, 32
    %v1903 = vpop.permute.xlu0 %1902
    %v1905 = vmul.f32 %v1899, %v1903
    %1907 = vrot.lane.b32.xlu0 %v1900, 64
    %v1908 = vpop.permute.xlu0 %1907
    %v1910 = vmul.f32 %v1899, %v1908
    %1912 = vrot.lane.b32.xlu0 %v1910, 32
    %v1913 = vpop.permute.xlu0 %1912
    %v1915 = vadd.f32 %v1905, %v1913
    %v1916 = vtanh.pop %v1915
    %1918 = vrot.lane.b32.xlu0 %v1916, 64
    %v1919 = vpop.permute.xlu0 %1918
    %v1921 = vmul.f32 %v1899, %v1919
    %1923 = vrot.lane.b32.xlu0 %v1921, 32
    %v1924 = vpop.permute.xlu0 %1923
    %1926 = vst.msk [vmem:[#allocation6] sm:$0x3] %vm323, %v1924
    %v1927 = vpack.c.bf16 %v1921, %v1921
    %1929 = vrot.lane.b32.xlu0 %v1927, 32
    %v1930 = vpop.permute.xlu0 %1929
    %v1932 = vsel %vm246, %v1930, 0
    %1934 = vmatprep.subr.bf16.mxu0 0
    %1935 = vmatpush1.bf16.msra.mxu0 %v1846
    %1936 = vmatprep.subr.bf16.mxu0 0
    %1937 = vmatpush1.bf16.msra.mxu0 %v1847
    %1938 = vmatprep.subr.bf16.mxu0 0
    %1939 = vmatpush1.bf16.msra.mxu0 0
    %1940 = vmatprep.subr.bf16.mxu0 0
    %1941 = vmatpush1.bf16.msra.mxu0 0
    %1942 = vmatprep.subr.bf16.mxu0 0
    %1943 = vmatpush1.bf16.msra.mxu0 0
    %1944 = vmatprep.subr.bf16.mxu0 0
    %1945 = vmatpush1.bf16.msra.mxu0 0
    %1946 = vmatprep.subr.bf16.mxu0 0
    %1947 = vmatpush1.bf16.msra.mxu0 0
    %1948 = vmatprep.subr.bf16.mxu0 0
    %1949 = vmatpush1.bf16.msra.mxu0 0
    %1950 = vmatprep.subr.bf16.mxu0 0
    %1951 = vmatpush1.bf16.msra.mxu0 0
    %1952 = vmatprep.subr.bf16.mxu0 0
    %1953 = vmatpush1.bf16.msra.mxu0 0
    %1954 = vmatprep.subr.bf16.mxu0 0
    %1955 = vmatpush1.bf16.msra.mxu0 0
    %1956 = vmatprep.subr.bf16.mxu0 0
    %1957 = vmatpush1.bf16.msra.mxu0 0
    %1958 = vmatprep.subr.bf16.mxu0 0
    %1959 = vmatpush1.bf16.msra.mxu0 0
    %1960 = vmatprep.subr.bf16.mxu0 0
    %1961 = vmatpush1.bf16.msra.mxu0 0
    %1962 = vmatprep.subr.bf16.mxu0 0
    %1963 = vmatpush1.bf16.msra.mxu0 0
    %1964 = vmatprep.subr.bf16.mxu0 0
    %1965 = vmatpush1.bf16.msra.mxu0 0
    %1966 = vmatprep.mubr.bf16.mxu0 0
    %1967 = vmatmul.mubr.bf16.gmra.mrb[0].mxu0 %v1932
    %v1968 = vpop.f32.mrb[0].mxu0
    %v1969 = vadd.f32 0.0, %v1968
    %v1970 = vpop.f32.mrb[0].mxu0
    %v1971 = vpop.f32.mrb[0].mxu0
    %v1972 = vpop.f32.mrb[0].mxu0
    %1973 = vdwg.mxu0
    %v1975 = vrot.slane %v1969, 6
    %v1977 = vadd.f32 %v1829, %v1975
    %v1978 = vmax.f32 %v1977, -30.0
    %v1979 = vsub.f32 0.0, %v1978
    %v1980 = vmul.f32 %v1979, 1.442695
    %v1981 = vpow.pop %v1980
    %v1982 = vadd.f32 %v1981, 1.0
    %v1983 = vrcp.pop %v1982
    %v1984 = vtanh.pop %v1977
    %v1986 = vrot.slane %v1915, 6
    %v1988 = vmul.f32 %v1983, %v1986
    %1990 = vrot.lane.b32.xlu0 %v1984, 64
    %v1991 = vpop.permute.xlu0 %1990
    %v1993 = vmul.f32 %v1983, %v1991
    %1995 = vrot.lane.b32.xlu0 %v1993, 32
    %v1996 = vpop.permute.xlu0 %1995
    %v1998 = vadd.f32 %v1988, %v1996
    %v1999 = vtanh.pop %v1998
    %2001 = vrot.lane.b32.xlu0 %v1999, 64
    %v2002 = vpop.permute.xlu0 %2001
    %v2004 = vmul.f32 %v1983, %v2002
    %2006 = vrot.lane.b32.xlu0 %v2004, 32
    %v2007 = vpop.permute.xlu0 %2006
    %2009 = vst.msk [vmem:[#allocation6] sm:$0xc] %vm407, %v2007
    %v2010 = vpack.c.bf16 %v2004, %v2004
    %v2012 = vrot.slane %v2010, 1
    %2013 = vrot.lane.b32.xlu0 %v2012, 32
    %v2014 = vpop.permute.xlu0 %2013
    %v2016 = vsel %vm246, %v2014, 0
    %2018 = vmatprep.subr.bf16.mxu0 0
    %2019 = vmatpush1.bf16.msra.mxu0 %v1846
    %2020 = vmatprep.subr.bf16.mxu0 0
    %2021 = vmatpush1.bf16.msra.mxu0 %v1847
    %2022 = vmatprep.subr.bf16.mxu0 0
    %2023 = vmatpush1.bf16.msra.mxu0 0
    %2024 = vmatprep.subr.bf16.mxu0 0
    %2025 = vmatpush1.bf16.msra.mxu0 0
    %2026 = vmatprep.subr.bf16.mxu0 0
    %2027 = vmatpush1.bf16.msra.mxu0 0
    %2028 = vmatprep.subr.bf16.mxu0 0
    %2029 = vmatpush1.bf16.msra.mxu0 0
    %2030 = vmatprep.subr.bf16.mxu0 0
    %2031 = vmatpush1.bf16.msra.mxu0 0
    %2032 = vmatprep.subr.bf16.mxu0 0
    %2033 = vmatpush1.bf16.msra.mxu0 0
    %2034 = vmatprep.subr.bf16.mxu0 0
    %2035 = vmatpush1.bf16.msra.mxu0 0
    %2036 = vmatprep.subr.bf16.mxu0 0
    %2037 = vmatpush1.bf16.msra.mxu0 0
    %2038 = vmatprep.subr.bf16.mxu0 0
    %2039 = vmatpush1.bf16.msra.mxu0 0
    %2040 = vmatprep.subr.bf16.mxu0 0
    %2041 = vmatpush1.bf16.msra.mxu0 0
    %2042 = vmatprep.subr.bf16.mxu0 0
    %2043 = vmatpush1.bf16.msra.mxu0 0
    %2044 = vmatprep.subr.bf16.mxu0 0
    %2045 = vmatpush1.bf16.msra.mxu0 0
    %2046 = vmatprep.subr.bf16.mxu0 0
    %2047 = vmatpush1.bf16.msra.mxu0 0
    %2048 = vmatprep.subr.bf16.mxu0 0
    %2049 = vmatpush1.bf16.msra.mxu0 0
    %2050 = vmatprep.mubr.bf16.mxu0 0
    %2051 = vmatmul.mubr.bf16.gmra.mrb[0].mxu0 %v2016
    %v2052 = vpop.f32.mrb[0].mxu0
    %v2053 = vadd.f32 0.0, %v2052
    %v2054 = vpop.f32.mrb[0].mxu0
    %v2055 = vpop.f32.mrb[0].mxu0
    %v2056 = vpop.f32.mrb[0].mxu0
    %2057 = vdwg.mxu0
    %v2059 = vrot.slane %v2053, 4
    %v2061 = vadd.f32 %v1829, %v2059
    %v2062 = vmax.f32 %v2061, -30.0
    %v2063 = vsub.f32 0.0, %v2062
    %v2064 = vmul.f32 %v2063, 1.442695
    %v2065 = vpow.pop %v2064
    %v2066 = vadd.f32 %v2065, 1.0
    %v2067 = vrcp.pop %v2066
    %v2068 = vtanh.pop %v2061
    %v2070 = vrot.slane %v1998, 6
    %v2072 = vmul.f32 %v2067, %v2070
    %2074 = vrot.lane.b32.xlu0 %v2068, 64
    %v2075 = vpop.permute.xlu0 %2074
    %v2077 = vmul.f32 %v2067, %v2075
    %2079 = vrot.lane.b32.xlu0 %v2077, 32
    %v2080 = vpop.permute.xlu0 %2079
    %v2082 = vadd.f32 %v2072, %v2080
    %v2083 = vtanh.pop %v2082
    %2085 = vrot.lane.b32.xlu0 %v2083, 64
    %v2086 = vpop.permute.xlu0 %2085
    %v2088 = vmul.f32 %v2067, %v2086
    %2090 = vrot.lane.b32.xlu0 %v2088, 32
    %v2091 = vpop.permute.xlu0 %2090
    %2093 = vst.msk [vmem:[#allocation6] sm:$0x30] %vm492, %v2091
    %v2094 = vpack.c.bf16 %v2088, %v2088
    %v2096 = vrot.slane %v2094, 2
    %2097 = vrot.lane.b32.xlu0 %v2096, 32
    %v2098 = vpop.permute.xlu0 %2097
    %v2100 = vsel %vm246, %v2098, 0
    %2102 = vmatprep.subr.bf16.mxu0 0
    %2103 = vmatpush1.bf16.msra.mxu0 %v1846
    %2104 = vmatprep.subr.bf16.mxu0 0
    %2105 = vmatpush1.bf16.msra.mxu0 %v1847
    %2106 = vmatprep.subr.bf16.mxu0 0
    %2107 = vmatpush1.bf16.msra.mxu0 0
    %2108 = vmatprep.subr.bf16.mxu0 0
    %2109 = vmatpush1.bf16.msra.mxu0 0
    %2110 = vmatprep.subr.bf16.mxu0 0
    %2111 = vmatpush1.bf16.msra.mxu0 0
    %2112 = vmatprep.subr.bf16.mxu0 0
    %2113 = vmatpush1.bf16.msra.mxu0 0
    %2114 = vmatprep.subr.bf16.mxu0 0
    %2115 = vmatpush1.bf16.msra.mxu0 0
    %2116 = vmatprep.subr.bf16.mxu0 0
    %2117 = vmatpush1.bf16.msra.mxu0 0
    %2118 = vmatprep.subr.bf16.mxu0 0
    %2119 = vmatpush1.bf16.msra.mxu0 0
    %2120 = vmatprep.subr.bf16.mxu0 0
    %2121 = vmatpush1.bf16.msra.mxu0 0
    %2122 = vmatprep.subr.bf16.mxu0 0
    %2123 = vmatpush1.bf16.msra.mxu0 0
    %2124 = vmatprep.subr.bf16.mxu0 0
    %2125 = vmatpush1.bf16.msra.mxu0 0
    %2126 = vmatprep.subr.bf16.mxu0 0
    %2127 = vmatpush1.bf16.msra.mxu0 0
    %2128 = vmatprep.subr.bf16.mxu0 0
    %2129 = vmatpush1.bf16.msra.mxu0 0
    %2130 = vmatprep.subr.bf16.mxu0 0
    %2131 = vmatpush1.bf16.msra.mxu0 0
    %2132 = vmatprep.subr.bf16.mxu0 0
    %2133 = vmatpush1.bf16.msra.mxu0 0
    %2134 = vmatprep.mubr.bf16.mxu0 0
    %2135 = vmatmul.mubr.bf16.gmra.mrb[0].mxu0 %v2100
    %v2136 = vpop.f32.mrb[0].mxu0
    %v2137 = vadd.f32 0.0, %v2136
    %v2138 = vpop.f32.mrb[0].mxu0
    %v2139 = vpop.f32.mrb[0].mxu0
    %v2140 = vpop.f32.mrb[0].mxu0
    %2141 = vdwg.mxu0
    %v2143 = vrot.slane %v2137, 2
    %v2145 = vadd.f32 %v1829, %v2143
    %v2146 = vmax.f32 %v2145, -30.0
    %v2147 = vsub.f32 0.0, %v2146
    %v2148 = vmul.f32 %v2147, 1.442695
    %v2149 = vpow.pop %v2148
    %v2150 = vadd.f32 %v2149, 1.0
    %v2151 = vrcp.pop %v2150
    %v2152 = vtanh.pop %v2145
    %v2154 = vrot.slane %v2082, 6
    %v2156 = vmul.f32 %v2151, %v2154
    %2158 = vrot.lane.b32.xlu0 %v2152, 64
    %v2159 = vpop.permute.xlu0 %2158
    %v2161 = vmul.f32 %v2151, %v2159
    %2163 = vrot.lane.b32.xlu0 %v2161, 32
    %v2164 = vpop.permute.xlu0 %2163
    %v2166 = vadd.f32 %v2156, %v2164
    %v2167 = vtanh.pop %v2166
    %2169 = vrot.lane.b32.xlu0 %v2167, 64
    %v2170 = vpop.permute.xlu0 %2169
    %v2172 = vmul.f32 %v2151, %v2170
    %2174 = vrot.lane.b32.xlu0 %v2172, 32
    %v2175 = vpop.permute.xlu0 %2174
    %2177 = vst.msk [vmem:[#allocation6] sm:$0xc0] %vm577, %v2175
    %v2178 = vpack.c.bf16 %v2172, %v2172
    %v2180 = vrot.slane %v2178, 3
    %2181 = vrot.lane.b32.xlu0 %v2180, 32
    %v2182 = vpop.permute.xlu0 %2181
    %v2184 = vsel %vm246, %v2182, 0
    %2186 = vmatprep.subr.bf16.mxu0 0
    %2187 = vmatpush1.bf16.msra.mxu0 %v1846
    %2188 = vmatprep.subr.bf16.mxu0 0
    %2189 = vmatpush1.bf16.msra.mxu0 %v1847
    %2190 = vmatprep.subr.bf16.mxu0 0
    %2191 = vmatpush1.bf16.msra.mxu0 0
    %2192 = vmatprep.subr.bf16.mxu0 0
    %2193 = vmatpush1.bf16.msra.mxu0 0
    %2194 = vmatprep.subr.bf16.mxu0 0
    %2195 = vmatpush1.bf16.msra.mxu0 0
    %2196 = vmatprep.subr.bf16.mxu0 0
    %2197 = vmatpush1.bf16.msra.mxu0 0
    %2198 = vmatprep.subr.bf16.mxu0 0
    %2199 = vmatpush1.bf16.msra.mxu0 0
    %2200 = vmatprep.subr.bf16.mxu0 0
    %2201 = vmatpush1.bf16.msra.mxu0 0
    %2202 = vmatprep.subr.bf16.mxu0 0
    %2203 = vmatpush1.bf16.msra.mxu0 0
    %2204 = vmatprep.subr.bf16.mxu0 0
    %2205 = vmatpush1.bf16.msra.mxu0 0
    %2206 = vmatprep.subr.bf16.mxu0 0
    %2207 = vmatpush1.bf16.msra.mxu0 0
    %2208 = vmatprep.subr.bf16.mxu0 0
    %2209 = vmatpush1.bf16.msra.mxu0 0
    %2210 = vmatprep.subr.bf16.mxu0 0
    %2211 = vmatpush1.bf16.msra.mxu0 0
    %2212 = vmatprep.subr.bf16.mxu0 0
    %2213 = vmatpush1.bf16.msra.mxu0 0
    %2214 = vmatprep.subr.bf16.mxu0 0
    %2215 = vmatpush1.bf16.msra.mxu0 0
    %2216 = vmatprep.subr.bf16.mxu0 0
    %2217 = vmatpush1.bf16.msra.mxu0 0
    %2218 = vmatprep.mubr.bf16.mxu0 0
    %2219 = vmatmul.mubr.bf16.gmra.mrb[0].mxu0 %v2184
    %v2220 = vpop.f32.mrb[0].mxu0
    %v2221 = vadd.f32 0.0, %v2220
    %v2222 = vpop.f32.mrb[0].mxu0
    %v2223 = vpop.f32.mrb[0].mxu0
    %v2224 = vpop.f32.mrb[0].mxu0
    %2225 = vdwg.mxu0
    %v2226 = vadd.f32 %v1832, %v2221
    %v2227 = vmax.f32 %v2226, -30.0
    %v2228 = vsub.f32 0.0, %v2227
    %v2229 = vmul.f32 %v2228, 1.442695
    %v2230 = vpow.pop %v2229
    %v2231 = vadd.f32 %v2230, 1.0
    %v2232 = vrcp.pop %v2231
    %v2233 = vtanh.pop %v2226
    %v2235 = vrot.slane %v2166, 6
    %v2237 = vmul.f32 %v2232, %v2235
    %2239 = vrot.lane.b32.xlu0 %v2233, 64
    %v2240 = vpop.permute.xlu0 %2239
    %v2242 = vmul.f32 %v2232, %v2240
    %2244 = vrot.lane.b32.xlu0 %v2242, 32
    %v2245 = vpop.permute.xlu0 %2244
    %v2247 = vadd.f32 %v2237, %v2245
    %v2248 = vtanh.pop %v2247
    %2250 = vrot.lane.b32.xlu0 %v2248, 64
    %v2251 = vpop.permute.xlu0 %2250
    %v2253 = vmul.f32 %v2232, %v2251
    %2255 = vrot.lane.b32.xlu0 %v2253, 32
    %v2256 = vpop.permute.xlu0 %2255
    %2258 = vst.msk [vmem:[#allocation6 + $0x8] sm:$0x3] %vm323, %v2256
    %v2259 = vpack.c.bf16 %v2253, %v2253
    %2261 = vrot.lane.b32.xlu0 %v2259, 32
    %v2262 = vpop.permute.xlu0 %2261
    %v2264 = vsel %vm246, %v2262, 0
    %2266 = vmatprep.subr.bf16.mxu0 0
    %2267 = vmatpush1.bf16.msra.mxu0 %v1846
    %2268 = vmatprep.subr.bf16.mxu0 0
    %2269 = vmatpush1.bf16.msra.mxu0 %v1847
    %2270 = vmatprep.subr.bf16.mxu0 0
    %2271 = vmatpush1.bf16.msra.mxu0 0
    %2272 = vmatprep.subr.bf16.mxu0 0
    %2273 = vmatpush1.bf16.msra.mxu0 0
    %2274 = vmatprep.subr.bf16.mxu0 0
    %2275 = vmatpush1.bf16.msra.mxu0 0
    %2276 = vmatprep.subr.bf16.mxu0 0
    %2277 = vmatpush1.bf16.msra.mxu0 0
    %2278 = vmatprep.subr.bf16.mxu0 0
    %2279 = vmatpush1.bf16.msra.mxu0 0
    %2280 = vmatprep.subr.bf16.mxu0 0
    %2281 = vmatpush1.bf16.msra.mxu0 0
    %2282 = vmatprep.subr.bf16.mxu0 0
    %2283 = vmatpush1.bf16.msra.mxu0 0
    %2284 = vmatprep.subr.bf16.mxu0 0
    %2285 = vmatpush1.bf16.msra.mxu0 0
    %2286 = vmatprep.subr.bf16.mxu0 0
    %2287 = vmatpush1.bf16.msra.mxu0 0
    %2288 = vmatprep.subr.bf16.mxu0 0
    %2289 = vmatpush1.bf16.msra.mxu0 0
    %2290 = vmatprep.subr.bf16.mxu0 0
    %2291 = vmatpush1.bf16.msra.mxu0 0
    %2292 = vmatprep.subr.bf16.mxu0 0
    %2293 = vmatpush1.bf16.msra.mxu0 0
    %2294 = vmatprep.subr.bf16.mxu0 0
    %2295 = vmatpush1.bf16.msra.mxu0 0
    %2296 = vmatprep.subr.bf16.mxu0 0
    %2297 = vmatpush1.bf16.msra.mxu0 0
    %2298 = vmatprep.mubr.bf16.mxu0 0
    %2299 = vmatmul.mubr.bf16.gmra.mrb[0].mxu0 %v2264
    %v2300 = vpop.f32.mrb[0].mxu0
    %v2301 = vadd.f32 0.0, %v2300
    %v2302 = vpop.f32.mrb[0].mxu0
    %v2303 = vpop.f32.mrb[0].mxu0
    %v2304 = vpop.f32.mrb[0].mxu0
    %2305 = vdwg.mxu0
    %v2307 = vrot.slane %v2301, 6
    %v2309 = vadd.f32 %v1832, %v2307
    %v2310 = vmax.f32 %v2309, -30.0
    %v2311 = vsub.f32 0.0, %v2310
    %v2312 = vmul.f32 %v2311, 1.442695
    %v2313 = vpow.pop %v2312
    %v2314 = vadd.f32 %v2313, 1.0
    %v2315 = vrcp.pop %v2314
    %v2316 = vtanh.pop %v2309
    %v2318 = vrot.slane %v2247, 6
    %v2320 = vmul.f32 %v2315, %v2318
    %2322 = vrot.lane.b32.xlu0 %v2316, 64
    %v2323 = vpop.permute.xlu0 %2322
    %v2325 = vmul.f32 %v2315, %v2323
    %2327 = vrot.lane.b32.xlu0 %v2325, 32
    %v2328 = vpop.permute.xlu0 %2327
    %v2330 = vadd.f32 %v2320, %v2328
    %v2331 = vtanh.pop %v2330
    %2333 = vrot.lane.b32.xlu0 %v2331, 64
    %v2334 = vpop.permute.xlu0 %2333
    %v2336 = vmul.f32 %v2315, %v2334
    %2338 = vrot.lane.b32.xlu0 %v2336, 32
    %v2339 = vpop.permute.xlu0 %2338
    %2341 = vst.msk [vmem:[#allocation6 + $0x8] sm:$0xc] %vm407, %v2339
    %v2342 = vpack.c.bf16 %v2336, %v2336
    %v2344 = vrot.slane %v2342, 1
    %2345 = vrot.lane.b32.xlu0 %v2344, 32
    %v2346 = vpop.permute.xlu0 %2345
    %v2348 = vsel %vm246, %v2346, 0
    %2350 = vmatprep.subr.bf16.mxu0 0
    %2351 = vmatpush1.bf16.msra.mxu0 %v1846
    %2352 = vmatprep.subr.bf16.mxu0 0
    %2353 = vmatpush1.bf16.msra.mxu0 %v1847
    %2354 = vmatprep.subr.bf16.mxu0 0
    %2355 = vmatpush1.bf16.msra.mxu0 0
    %2356 = vmatprep.subr.bf16.mxu0 0
    %2357 = vmatpush1.bf16.msra.mxu0 0
    %2358 = vmatprep.subr.bf16.mxu0 0
    %2359 = vmatpush1.bf16.msra.mxu0 0
    %2360 = vmatprep.subr.bf16.mxu0 0
    %2361 = vmatpush1.bf16.msra.mxu0 0
    %2362 = vmatprep.subr.bf16.mxu0 0
    %2363 = vmatpush1.bf16.msra.mxu0 0
    %2364 = vmatprep.subr.bf16.mxu0 0
    %2365 = vmatpush1.bf16.msra.mxu0 0
    %2366 = vmatprep.subr.bf16.mxu0 0
    %2367 = vmatpush1.bf16.msra.mxu0 0
    %2368 = vmatprep.subr.bf16.mxu0 0
    %2369 = vmatpush1.bf16.msra.mxu0 0
    %2370 = vmatprep.subr.bf16.mxu0 0
    %2371 = vmatpush1.bf16.msra.mxu0 0
    %2372 = vmatprep.subr.bf16.mxu0 0
    %2373 = vmatpush1.bf16.msra.mxu0 0
    %2374 = vmatprep.subr.bf16.mxu0 0
    %2375 = vmatpush1.bf16.msra.mxu0 0
    %2376 = vmatprep.subr.bf16.mxu0 0
    %2377 = vmatpush1.bf16.msra.mxu0 0
    %2378 = vmatprep.subr.bf16.mxu0 0
    %2379 = vmatpush1.bf16.msra.mxu0 0
    %2380 = vmatprep.subr.bf16.mxu0 0
    %2381 = vmatpush1.bf16.msra.mxu0 0
    %2382 = vmatprep.mubr.bf16.mxu0 0
    %2383 = vmatmul.mubr.bf16.gmra.mrb[0].mxu0 %v2348
    %v2384 = vpop.f32.mrb[0].mxu0
    %v2385 = vadd.f32 0.0, %v2384
    %v2386 = vpop.f32.mrb[0].mxu0
    %v2387 = vpop.f32.mrb[0].mxu0
    %v2388 = vpop.f32.mrb[0].mxu0
    %2389 = vdwg.mxu0
    %v2391 = vrot.slane %v2385, 4
    %v2393 = vadd.f32 %v1832, %v2391
    %v2394 = vmax.f32 %v2393, -30.0
    %v2395 = vsub.f32 0.0, %v2394
    %v2396 = vmul.f32 %v2395, 1.442695
    %v2397 = vpow.pop %v2396
    %v2398 = vadd.f32 %v2397, 1.0
    %v2399 = vrcp.pop %v2398
    %v2400 = vtanh.pop %v2393
    %v2402 = vrot.slane %v2330, 6
    %v2404 = vmul.f32 %v2399, %v2402
    %2406 = vrot.lane.b32.xlu0 %v2400, 64
    %v2407 = vpop.permute.xlu0 %2406
    %v2409 = vmul.f32 %v2399, %v2407
    %2411 = vrot.lane.b32.xlu0 %v2409, 32
    %v2412 = vpop.permute.xlu0 %2411
    %v2414 = vadd.f32 %v2404, %v2412
    %v2415 = vtanh.pop %v2414
    %2417 = vrot.lane.b32.xlu0 %v2415, 64
    %v2418 = vpop.permute.xlu0 %2417
    %v2420 = vmul.f32 %v2399, %v2418
    %2422 = vrot.lane.b32.xlu0 %v2420, 32
    %v2423 = vpop.permute.xlu0 %2422
    %2425 = vst.msk [vmem:[#allocation6 + $0x8] sm:$0x30] %vm492, %v2423
    %v2426 = vpack.c.bf16 %v2420, %v2420
    %v2428 = vrot.slane %v2426, 2
    %2429 = vrot.lane.b32.xlu0 %v2428, 32
    %v2430 = vpop.permute.xlu0 %2429
    %v2432 = vsel %vm246, %v2430, 0
    %2434 = vmatprep.subr.bf16.mxu0 0
    %2435 = vmatpush1.bf16.msra.mxu0 %v1846
    %2436 = vmatprep.subr.bf16.mxu0 0
    %2437 = vmatpush1.bf16.msra.mxu0 %v1847
    %2438 = vmatprep.subr.bf16.mxu0 0
    %2439 = vmatpush1.bf16.msra.mxu0 0
    %2440 = vmatprep.subr.bf16.mxu0 0
    %2441 = vmatpush1.bf16.msra.mxu0 0
    %2442 = vmatprep.subr.bf16.mxu0 0
    %2443 = vmatpush1.bf16.msra.mxu0 0
    %2444 = vmatprep.subr.bf16.mxu0 0
    %2445 = vmatpush1.bf16.msra.mxu0 0
    %2446 = vmatprep.subr.bf16.mxu0 0
    %2447 = vmatpush1.bf16.msra.mxu0 0
    %2448 = vmatprep.subr.bf16.mxu0 0
    %2449 = vmatpush1.bf16.msra.mxu0 0
    %2450 = vmatprep.subr.bf16.mxu0 0
    %2451 = vmatpush1.bf16.msra.mxu0 0
    %2452 = vmatprep.subr.bf16.mxu0 0
    %2453 = vmatpush1.bf16.msra.mxu0 0
    %2454 = vmatprep.subr.bf16.mxu0 0
    %2455 = vmatpush1.bf16.msra.mxu0 0
    %2456 = vmatprep.subr.bf16.mxu0 0
    %2457 = vmatpush1.bf16.msra.mxu0 0
    %2458 = vmatprep.subr.bf16.mxu0 0
    %2459 = vmatpush1.bf16.msra.mxu0 0
    %2460 = vmatprep.subr.bf16.mxu0 0
    %2461 = vmatpush1.bf16.msra.mxu0 0
    %2462 = vmatprep.subr.bf16.mxu0 0
    %2463 = vmatpush1.bf16.msra.mxu0 0
    %2464 = vmatprep.subr.bf16.mxu0 0
    %2465 = vmatpush1.bf16.msra.mxu0 0
    %2466 = vmatprep.mubr.bf16.mxu0 0
    %2467 = vmatmul.mubr.bf16.gmra.mrb[0].mxu0 %v2432
    %v2468 = vpop.f32.mrb[0].mxu0
    %v2469 = vadd.f32 0.0, %v2468
    %v2470 = vpop.f32.mrb[0].mxu0
    %v2471 = vpop.f32.mrb[0].mxu0
    %v2472 = vpop.f32.mrb[0].mxu0
    %2473 = vdwg.mxu0
    %v2475 = vrot.slane %v2469, 2
    %v2477 = vadd.f32 %v1832, %v2475
    %v2478 = vmax.f32 %v2477, -30.0
    %v2479 = vsub.f32 0.0, %v2478
    %v2480 = vmul.f32 %v2479, 1.442695
    %v2481 = vpow.pop %v2480
    %v2482 = vadd.f32 %v2481, 1.0
    %v2483 = vrcp.pop %v2482
    %v2484 = vtanh.pop %v2477
    %v2486 = vrot.slane %v2414, 6
    %v2488 = vmul.f32 %v2483, %v2486
    %2490 = vrot.lane.b32.xlu0 %v2484, 64
    %v2491 = vpop.permute.xlu0 %2490
    %v2493 = vmul.f32 %v2483, %v2491
    %2495 = vrot.lane.b32.xlu0 %v2493, 32
    %v2496 = vpop.permute.xlu0 %2495
    %v2498 = vadd.f32 %v2488, %v2496
    %v2499 = vtanh.pop %v2498
    %2501 = vrot.lane.b32.xlu0 %v2499, 64
    %v2502 = vpop.permute.xlu0 %2501
    %v2504 = vmul.f32 %v2483, %v2502
    %2506 = vrot.lane.b32.xlu0 %v2504, 32
    %v2507 = vpop.permute.xlu0 %2506
    %2509 = vst.msk [vmem:[#allocation6 + $0x8] sm:$0xc0] %vm577, %v2507
    %2510 = vst.msk [vmem:[#allocation4 - $0x6] sm:$0xc0] %vm577, %v2507
    %2512 = vrot.lane.b32.xlu0 %v2498, 96
    %v2513 = vpop.permute.xlu0 %2512
    %2515 = vst.msk [vmem:[#allocation5 - $0x6] sm:$0xc0] %vm577, %v2513
    %v2516 = vld [vmem:[#allocation6] sm:$0xff]
    %v2517 = vld [vmem:[#allocation6 + $0x8] sm:$0xff]
    %v2518 = vld [vmem:[%s11] sm:$0xf]
    %v2519 = vld [vmem:[%s11 + $0x4] sm:$0xf]
    %v2520 = vld [vmem:[%s11 + $0x8] sm:$0xf]
    %v2521 = vld [vmem:[%s11 + $0xc] sm:$0xf]
    %v2522 = vld [vmem:[%s12] sm:$0xf]
    %v2523 = vld [vmem:[%s12 + $0x4] sm:$0xf]
    %v2524 = vld [vmem:[%s12 + $0x8] sm:$0xf]
    %v2525 = vld [vmem:[%s12 + $0xc] sm:$0xf]
    %v2526 = vld [vmem:[%s13] sm:$0x1]
    %v2527 = vpack.c.bf16 %v2517, %v2516
    %v2529 = vlaneseq
    %v2530 = vshrl.u32 %v2529, 7
    %v2531 = vsub.s32 0, %v2530
    %v2532 = vrot.slane %v2526, %v2531
    %v2538 = vunpack.c.l.b16 %v2518
    %v2539 = vunpack.c.l.b16 %v2519
    %v2540 = vunpack.c.l.b16 %v2520
    %v2541 = vunpack.c.l.b16 %v2521
    %v2542 = vpack.c.b16 %v2539, %v2538
    %v2543 = vpack.c.b16 %v2541, %v2540
    %v2547 = vsel %vm246, %v2527, 0
    %2549 = vmatprep.subr.bf16.mxu0 0
    %2550 = vmatpush1.bf16.msra.mxu0 %v2542
    %2551 = vmatprep.subr.bf16.mxu0 0
    %2552 = vmatpush1.bf16.msra.mxu0 %v2543
    %2553 = vmatprep.subr.bf16.mxu0 0
    %2554 = vmatpush1.bf16.msra.mxu0 0
    %2555 = vmatprep.subr.bf16.mxu0 0
    %2556 = vmatpush1.bf16.msra.mxu0 0
    %2557 = vmatprep.subr.bf16.mxu0 0
    %2558 = vmatpush1.bf16.msra.mxu0 0
    %2559 = vmatprep.subr.bf16.mxu0 0
    %2560 = vmatpush1.bf16.msra.mxu0 0
    %2561 = vmatprep.subr.bf16.mxu0 0
    %2562 = vmatpush1.bf16.msra.mxu0 0
    %2563 = vmatprep.subr.bf16.mxu0 0
    %2564 = vmatpush1.bf16.msra.mxu0 0
    %2565 = vmatprep.subr.bf16.mxu0 0
    %2566 = vmatpush1.bf16.msra.mxu0 0
    %2567 = vmatprep.subr.bf16.mxu0 0
    %2568 = vmatpush1.bf16.msra.mxu0 0
    %2569 = vmatprep.subr.bf16.mxu0 0
    %2570 = vmatpush1.bf16.msra.mxu0 0
    %2571 = vmatprep.subr.bf16.mxu0 0
    %2572 = vmatpush1.bf16.msra.mxu0 0
    %2573 = vmatprep.subr.bf16.mxu0 0
    %2574 = vmatpush1.bf16.msra.mxu0 0
    %2575 = vmatprep.subr.bf16.mxu0 0
    %2576 = vmatpush1.bf16.msra.mxu0 0
    %2577 = vmatprep.subr.bf16.mxu0 0
    %2578 = vmatpush1.bf16.msra.mxu0 0
    %2579 = vmatprep.subr.bf16.mxu0 0
    %2580 = vmatpush1.bf16.msra.mxu0 0
    %2581 = vmatprep.mubr.bf16.mxu0 0
    %2582 = vmatmul.mubr.bf16.gmra.mrb[0].mxu0 %v2547
    %v2583 = vpop.f32.mrb[0].mxu0
    %v2584 = vadd.f32 %v2532, %v2583
    %v2585 = vpop.f32.mrb[0].mxu0
    %v2586 = vpop.f32.mrb[0].mxu0
    %v2587 = vadd.f32 %v2532, %v2586
    %v2588 = vpop.f32.mrb[0].mxu0
    %2589 = vdwg.mxu0
    %s2590 = scalar_lea.vmem [#allocation4], 2
    %v2591 = vld [vmem:[%s2590] sm:$0x3]
    %s2592 = scalar_lea.vmem [#allocation5], 2
    %v2593 = vld [vmem:[%s2592] sm:$0x3]
    %v2594 = vpack.c.bf16 %v2591, %v2591
    %v2599 = vunpack.c.l.b16 %v2522
    %v2600 = vunpack.c.l.b16 %v2523
    %v2601 = vunpack.c.l.b16 %v2524
    %v2602 = vunpack.c.l.b16 %v2525
    %v2603 = vpack.c.b16 %v2600, %v2599
    %v2604 = vpack.c.b16 %v2602, %v2601
    %v2608 = vsel %vm246, %v2594, 0
    %2610 = vmatprep.subr.bf16.mxu0 0
    %2611 = vmatpush1.bf16.msra.mxu0 %v2603
    %2612 = vmatprep.subr.bf16.mxu0 0
    %2613 = vmatpush1.bf16.msra.mxu0 %v2604
    %2614 = vmatprep.subr.bf16.mxu0 0
    %2615 = vmatpush1.bf16.msra.mxu0 0
    %2616 = vmatprep.subr.bf16.mxu0 0
    %2617 = vmatpush1.bf16.msra.mxu0 0
    %2618 = vmatprep.subr.bf16.mxu0 0
    %2619 = vmatpush1.bf16.msra.mxu0 0
    %2620 = vmatprep.subr.bf16.mxu0 0
    %2621 = vmatpush1.bf16.msra.mxu0 0
    %2622 = vmatprep.subr.bf16.mxu0 0
    %2623 = vmatpush1.bf16.msra.mxu0 0
    %2624 = vmatprep.subr.bf16.mxu0 0
    %2625 = vmatpush1.bf16.msra.mxu0 0
    %2626 = vmatprep.subr.bf16.mxu0 0
    %2627 = vmatpush1.bf16.msra.mxu0 0
    %2628 = vmatprep.subr.bf16.mxu0 0
    %2629 = vmatpush1.bf16.msra.mxu0 0
    %2630 = vmatprep.subr.bf16.mxu0 0
    %2631 = vmatpush1.bf16.msra.mxu0 0
    %2632 = vmatprep.subr.bf16.mxu0 0
    %2633 = vmatpush1.bf16.msra.mxu0 0
    %2634 = vmatprep.subr.bf16.mxu0 0
    %2635 = vmatpush1.bf16.msra.mxu0 0
    %2636 = vmatprep.subr.bf16.mxu0 0
    %2637 = vmatpush1.bf16.msra.mxu0 0
    %2638 = vmatprep.subr.bf16.mxu0 0
    %2639 = vmatpush1.bf16.msra.mxu0 0
    %2640 = vmatprep.subr.bf16.mxu0 0
    %2641 = vmatpush1.bf16.msra.mxu0 0
    %2642 = vmatprep.mubr.bf16.mxu0 0
    %2643 = vmatmul.mubr.bf16.gmra.mrb[0].mxu0 %v2608
    %v2644 = vpop.f32.mrb[0].mxu0
    %v2645 = vadd.f32 0.0, %v2644
    %v2646 = vpop.f32.mrb[0].mxu0
    %v2647 = vpop.f32.mrb[0].mxu0
    %v2648 = vpop.f32.mrb[0].mxu0
    %2649 = vdwg.mxu0
    %v2650 = vadd.f32 %v2584, %v2645
    %v2651 = vmax.f32 %v2650, -30.0
    %v2652 = vsub.f32 0.0, %v2651
    %v2653 = vmul.f32 %v2652, 1.442695
    %v2654 = vpow.pop %v2653
    %v2655 = vadd.f32 %v2654, 1.0
    %v2656 = vrcp.pop %v2655
    %v2657 = vtanh.pop %v2650
    %2659 = vrot.lane.b32.xlu0 %v2593, 32
    %v2660 = vpop.permute.xlu0 %2659
    %v2662 = vmul.f32 %v2656, %v2660
    %2664 = vrot.lane.b32.xlu0 %v2657, 64
    %v2665 = vpop.permute.xlu0 %2664
    %v2667 = vmul.f32 %v2656, %v2665
    %2669 = vrot.lane.b32.xlu0 %v2667, 32
    %v2670 = vpop.permute.xlu0 %2669
    %v2672 = vadd.f32 %v2662, %v2670
    %v2673 = vtanh.pop %v2672
    %2675 = vrot.lane.b32.xlu0 %v2673, 64
    %v2676 = vpop.permute.xlu0 %2675
    %v2678 = vmul.f32 %v2656, %v2676
    %2680 = vrot.lane.b32.xlu0 %v2678, 32
    %v2681 = vpop.permute.xlu0 %2680
    %2683 = vst.msk [vmem:[#allocation6] sm:$0x3] %vm323, %v2681
    %v2684 = vpack.c.bf16 %v2678, %v2678
    %2686 = vrot.lane.b32.xlu0 %v2684, 32
    %v2687 = vpop.permute.xlu0 %2686
    %v2689 = vsel %vm246, %v2687, 0
    %2691 = vmatprep.subr.bf16.mxu0 0
    %2692 = vmatpush1.bf16.msra.mxu0 %v2603
    %2693 = vmatprep.subr.bf16.mxu0 0
    %2694 = vmatpush1.bf16.msra.mxu0 %v2604
    %2695 = vmatprep.subr.bf16.mxu0 0
    %2696 = vmatpush1.bf16.msra.mxu0 0
    %2697 = vmatprep.subr.bf16.mxu0 0
    %2698 = vmatpush1.bf16.msra.mxu0 0
    %2699 = vmatprep.subr.bf16.mxu0 0
    %2700 = vmatpush1.bf16.msra.mxu0 0
    %2701 = vmatprep.subr.bf16.mxu0 0
    %2702 = vmatpush1.bf16.msra.mxu0 0
    %2703 = vmatprep.subr.bf16.mxu0 0
    %2704 = vmatpush1.bf16.msra.mxu0 0
    %2705 = vmatprep.subr.bf16.mxu0 0
    %2706 = vmatpush1.bf16.msra.mxu0 0
    %2707 = vmatprep.subr.bf16.mxu0 0
    %2708 = vmatpush1.bf16.msra.mxu0 0
    %2709 = vmatprep.subr.bf16.mxu0 0
    %2710 = vmatpush1.bf16.msra.mxu0 0
    %2711 = vmatprep.subr.bf16.mxu0 0
    %2712 = vmatpush1.bf16.msra.mxu0 0
    %2713 = vmatprep.subr.bf16.mxu0 0
    %2714 = vmatpush1.bf16.msra.mxu0 0
    %2715 = vmatprep.subr.bf16.mxu0 0
    %2716 = vmatpush1.bf16.msra.mxu0 0
    %2717 = vmatprep.subr.bf16.mxu0 0
    %2718 = vmatpush1.bf16.msra.mxu0 0
    %2719 = vmatprep.subr.bf16.mxu0 0
    %2720 = vmatpush1.bf16.msra.mxu0 0
    %2721 = vmatprep.subr.bf16.mxu0 0
    %2722 = vmatpush1.bf16.msra.mxu0 0
    %2723 = vmatprep.mubr.bf16.mxu0 0
    %2724 = vmatmul.mubr.bf16.gmra.mrb[0].mxu0 %v2689
    %v2725 = vpop.f32.mrb[0].mxu0
    %v2726 = vadd.f32 0.0, %v2725
    %v2727 = vpop.f32.mrb[0].mxu0
    %v2728 = vpop.f32.mrb[0].mxu0
    %v2729 = vpop.f32.mrb[0].mxu0
    %2730 = vdwg.mxu0
    %v2732 = vrot.slane %v2726, 6
    %v2734 = vadd.f32 %v2584, %v2732
    %v2735 = vmax.f32 %v2734, -30.0
    %v2736 = vsub.f32 0.0, %v2735
    %v2737 = vmul.f32 %v2736, 1.442695
    %v2738 = vpow.pop %v2737
    %v2739 = vadd.f32 %v2738, 1.0
    %v2740 = vrcp.pop %v2739
    %v2741 = vtanh.pop %v2734
    %v2743 = vrot.slane %v2672, 6
    %v2745 = vmul.f32 %v2740, %v2743
    %2747 = vrot.lane.b32.xlu0 %v2741, 64
    %v2748 = vpop.permute.xlu0 %2747
    %v2750 = vmul.f32 %v2740, %v2748
    %2752 = vrot.lane.b32.xlu0 %v2750, 32
    %v2753 = vpop.permute.xlu0 %2752
    %v2755 = vadd.f32 %v2745, %v2753
    %v2756 = vtanh.pop %v2755
    %2758 = vrot.lane.b32.xlu0 %v2756, 64
    %v2759 = vpop.permute.xlu0 %2758
    %v2761 = vmul.f32 %v2740, %v2759
    %2763 = vrot.lane.b32.xlu0 %v2761, 32
    %v2764 = vpop.permute.xlu0 %2763
    %2766 = vst.msk [vmem:[#allocation6] sm:$0xc] %vm407, %v2764
    %v2767 = vpack.c.bf16 %v2761, %v2761
    %v2769 = vrot.slane %v2767, 1
    %2770 = vrot.lane.b32.xlu0 %v2769, 32
    %v2771 = vpop.permute.xlu0 %2770
    %v2773 = vsel %vm246, %v2771, 0
    %2775 = vmatprep.subr.bf16.mxu0 0
    %2776 = vmatpush1.bf16.msra.mxu0 %v2603
    %2777 = vmatprep.subr.bf16.mxu0 0
    %2778 = vmatpush1.bf16.msra.mxu0 %v2604
    %2779 = vmatprep.subr.bf16.mxu0 0
    %2780 = vmatpush1.bf16.msra.mxu0 0
    %2781 = vmatprep.subr.bf16.mxu0 0
    %2782 = vmatpush1.bf16.msra.mxu0 0
    %2783 = vmatprep.subr.bf16.mxu0 0
    %2784 = vmatpush1.bf16.msra.mxu0 0
    %2785 = vmatprep.subr.bf16.mxu0 0
    %2786 = vmatpush1.bf16.msra.mxu0 0
    %2787 = vmatprep.subr.bf16.mxu0 0
    %2788 = vmatpush1.bf16.msra.mxu0 0
    %2789 = vmatprep.subr.bf16.mxu0 0
    %2790 = vmatpush1.bf16.msra.mxu0 0
    %2791 = vmatprep.subr.bf16.mxu0 0
    %2792 = vmatpush1.bf16.msra.mxu0 0
    %2793 = vmatprep.subr.bf16.mxu0 0
    %2794 = vmatpush1.bf16.msra.mxu0 0
    %2795 = vmatprep.subr.bf16.mxu0 0
    %2796 = vmatpush1.bf16.msra.mxu0 0
    %2797 = vmatprep.subr.bf16.mxu0 0
    %2798 = vmatpush1.bf16.msra.mxu0 0
    %2799 = vmatprep.subr.bf16.mxu0 0
    %2800 = vmatpush1.bf16.msra.mxu0 0
    %2801 = vmatprep.subr.bf16.mxu0 0
    %2802 = vmatpush1.bf16.msra.mxu0 0
    %2803 = vmatprep.subr.bf16.mxu0 0
    %2804 = vmatpush1.bf16.msra.mxu0 0
    %2805 = vmatprep.subr.bf16.mxu0 0
    %2806 = vmatpush1.bf16.msra.mxu0 0
    %2807 = vmatprep.mubr.bf16.mxu0 0
    %2808 = vmatmul.mubr.bf16.gmra.mrb[0].mxu0 %v2773
    %v2809 = vpop.f32.mrb[0].mxu0
    %v2810 = vadd.f32 0.0, %v2809
    %v2811 = vpop.f32.mrb[0].mxu0
    %v2812 = vpop.f32.mrb[0].mxu0
    %v2813 = vpop.f32.mrb[0].mxu0
    %2814 = vdwg.mxu0
    %v2816 = vrot.slane %v2810, 4
    %v2818 = vadd.f32 %v2584, %v2816
    %v2819 = vmax.f32 %v2818, -30.0
    %v2820 = vsub.f32 0.0, %v2819
    %v2821 = vmul.f32 %v2820, 1.442695
    %v2822 = vpow.pop %v2821
    %v2823 = vadd.f32 %v2822, 1.0
    %v2824 = vrcp.pop %v2823
    %v2825 = vtanh.pop %v2818
    %v2827 = vrot.slane %v2755, 6
    %v2829 = vmul.f32 %v2824, %v2827
    %2831 = vrot.lane.b32.xlu0 %v2825, 64
    %v2832 = vpop.permute.xlu0 %2831
    %v2834 = vmul.f32 %v2824, %v2832
    %2836 = vrot.lane.b32.xlu0 %v2834, 32
    %v2837 = vpop.permute.xlu0 %2836
    %v2839 = vadd.f32 %v2829, %v2837
    %v2840 = vtanh.pop %v2839
    %2842 = vrot.lane.b32.xlu0 %v2840, 64
    %v2843 = vpop.permute.xlu0 %2842
    %v2845 = vmul.f32 %v2824, %v2843
    %2847 = vrot.lane.b32.xlu0 %v2845, 32
    %v2848 = vpop.permute.xlu0 %2847
    %2850 = vst.msk [vmem:[#allocation6] sm:$0x30] %vm492, %v2848
    %v2851 = vpack.c.bf16 %v2845, %v2845
    %v2853 = vrot.slane %v2851, 2
    %2854 = vrot.lane.b32.xlu0 %v2853, 32
    %v2855 = vpop.permute.xlu0 %2854
    %v2857 = vsel %vm246, %v2855, 0
    %2859 = vmatprep.subr.bf16.mxu0 0
    %2860 = vmatpush1.bf16.msra.mxu0 %v2603
    %2861 = vmatprep.subr.bf16.mxu0 0
    %2862 = vmatpush1.bf16.msra.mxu0 %v2604
    %2863 = vmatprep.subr.bf16.mxu0 0
    %2864 = vmatpush1.bf16.msra.mxu0 0
    %2865 = vmatprep.subr.bf16.mxu0 0
    %2866 = vmatpush1.bf16.msra.mxu0 0
    %2867 = vmatprep.subr.bf16.mxu0 0
    %2868 = vmatpush1.bf16.msra.mxu0 0
    %2869 = vmatprep.subr.bf16.mxu0 0
    %2870 = vmatpush1.bf16.msra.mxu0 0
    %2871 = vmatprep.subr.bf16.mxu0 0
    %2872 = vmatpush1.bf16.msra.mxu0 0
    %2873 = vmatprep.subr.bf16.mxu0 0
    %2874 = vmatpush1.bf16.msra.mxu0 0
    %2875 = vmatprep.subr.bf16.mxu0 0
    %2876 = vmatpush1.bf16.msra.mxu0 0
    %2877 = vmatprep.subr.bf16.mxu0 0
    %2878 = vmatpush1.bf16.msra.mxu0 0
    %2879 = vmatprep.subr.bf16.mxu0 0
    %2880 = vmatpush1.bf16.msra.mxu0 0
    %2881 = vmatprep.subr.bf16.mxu0 0
    %2882 = vmatpush1.bf16.msra.mxu0 0
    %2883 = vmatprep.subr.bf16.mxu0 0
    %2884 = vmatpush1.bf16.msra.mxu0 0
    %2885 = vmatprep.subr.bf16.mxu0 0
    %2886 = vmatpush1.bf16.msra.mxu0 0
    %2887 = vmatprep.subr.bf16.mxu0 0
    %2888 = vmatpush1.bf16.msra.mxu0 0
    %2889 = vmatprep.subr.bf16.mxu0 0
    %2890 = vmatpush1.bf16.msra.mxu0 0
    %2891 = vmatprep.mubr.bf16.mxu0 0
    %2892 = vmatmul.mubr.bf16.gmra.mrb[0].mxu0 %v2857
    %v2893 = vpop.f32.mrb[0].mxu0
    %v2894 = vadd.f32 0.0, %v2893
    %v2895 = vpop.f32.mrb[0].mxu0
    %v2896 = vpop.f32.mrb[0].mxu0
    %v2897 = vpop.f32.mrb[0].mxu0
    %2898 = vdwg.mxu0
    %v2900 = vrot.slane %v2894, 2
    %v2902 = vadd.f32 %v2584, %v2900
    %v2903 = vmax.f32 %v2902, -30.0
    %v2904 = vsub.f32 0.0, %v2903
    %v2905 = vmul.f32 %v2904, 1.442695
    %v2906 = vpow.pop %v2905
    %v2907 = vadd.f32 %v2906, 1.0
    %v2908 = vrcp.pop %v2907
    %v2909 = vtanh.pop %v2902
    %v2911 = vrot.slane %v2839, 6
    %v2913 = vmul.f32 %v2908, %v2911
    %2915 = vrot.lane.b32.xlu0 %v2909, 64
    %v2916 = vpop.permute.xlu0 %2915
    %v2918 = vmul.f32 %v2908, %v2916
    %2920 = vrot.lane.b32.xlu0 %v2918, 32
    %v2921 = vpop.permute.xlu0 %2920
    %v2923 = vadd.f32 %v2913, %v2921
    %v2924 = vtanh.pop %v2923
    %2926 = vrot.lane.b32.xlu0 %v2924, 64
    %v2927 = vpop.permute.xlu0 %2926
    %v2929 = vmul.f32 %v2908, %v2927
    %2931 = vrot.lane.b32.xlu0 %v2929, 32
    %v2932 = vpop.permute.xlu0 %2931
    %2934 = vst.msk [vmem:[#allocation6] sm:$0xc0] %vm577, %v2932
    %v2935 = vpack.c.bf16 %v2929, %v2929
    %v2937 = vrot.slane %v2935, 3
    %2938 = vrot.lane.b32.xlu0 %v2937, 32
    %v2939 = vpop.permute.xlu0 %2938
    %v2941 = vsel %vm246, %v2939, 0
    %2943 = vmatprep.subr.bf16.mxu0 0
    %2944 = vmatpush1.bf16.msra.mxu0 %v2603
    %2945 = vmatprep.subr.bf16.mxu0 0
    %2946 = vmatpush1.bf16.msra.mxu0 %v2604
    %2947 = vmatprep.subr.bf16.mxu0 0
    %2948 = vmatpush1.bf16.msra.mxu0 0
    %2949 = vmatprep.subr.bf16.mxu0 0
    %2950 = vmatpush1.bf16.msra.mxu0 0
    %2951 = vmatprep.subr.bf16.mxu0 0
    %2952 = vmatpush1.bf16.msra.mxu0 0
    %2953 = vmatprep.subr.bf16.mxu0 0
    %2954 = vmatpush1.bf16.msra.mxu0 0
    %2955 = vmatprep.subr.bf16.mxu0 0
    %2956 = vmatpush1.bf16.msra.mxu0 0
    %2957 = vmatprep.subr.bf16.mxu0 0
    %2958 = vmatpush1.bf16.msra.mxu0 0
    %2959 = vmatprep.subr.bf16.mxu0 0
    %2960 = vmatpush1.bf16.msra.mxu0 0
    %2961 = vmatprep.subr.bf16.mxu0 0
    %2962 = vmatpush1.bf16.msra.mxu0 0
    %2963 = vmatprep.subr.bf16.mxu0 0
    %2964 = vmatpush1.bf16.msra.mxu0 0
    %2965 = vmatprep.subr.bf16.mxu0 0
    %2966 = vmatpush1.bf16.msra.mxu0 0
    %2967 = vmatprep.subr.bf16.mxu0 0
    %2968 = vmatpush1.bf16.msra.mxu0 0
    %2969 = vmatprep.subr.bf16.mxu0 0
    %2970 = vmatpush1.bf16.msra.mxu0 0
    %2971 = vmatprep.subr.bf16.mxu0 0
    %2972 = vmatpush1.bf16.msra.mxu0 0
    %2973 = vmatprep.subr.bf16.mxu0 0
    %2974 = vmatpush1.bf16.msra.mxu0 0
    %2975 = vmatprep.mubr.bf16.mxu0 0
    %2976 = vmatmul.mubr.bf16.gmra.mrb[0].mxu0 %v2941
    %v2977 = vpop.f32.mrb[0].mxu0
    %v2978 = vadd.f32 0.0, %v2977
    %v2979 = vpop.f32.mrb[0].mxu0
    %v2980 = vpop.f32.mrb[0].mxu0
    %v2981 = vpop.f32.mrb[0].mxu0
    %2982 = vdwg.mxu0
    %v2983 = vadd.f32 %v2587, %v2978
    %v2984 = vmax.f32 %v2983, -30.0
    %v2985 = vsub.f32 0.0, %v2984
    %v2986 = vmul.f32 %v2985, 1.442695
    %v2987 = vpow.pop %v2986
    %v2988 = vadd.f32 %v2987, 1.0
    %v2989 = vrcp.pop %v2988
    %v2990 = vtanh.pop %v2983
    %v2992 = vrot.slane %v2923, 6
    %v2994 = vmul.f32 %v2989, %v2992
    %2996 = vrot.lane.b32.xlu0 %v2990, 64
    %v2997 = vpop.permute.xlu0 %2996
    %v2999 = vmul.f32 %v2989, %v2997
    %3001 = vrot.lane.b32.xlu0 %v2999, 32
    %v3002 = vpop.permute.xlu0 %3001
    %v3004 = vadd.f32 %v2994, %v3002
    %v3005 = vtanh.pop %v3004
    %3007 = vrot.lane.b32.xlu0 %v3005, 64
    %v3008 = vpop.permute.xlu0 %3007
    %v3010 = vmul.f32 %v2989, %v3008
    %3012 = vrot.lane.b32.xlu0 %v3010, 32
    %v3013 = vpop.permute.xlu0 %3012
    %3015 = vst.msk [vmem:[#allocation6 + $0x8] sm:$0x3] %vm323, %v3013
    %v3016 = vpack.c.bf16 %v3010, %v3010
    %3018 = vrot.lane.b32.xlu0 %v3016, 32
    %v3019 = vpop.permute.xlu0 %3018
    %v3021 = vsel %vm246, %v3019, 0
    %3023 = vmatprep.subr.bf16.mxu0 0
    %3024 = vmatpush1.bf16.msra.mxu0 %v2603
    %3025 = vmatprep.subr.bf16.mxu0 0
    %3026 = vmatpush1.bf16.msra.mxu0 %v2604
    %3027 = vmatprep.subr.bf16.mxu0 0
    %3028 = vmatpush1.bf16.msra.mxu0 0
    %3029 = vmatprep.subr.bf16.mxu0 0
    %3030 = vmatpush1.bf16.msra.mxu0 0
    %3031 = vmatprep.subr.bf16.mxu0 0
    %3032 = vmatpush1.bf16.msra.mxu0 0
    %3033 = vmatprep.subr.bf16.mxu0 0
    %3034 = vmatpush1.bf16.msra.mxu0 0
    %3035 = vmatprep.subr.bf16.mxu0 0
    %3036 = vmatpush1.bf16.msra.mxu0 0
    %3037 = vmatprep.subr.bf16.mxu0 0
    %3038 = vmatpush1.bf16.msra.mxu0 0
    %3039 = vmatprep.subr.bf16.mxu0 0
    %3040 = vmatpush1.bf16.msra.mxu0 0
    %3041 = vmatprep.subr.bf16.mxu0 0
    %3042 = vmatpush1.bf16.msra.mxu0 0
    %3043 = vmatprep.subr.bf16.mxu0 0
    %3044 = vmatpush1.bf16.msra.mxu0 0
    %3045 = vmatprep.subr.bf16.mxu0 0
    %3046 = vmatpush1.bf16.msra.mxu0 0
    %3047 = vmatprep.subr.bf16.mxu0 0
    %3048 = vmatpush1.bf16.msra.mxu0 0
    %3049 = vmatprep.subr.bf16.mxu0 0
    %3050 = vmatpush1.bf16.msra.mxu0 0
    %3051 = vmatprep.subr.bf16.mxu0 0
    %3052 = vmatpush1.bf16.msra.mxu0 0
    %3053 = vmatprep.subr.bf16.mxu0 0
    %3054 = vmatpush1.bf16.msra.mxu0 0
    %3055 = vmatprep.mubr.bf16.mxu0 0
    %3056 = vmatmul.mubr.bf16.gmra.mrb[0].mxu0 %v3021
    %v3057 = vpop.f32.mrb[0].mxu0
    %v3058 = vadd.f32 0.0, %v3057
    %v3059 = vpop.f32.mrb[0].mxu0
    %v3060 = vpop.f32.mrb[0].mxu0
    %v3061 = vpop.f32.mrb[0].mxu0
    %3062 = vdwg.mxu0
    %v3064 = vrot.slane %v3058, 6
    %v3066 = vadd.f32 %v2587, %v3064
    %v3067 = vmax.f32 %v3066, -30.0
    %v3068 = vsub.f32 0.0, %v3067
    %v3069 = vmul.f32 %v3068, 1.442695
    %v3070 = vpow.pop %v3069
    %v3071 = vadd.f32 %v3070, 1.0
    %v3072 = vrcp.pop %v3071
    %v3073 = vtanh.pop %v3066
    %v3075 = vrot.slane %v3004, 6
    %v3077 = vmul.f32 %v3072, %v3075
    %3079 = vrot.lane.b32.xlu0 %v3073, 64
    %v3080 = vpop.permute.xlu0 %3079
    %v3082 = vmul.f32 %v3072, %v3080
    %3084 = vrot.lane.b32.xlu0 %v3082, 32
    %v3085 = vpop.permute.xlu0 %3084
    %v3087 = vadd.f32 %v3077, %v3085
    %v3088 = vtanh.pop %v3087
    %3090 = vrot.lane.b32.xlu0 %v3088, 64
    %v3091 = vpop.permute.xlu0 %3090
    %v3093 = vmul.f32 %v3072, %v3091
    %3095 = vrot.lane.b32.xlu0 %v3093, 32
    %v3096 = vpop.permute.xlu0 %3095
    %3098 = vst.msk [vmem:[#allocation6 + $0x8] sm:$0xc] %vm407, %v3096
    %v3099 = vpack.c.bf16 %v3093, %v3093
    %v3101 = vrot.slane %v3099, 1
    %3102 = vrot.lane.b32.xlu0 %v3101, 32
    %v3103 = vpop.permute.xlu0 %3102
    %v3105 = vsel %vm246, %v3103, 0
    %3107 = vmatprep.subr.bf16.mxu0 0
    %3108 = vmatpush1.bf16.msra.mxu0 %v2603
    %3109 = vmatprep.subr.bf16.mxu0 0
    %3110 = vmatpush1.bf16.msra.mxu0 %v2604
    %3111 = vmatprep.subr.bf16.mxu0 0
    %3112 = vmatpush1.bf16.msra.mxu0 0
    %3113 = vmatprep.subr.bf16.mxu0 0
    %3114 = vmatpush1.bf16.msra.mxu0 0
    %3115 = vmatprep.subr.bf16.mxu0 0
    %3116 = vmatpush1.bf16.msra.mxu0 0
    %3117 = vmatprep.subr.bf16.mxu0 0
    %3118 = vmatpush1.bf16.msra.mxu0 0
    %3119 = vmatprep.subr.bf16.mxu0 0
    %3120 = vmatpush1.bf16.msra.mxu0 0
    %3121 = vmatprep.subr.bf16.mxu0 0
    %3122 = vmatpush1.bf16.msra.mxu0 0
    %3123 = vmatprep.subr.bf16.mxu0 0
    %3124 = vmatpush1.bf16.msra.mxu0 0
    %3125 = vmatprep.subr.bf16.mxu0 0
    %3126 = vmatpush1.bf16.msra.mxu0 0
    %3127 = vmatprep.subr.bf16.mxu0 0
    %3128 = vmatpush1.bf16.msra.mxu0 0
    %3129 = vmatprep.subr.bf16.mxu0 0
    %3130 = vmatpush1.bf16.msra.mxu0 0
    %3131 = vmatprep.subr.bf16.mxu0 0
    %3132 = vmatpush1.bf16.msra.mxu0 0
    %3133 = vmatprep.subr.bf16.mxu0 0
    %3134 = vmatpush1.bf16.msra.mxu0 0
    %3135 = vmatprep.subr.bf16.mxu0 0
    %3136 = vmatpush1.bf16.msra.mxu0 0
    %3137 = vmatprep.subr.bf16.mxu0 0
    %3138 = vmatpush1.bf16.msra.mxu0 0
    %3139 = vmatprep.mubr.bf16.mxu0 0
    %3140 = vmatmul.mubr.bf16.gmra.mrb[0].mxu0 %v3105
    %v3141 = vpop.f32.mrb[0].mxu0
    %v3142 = vadd.f32 0.0, %v3141
    %v3143 = vpop.f32.mrb[0].mxu0
    %v3144 = vpop.f32.mrb[0].mxu0
    %v3145 = vpop.f32.mrb[0].mxu0
    %3146 = vdwg.mxu0
    %v3148 = vrot.slane %v3142, 4
    %v3150 = vadd.f32 %v2587, %v3148
    %v3151 = vmax.f32 %v3150, -30.0
    %v3152 = vsub.f32 0.0, %v3151
    %v3153 = vmul.f32 %v3152, 1.442695
    %v3154 = vpow.pop %v3153
    %v3155 = vadd.f32 %v3154, 1.0
    %v3156 = vrcp.pop %v3155
    %v3157 = vtanh.pop %v3150
    %v3159 = vrot.slane %v3087, 6
    %v3161 = vmul.f32 %v3156, %v3159
    %3163 = vrot.lane.b32.xlu0 %v3157, 64
    %v3164 = vpop.permute.xlu0 %3163
    %v3166 = vmul.f32 %v3156, %v3164
    %3168 = vrot.lane.b32.xlu0 %v3166, 32
    %v3169 = vpop.permute.xlu0 %3168
    %v3171 = vadd.f32 %v3161, %v3169
    %v3172 = vtanh.pop %v3171
    %3174 = vrot.lane.b32.xlu0 %v3172, 64
    %v3175 = vpop.permute.xlu0 %3174
    %v3177 = vmul.f32 %v3156, %v3175
    %3179 = vrot.lane.b32.xlu0 %v3177, 32
    %v3180 = vpop.permute.xlu0 %3179
    %3182 = vst.msk [vmem:[#allocation6 + $0x8] sm:$0x30] %vm492, %v3180
    %v3183 = vpack.c.bf16 %v3177, %v3177
    %v3185 = vrot.slane %v3183, 2
    %3186 = vrot.lane.b32.xlu0 %v3185, 32
    %v3187 = vpop.permute.xlu0 %3186
    %v3189 = vsel %vm246, %v3187, 0
    %3191 = vmatprep.subr.bf16.mxu0 0
    %3192 = vmatpush1.bf16.msra.mxu0 %v2603
    %3193 = vmatprep.subr.bf16.mxu0 0
    %3194 = vmatpush1.bf16.msra.mxu0 %v2604
    %3195 = vmatprep.subr.bf16.mxu0 0
    %3196 = vmatpush1.bf16.msra.mxu0 0
    %3197 = vmatprep.subr.bf16.mxu0 0
    %3198 = vmatpush1.bf16.msra.mxu0 0
    %3199 = vmatprep.subr.bf16.mxu0 0
    %3200 = vmatpush1.bf16.msra.mxu0 0
    %3201 = vmatprep.subr.bf16.mxu0 0
    %3202 = vmatpush1.bf16.msra.mxu0 0
    %3203 = vmatprep.subr.bf16.mxu0 0
    %3204 = vmatpush1.bf16.msra.mxu0 0
    %3205 = vmatprep.subr.bf16.mxu0 0
    %3206 = vmatpush1.bf16.msra.mxu0 0
    %3207 = vmatprep.subr.bf16.mxu0 0
    %3208 = vmatpush1.bf16.msra.mxu0 0
    %3209 = vmatprep.subr.bf16.mxu0 0
    %3210 = vmatpush1.bf16.msra.mxu0 0
    %3211 = vmatprep.subr.bf16.mxu0 0
    %3212 = vmatpush1.bf16.msra.mxu0 0
    %3213 = vmatprep.subr.bf16.mxu0 0
    %3214 = vmatpush1.bf16.msra.mxu0 0
    %3215 = vmatprep.subr.bf16.mxu0 0
    %3216 = vmatpush1.bf16.msra.mxu0 0
    %3217 = vmatprep.subr.bf16.mxu0 0
    %3218 = vmatpush1.bf16.msra.mxu0 0
    %3219 = vmatprep.subr.bf16.mxu0 0
    %3220 = vmatpush1.bf16.msra.mxu0 0
    %3221 = vmatprep.subr.bf16.mxu0 0
    %3222 = vmatpush1.bf16.msra.mxu0 0
    %3223 = vmatprep.mubr.bf16.mxu0 0
    %3224 = vmatmul.mubr.bf16.gmra.mrb[0].mxu0 %v3189
    %v3225 = vpop.f32.mrb[0].mxu0
    %v3226 = vadd.f32 0.0, %v3225
    %v3227 = vpop.f32.mrb[0].mxu0
    %v3228 = vpop.f32.mrb[0].mxu0
    %v3229 = vpop.f32.mrb[0].mxu0
    %3230 = vdwg.mxu0
    %v3232 = vrot.slane %v3226, 2
    %v3234 = vadd.f32 %v2587, %v3232
    %v3235 = vmax.f32 %v3234, -30.0
    %v3236 = vsub.f32 0.0, %v3235
    %v3237 = vmul.f32 %v3236, 1.442695
    %v3238 = vpow.pop %v3237
    %v3239 = vadd.f32 %v3238, 1.0
    %v3240 = vrcp.pop %v3239
    %v3241 = vtanh.pop %v3234
    %v3243 = vrot.slane %v3171, 6
    %v3245 = vmul.f32 %v3240, %v3243
    %3247 = vrot.lane.b32.xlu0 %v3241, 64
    %v3248 = vpop.permute.xlu0 %3247
    %v3250 = vmul.f32 %v3240, %v3248
    %3252 = vrot.lane.b32.xlu0 %v3250, 32
    %v3253 = vpop.permute.xlu0 %3252
    %v3255 = vadd.f32 %v3245, %v3253
    %v3256 = vtanh.pop %v3255
    %3258 = vrot.lane.b32.xlu0 %v3256, 64
    %v3259 = vpop.permute.xlu0 %3258
    %v3261 = vmul.f32 %v3240, %v3259
    %3263 = vrot.lane.b32.xlu0 %v3261, 32
    %v3264 = vpop.permute.xlu0 %3263
    %3266 = vst.msk [vmem:[#allocation6 + $0x8] sm:$0xc0] %vm577, %v3264
    %3267 = vst.msk [vmem:[%s2590 - $0x6] sm:$0xc0] %vm577, %v3264
    %3269 = vrot.lane.b32.xlu0 %v3255, 96
    %v3270 = vpop.permute.xlu0 %3269
    %3272 = vst.msk [vmem:[%s2592 - $0x6] sm:$0xc0] %vm577, %v3270
    %v3273 = vld [vmem:[#allocation6] sm:$0xff]
    %v3274 = vld [vmem:[#allocation6 + $0x8] sm:$0xff]
    %v3275 = vpack.c.bf16 %v3274, %v3273
    %v3276 = vld [vmem:[%s16] sm:$0xf]
    %v3277 = vld [vmem:[%s16 + $0x4] sm:$0xf]
    %v3278 = vld [vmem:[%s16 + $0x8] sm:$0xf]
    %v3279 = vld [vmem:[%s16 + $0xc] sm:$0xf]
    %v3280 = vld [vmem:[%s17] sm:$0x1]
    %v3282 = vlaneseq
    %v3283 = vshrl.u32 %v3282, 7
    %v3284 = vsub.s32 0, %v3283
    %v3285 = vrot.slane %v3280, %v3284
    %v3291 = vunpack.c.l.b16 %v3276
    %v3292 = vunpack.c.l.b16 %v3277
    %v3293 = vunpack.c.l.b16 %v3278
    %v3294 = vunpack.c.l.b16 %v3279
    %v3295 = vpack.c.b16 %v3292, %v3291
    %v3296 = vpack.c.b16 %v3294, %v3293
    %v3300 = vsel %vm246, %v3275, 0
    %3302 = vmatprep.subr.bf16.mxu0 0
    %3303 = vmatpush1.bf16.msra.mxu0 %v3295
    %3304 = vmatprep.subr.bf16.mxu0 0
    %3305 = vmatpush1.bf16.msra.mxu0 %v3296
    %3306 = vmatprep.subr.bf16.mxu0 0
    %3307 = vmatpush1.bf16.msra.mxu0 0
    %3308 = vmatprep.subr.bf16.mxu0 0
    %3309 = vmatpush1.bf16.msra.mxu0 0
    %3310 = vmatprep.subr.bf16.mxu0 0
    %3311 = vmatpush1.bf16.msra.mxu0 0
    %3312 = vmatprep.subr.bf16.mxu0 0
    %3313 = vmatpush1.bf16.msra.mxu0 0
    %3314 = vmatprep.subr.bf16.mxu0 0
    %3315 = vmatpush1.bf16.msra.mxu0 0
    %3316 = vmatprep.subr.bf16.mxu0 0
    %3317 = vmatpush1.bf16.msra.mxu0 0
    %3318 = vmatprep.subr.bf16.mxu0 0
    %3319 = vmatpush1.bf16.msra.mxu0 0
    %3320 = vmatprep.subr.bf16.mxu0 0
    %3321 = vmatpush1.bf16.msra.mxu0 0
    %3322 = vmatprep.subr.bf16.mxu0 0
    %3323 = vmatpush1.bf16.msra.mxu0 0
    %3324 = vmatprep.subr.bf16.mxu0 0
    %3325 = vmatpush1.bf16.msra.mxu0 0
    %3326 = vmatprep.subr.bf16.mxu0 0
    %3327 = vmatpush1.bf16.msra.mxu0 0
    %3328 = vmatprep.subr.bf16.mxu0 0
    %3329 = vmatpush1.bf16.msra.mxu0 0
    %3330 = vmatprep.subr.bf16.mxu0 0
    %3331 = vmatpush1.bf16.msra.mxu0 0
    %3332 = vmatprep.subr.bf16.mxu0 0
    %3333 = vmatpush1.bf16.msra.mxu0 0
    %3334 = vmatprep.mubr.bf16.mxu0 0
    %3335 = vmatmul.mubr.bf16.gmra.mrb[0].mxu0 %v3300
    %v3336 = vpop.f32.mrb[0].mxu0
    %v3337 = vadd.f32 %v3285, %v3336
    %v3338 = vpop.f32.mrb[0].mxu0
    %v3339 = vpop.f32.mrb[0].mxu0
    %v3340 = vadd.f32 %v3285, %v3339
    %v3341 = vpop.f32.mrb[0].mxu0
    %3342 = vdwg.mxu0
    %3343 = vst.msk [vmem:[%s21] sm:$0xff] %vm182, %v3337
    %3344 = vst.msk [vmem:[%s21 + $0x8] sm:$0xff] %vm182, %v3340
    %v3345 = vmax.f32 %v3337, 0.0
    %v3346 = vmax.f32 %v3340, 0.0
    %v3347 = vand.u32 2147483647, %v3337
    %v3348 = vand.u32 2147483647, %v3340
    %v3349 = vsub.f32 0.0, %v3347
    %v3350 = vsub.f32 0.0, %v3348
    %v3351 = vmul.f32 %v3349, 1.442695
    %v3352 = vpow.pop %v3351
    %v3353 = vmul.f32 %v3350, 1.442695
    %v3354 = vpow.pop %v3353
    %v3355 = vadd.f32 %v3352, 1.0
    %v3356 = vadd.f32 %v3354, 1.0
    %v3357 = vlog2.pop %v3355
    %v3358 = vmul.f32 %v3357, 0.6931472
    %v3359 = vlog2.pop %v3356
    %v3360 = vmul.f32 %v3359, 0.6931472
    %v3361 = vadd.f32 %v3345, %v3358
    %v3362 = vadd.f32 %v3346, %v3360
    %3365 = vrot.lane.b32.xlu0 %v3361, 124
    %v3366 = vpop.permute.xlu0 %3365
    %3367 = vrot.lane.b32.xlu0 %v3362, 124
    %v3368 = vpop.permute.xlu0 %3367
    %3371 = vst.msk [vmem:[%s22] sm:$0xff] %vm182, %v3366
    %3372 = vst.msk [vmem:[%s22 + $0x8] sm:$0xff] %vm182, %v3368
    // Predicated region
    $region106: #{lstmvae_forward.1} parent=1 // pred_check
      _
    $region107: #{lstmvae_forward.1} parent=1 // pred_check_branch
      %3374 = sbr.rel (0) target = $region109
    $region108: #{lstmvae_forward.1} parent=1 // pred_region
      %s3376 = ssub.s32 256, 256
      %3377 = vsyncadd [#allocation9], %s3376
      %s3378 = sshll.u32 [#allocation19], 4
      %s3379 = int_to_ptr.vmem [resolvable:$true] %s3378
      %3384 = dma.vmem_to_hbm [thread:$0]  %s3379, 256, %s18, [#allocation9], 128, 128, 8
    $region109: #{lstmvae_forward.1} parent=1 // pred_fallthru
      _
    // Predicated region
    $region110: #{lstmvae_forward.1} parent=1 // pred_check
      _
    $region111: #{lstmvae_forward.1} parent=1 // pred_check_branch
      %3386 = sbr.rel (0) target = $region113
    $region112: #{lstmvae_forward.1} parent=1 // pred_region
      %s3388 = ssub.s32 256, 256
      %3389 = vsyncadd [#allocation21], %s3388
      %s3390 = sshll.u32 [#allocation20], 4
      %s3391 = int_to_ptr.vmem [resolvable:$true] %s3390
      %3396 = dma.vmem_to_hbm [thread:$0]  %s3391, 256, %s19, [#allocation21], 128, 128, 8
    $region113: #{lstmvae_forward.1} parent=1 // pred_fallthru
      _
    // Predicated region
    $region114: #{lstmvae_forward.1} parent=1 // pred_check
      _
    $region115: #{lstmvae_forward.1} parent=1 // pred_check_branch
      %3398 = sbr.rel (0) target = $region117
    $region116: #{lstmvae_forward.1} parent=1 // pred_region
      %s3400 = ssub.s32 256, 256
      %3401 = vsyncadd [#allocation21], %s3400
      %s3402 = sshll.u32 [#allocation22], 4
      %s3403 = int_to_ptr.vmem [resolvable:$true] %s3402
      %3408 = dma.vmem_to_hbm [thread:$0]  %s3403, 256, %s20, [#allocation21], 128, 128, 8
    $region117: #{lstmvae_forward.1} parent=1 // pred_fallthru
      _
    // Predicated region
    $region118: #{lstmvae_forward.1} parent=1 // pred_check
      _
    $region119: #{lstmvae_forward.1} parent=1 // pred_check_branch
      %3410 = sbr.rel (0) target = $region121
    $region120: #{lstmvae_forward.1} parent=1 // pred_region
      _
    $region121: #{lstmvae_forward.1} parent=1 // pred_fallthru
      _
    // Predicated region
    $region122: #{lstmvae_forward.1} parent=1 // pred_check
      _
    $region123: #{lstmvae_forward.1} parent=1 // pred_check_branch
      %3412 = sbr.rel (0) target = $region125
    $region124: #{lstmvae_forward.1} parent=1 // pred_region
      _
    $region125: #{lstmvae_forward.1} parent=1 // pred_fallthru
      _
    // Predicated region
    $region126: #{lstmvae_forward.1} parent=1 // pred_check
      _
    $region127: #{lstmvae_forward.1} parent=1 // pred_check_branch
      %3414 = sbr.rel (0) target = $region129
    $region128: #{lstmvae_forward.1} parent=1 // pred_region
      %3415 = dma.done [#allocation9], 256
    $region129: #{lstmvae_forward.1} parent=1 // pred_fallthru
      _
    // Predicated region
    $region130: #{lstmvae_forward.1} parent=1 // pred_check
      _
    $region131: #{lstmvae_forward.1} parent=1 // pred_check_branch
      %3417 = sbr.rel (0) target = $region133
    $region132: #{lstmvae_forward.1} parent=1 // pred_region
      %3418 = dma.done [#allocation21], 256
    $region133: #{lstmvae_forward.1} parent=1 // pred_fallthru
      _
    // Predicated region
    $region134: #{lstmvae_forward.1} parent=1 // pred_check
      _
    $region135: #{lstmvae_forward.1} parent=1 // pred_check_branch
      %3420 = sbr.rel (0) target = $region137
    $region136: #{lstmvae_forward.1} parent=1 // pred_region
      %3421 = dma.done [#allocation21], 256
    $region137: #{lstmvae_forward.1} parent=1 // pred_fallthru
      _
    // Predicated region
    $region138: #{lstmvae_forward.1} parent=1 // pred_check
      _
    $region139: #{lstmvae_forward.1} parent=1 // pred_check_branch
      %3423 = sbr.rel (0) target = $region141
    $region140: #{lstmvae_forward.1} parent=1 // pred_region
      _
    $region141: #{lstmvae_forward.1} parent=1 // pred_fallthru
      _
    // Predicated region
    $region142: #{lstmvae_forward.1} parent=1 // pred_check
      _
    $region143: #{lstmvae_forward.1} parent=1 // pred_check_branch
      %3425 = sbr.rel (0) target = $region145
    $region144: #{lstmvae_forward.1} parent=1 // pred_region
      _
    $region145: #{lstmvae_forward.1} parent=1 // pred_fallthru
      _
    %3426 = vsyncpa [#allocation8], 1
    %3427 = vsyncpa [#allocation11], 1
    %3428 = vsyncpa [#allocation14], 1
    %3429 = vsyncpa [#allocation17], 1
    %3430 = vsyncpa [#allocation9], 1
    %3431 = vsyncpa [#allocation21], 1

</llo_original>
